<compile_context>
chip_gen: v6e
topology: v6e:2x2x1
jax: 0.10.0
libtpu: 0.0.40
codegen_flags: <defaults>
</compile_context>

<pallas_src>
import jax
import jax.numpy as jnp
from jax.experimental import pallas as pl
from jax.experimental.pallas import tpu as pltpu

EPS = 1e-5
_VMEM = pl.BlockSpec(memory_space=pltpu.MemorySpace.VMEM)


def _softplus(x):
    # torch.nn.Softplus(beta=1, threshold=20)
    return jnp.where(x > 20.0, x, jnp.log1p(jnp.exp(jnp.minimum(x, 20.0))))


# ---------------------------------------------------------------------------
# fused ConvLayer kernel (everything lives in VMEM for the whole forward)
# ---------------------------------------------------------------------------
def convlayer_kernel(i0_ref, i1_ref, i0r_ref, atom_ref, edge_ref,
                     vec_ref, wts_ref, out_ref):
    N = atom_ref.shape[0]
    E = edge_ref.shape[0]

    atom = atom_ref[...].astype(jnp.float32)
    edge = edge_ref[...].astype(jnp.float32)

    # --- index-structure matrices: built once, reused by all three blocks ----
    ioE = jax.lax.broadcasted_iota(jnp.int32, (E, N), 1)
    oh0 = (ioE == i0_ref[...]).astype(jnp.float32)            # (E, N) gather idx col 0
    oh1 = (ioE == i1_ref[...]).astype(jnp.float32)            # (E, N) gather idx col 1
    ioN = jax.lax.broadcasted_iota(jnp.int32, (N, E), 0)
    sc = (ioN == i0r_ref[...]).astype(jnp.float32)            # (N, E) scatter structure
    counts = jnp.dot(sc, jnp.ones((E, 1), jnp.float32),       # counts via MXU (no XLU reduce)
                     preferred_element_type=jnp.float32)
    # exact reciprocal; pl.reciprocal(..., approx=True) is the faster EUP estimate
    sc_mean = sc * pl.reciprocal(jnp.maximum(counts, 1.0))    # row-normalized scatter-mean

    # --- parameter streams (trace-time counters; order matches _pack_params) --
    vk = [0]
    wk = [0]

    def vec():
        v = vec_ref[vk[0]]                                    # (1, F)
        vk[0] += 1
        return v

    def wmat():
        w = wts_ref[wk[0]]                                    # (F, F)
        wk[0] += 1
        return w

    def bn(x):
        # training-mode BatchNorm1d: batch statistics, biased variance, one pass
        g = vec()
        b = vec()
        n = x.shape[0]
        mean = jnp.sum(x, axis=0, keepdims=True) * (1.0 / n)
        ex2 = jnp.sum(x * x, axis=0, keepdims=True) * (1.0 / n)
        var = jnp.maximum(ex2 - mean * mean, 0.0)
        return (x - mean) * jax.lax.rsqrt(var + EPS) * g + b

    def dense(parts):
        # DenseLayer: Linear (distributed over the concat chunks) -> BN -> Softplus
        h = None
        for x in parts:
            d = jnp.dot(x, wmat(), preferred_element_type=jnp.float32)
            h = d if h is None else h + d
        h = h + vec()                                         # bias
        return _softplus(bn(h))

    def edge_block(atom, edge):
        ae0 = jnp.dot(oh0, atom, preferred_element_type=jnp.float32)
        ae1 = jnp.dot(oh1, atom, preferred_element_type=jnp.float32)
        ae0, ae1 = bn(ae0), bn(ae1)                 # edge_bn*_1 over cat([ae0, ae1])
        ae0, ae1, ec = bn(ae0), bn(ae1), bn(edge)   # edge_bn*_2 over cat([.., edge])
        h = dense([ae0, ae1, ec])                   # edge_conv*
        return bn(edge + h)                         # residual + edge_bn*_3

    def atom_block(atom, edge):
        pooled = jnp.dot(sc_mean, edge, preferred_element_type=jnp.float32)
        pooled = bn(pooled)                         # atom_bn*_1
        ac, pc = bn(atom), bn(pooled)               # atom_bn*_2 over cat([atom, pooled])
        h = dense([ac, pc])                         # atom_conv*
        return bn(atom + h)                         # residual + atom_bn*_3

    edge = edge_block(atom, edge)                   # block 1
    atom = atom_block(atom, edge)
    edge = edge_block(atom, edge)                   # block 2
    atom = atom_block(atom, edge)
    edge = edge_block(atom, edge)                   # block 3 (edge path only, as in torch src)

    # trace-time sanity: every packed parameter was consumed exactly once, in order
    assert vk[0] == vec_ref.shape[0], (vk[0], vec_ref.shape)
    assert wk[0] == wts_ref.shape[0], (wk[0], wts_ref.shape)

    out_ref[...] = edge.astype(out_ref.dtype)


# ---------------------------------------------------------------------------
# parameter packing: split every BN / Linear over its concat chunks and stack
# everything into two tensors (one DMA each).  All chunk widths equal fea_len
# because the residual adds in the torch forward require in_atom == in_edge == F.
# ---------------------------------------------------------------------------
def _pack_params(params, F):
    vecs = []      # each (F,)   -> stacked to (P, 1, F)
    wchunks = []   # each (F, F) -> stacked to (Q, F, F)

    def add_bn(g, b, nchunks):
        for i in range(nchunks):
            vecs.append(g[i * F:(i + 1) * F])
            vecs.append(b[i * F:(i + 1) * F])

    def add_dense(p, nchunks):
        w, b, g, be = p                     # w stored as [in, out]
        for i in range(nchunks):
            wchunks.append(w[i * F:(i + 1) * F, :])
        vecs.append(b)
        vecs.append(g)
        vecs.append(be)

    for blk in ("1", "2"):
        add_bn(*params[f"edge_bn{blk}_1"], 2)
        add_bn(*params[f"edge_bn{blk}_2"], 3)
        add_dense(params[f"edge_conv{blk}"], 3)
        add_bn(*params[f"edge_bn{blk}_3"], 1)
        add_bn(*params[f"atom_bn{blk}_1"], 1)
        add_bn(*params[f"atom_bn{blk}_2"], 2)
        add_dense(params[f"atom_conv{blk}"], 2)
        add_bn(*params[f"atom_bn{blk}_3"], 1)
    add_bn(*params["edge_bn3_1"], 2)
    add_bn(*params["edge_bn3_2"], 3)
    add_dense(params["edge_conv3"], 3)
    add_bn(*params["edge_bn3_3"], 1)

    vec_stack = jnp.stack(vecs).reshape(len(vecs), 1, F)
    wts_stack = jnp.stack(wchunks)
    return vec_stack, wts_stack


def conv_layer_pallas(params, atom_fea, edge_fea, edge_idx):
    N, A = atom_fea.shape
    E, Ein = edge_fea.shape
    F = params["edge_conv1"][0].shape[1]
    assert A == Ein == F, "residual adds in the torch forward require equal widths"

    i0 = edge_idx[:, 0:1].astype(jnp.int32)                  # (E, 1)
    i1 = edge_idx[:, 1:2].astype(jnp.int32)                  # (E, 1)
    i0r = edge_idx[:, 0].reshape(1, E).astype(jnp.int32)     # (1, E)
    vecs, wts = _pack_params(params, F)

    return pl.pallas_call(
        convlayer_kernel,
        out_shape=jax.ShapeDtypeStruct((E, F), edge_fea.dtype),
        in_specs=[_VMEM] * 7,
        out_specs=_VMEM,
    )(i0, i1, i0r, atom_fea, edge_fea, vecs, wts)


# ---------------------------------------------------------------------------
# pure-JAX reference (torch semantics: training-mode BN, exact gather/segment mean)
# ---------------------------------------------------------------------------
def ref_forward(params, atom_fea, edge_fea, edge_idx):
    def bn(x, g, b):
        mean = jnp.mean(x, axis=0, keepdims=True)
        var = jnp.mean((x - mean) ** 2, axis=0, keepdims=True)   # biased, like torch
        return (x - mean) * jax.lax.rsqrt(var + EPS) * g.reshape(1, -1) + b.reshape(1, -1)

    def dense(x, p):
        w, b, g, be = p
        return _softplus(bn(x @ w + b.reshape(1, -1), g, be))

    def gather(a):
        return a[edge_idx].reshape(edge_idx.shape[0], -1)

    def scatter_mean(e):
        idx = edge_idx[:, 0]
        n = atom_fea.shape[0]
        sums = jax.ops.segment_sum(e, idx, num_segments=n)
        cnt = jax.ops.segment_sum(jnp.ones((e.shape[0],), e.dtype), idx, num_segments=n)
        return sums / jnp.maximum(cnt, 1.0)[:, None]

    def edge_blk(a, e, b1, b2, conv, b3):
        ae = bn(gather(a), *b1)
        cat = bn(jnp.concatenate([ae, e], axis=1), *b2)
        return bn(e + dense(cat, conv), *b3)

    def atom_blk(a, e, b1, b2, conv, b3):
        p = bn(scatter_mean(e), *b1)
        cat = bn(jnp.concatenate([a, p], axis=1), *b2)
        return bn(a + dense(cat, conv), *b3)

    P = params
    a, e = atom_fea, edge_fea
    e = edge_blk(a, e, P["edge_bn1_1"], P["edge_bn1_2"], P["edge_conv1"], P["edge_bn1_3"])
    a = atom_blk(a, e, P["atom_bn1_1"], P["atom_bn1_2"], P["atom_conv1"], P["atom_bn1_3"])
    e = edge_blk(a, e, P["edge_bn2_1"], P["edge_bn2_2"], P["edge_conv2"], P["edge_bn2_3"])
    a = atom_blk(a, e, P["atom_bn2_1"], P["atom_bn2_2"], P["atom_conv2"], P["atom_bn2_3"])
    e = edge_blk(a, e, P["edge_bn3_1"], P["edge_bn3_2"], P["edge_conv3"], P["edge_bn3_3"])
    return e


# ---------------------------------------------------------------------------
# deterministic parameter construction (shapes from ConvLayer.__init__).
# WA1/WA2/bnA1/bnA2, every DenseLayer.bn2, atom_conv3/atom_bn3_* exist in
# __init__ but are never used in forward, so they are omitted.
# ---------------------------------------------------------------------------
def init_params(key, in_atom, in_edge, fea_len):
    keys = iter(jax.random.split(key, 64))

    def bn(c):
        g = 1.0 + 0.1 * jax.random.normal(next(keys), (c,), jnp.float32)
        b = 0.1 * jax.random.normal(next(keys), (c,), jnp.float32)
        return (g, b)

    def dense(cin, cout):
        w = jax.random.normal(next(keys), (cin, cout), jnp.float32) / jnp.sqrt(cin)
        b = 0.1 * jax.random.normal(next(keys), (cout,), jnp.float32)
        g, be = bn(cout)
        return (w, b, g, be)

    A, Ein, F = in_atom, in_edge, fea_len
    p = {}
    p["edge_bn1_1"] = bn(2 * A)
    p["edge_bn1_2"] = bn(2 * A + Ein)
    p["edge_conv1"] = dense(2 * A + Ein, F)
    p["edge_bn1_3"] = bn(F)
    p["atom_bn1_1"] = bn(F)
    p["atom_bn1_2"] = bn(A + F)
    p["atom_conv1"] = dense(A + F, F)
    p["atom_bn1_3"] = bn(F)
    p["edge_bn2_1"] = bn(2 * F)
    p["edge_bn2_2"] = bn(3 * F)
    p["edge_conv2"] = dense(3 * F, F)
    p["edge_bn2_3"] = bn(F)
    p["atom_bn2_1"] = bn(F)
    p["atom_bn2_2"] = bn(2 * F)
    p["atom_conv2"] = dense(2 * F, F)
    p["atom_bn2_3"] = bn(F)
    p["edge_bn3_1"] = bn(2 * F)
    p["edge_bn3_2"] = bn(3 * F)
    p["edge_conv3"] = dense(3 * F, F)
    p["edge_bn3_3"] = bn(F)
    return p


if __name__ == "__main__":
    # residual adds in the torch forward require in_atom == in_edge == fea_len
    IN_ATOM = IN_EDGE = FEA_LEN = 8
    N_ATOMS, N_EDGES = 16, 32

    key = jax.random.PRNGKey(0)
    k_atom, k_edge, k_idx, k_par = jax.random.split(key, 4)
    atom_fea = jax.random.normal(k_atom, (N_ATOMS, IN_ATOM), jnp.float32)
    edge_fea = jax.random.normal(k_edge, (N_EDGES, IN_EDGE), jnp.float32)
    edge_idx = jax.random.randint(k_idx, (N_EDGES, 2), 0, N_ATOMS, jnp.int32)
    params = init_params(k_par, IN_ATOM, IN_EDGE, FEA_LEN)

    out = jax.block_until_ready(
        jax.jit(conv_layer_pallas)(params, atom_fea, edge_fea, edge_idx))
    ref = ref_forward(params, atom_fea, edge_fea, edge_idx)

    assert out.shape == (N_EDGES, FEA_LEN), out.shape
    assert bool(jnp.all(jnp.isfinite(out)))
    max_err = float(jnp.max(jnp.abs(out - ref)))
    assert bool(jnp.allclose(out, ref, rtol=2e-3, atol=2e-3)), max_err
    print("KERNEL_OK")
</pallas_src>

<mosaic_0001>
module attributes {stable_mosaic.version = 11 : i64} {
  func.func @convlayer_kernel(%arg0: memref<32x1xi32, #tpu.memory_space<vmem>>, %arg1: memref<32x1xi32, #tpu.memory_space<vmem>>, %arg2: memref<1x32xi32, #tpu.memory_space<vmem>>, %arg3: memref<16x8xf32, #tpu.memory_space<vmem>>, %arg4: memref<32x8xf32, #tpu.memory_space<vmem>>, %arg5: memref<67x1x8xf32, #tpu.memory_space<vmem>>, %arg6: memref<13x8x8xf32, #tpu.memory_space<vmem>>, %arg7: memref<32x8xf32, #tpu.memory_space<vmem>>) attributes {dimension_semantics = [], scalar_prefetch = 0 : i64, scratch_operands = 0 : i64, tpu.core_type = #tpu.core_type<tc>} {
    %c0 = arith.constant 0 : index
    %c0_0 = arith.constant 0 : index
    %0 = vector.load %arg3[%c0, %c0_0] : memref<16x8xf32, #tpu.memory_space<vmem>>, vector<16x8xf32>
    %c0_1 = arith.constant 0 : index
    %c0_2 = arith.constant 0 : index
    %1 = vector.load %arg4[%c0_1, %c0_2] : memref<32x8xf32, #tpu.memory_space<vmem>>, vector<32x8xf32>
    %2 = tpu.iota {dimensions = array<i32: 1>} : vector<32x16xi32>
    %c0_3 = arith.constant 0 : index
    %c0_4 = arith.constant 0 : index
    %3 = vector.load %arg0[%c0_3, %c0_4] : memref<32x1xi32, #tpu.memory_space<vmem>>, vector<32x1xi32>
    %4 = vector.broadcast %3 : vector<32x1xi32> to vector<32x16xi32>
    %5 = arith.cmpi eq, %2, %4 : vector<32x16xi32>
    %6 = arith.extui %5 : vector<32x16xi1> to vector<32x16xi32>
    %7 = arith.sitofp %6 : vector<32x16xi32> to vector<32x16xf32>
    %c0_5 = arith.constant 0 : index
    %c0_6 = arith.constant 0 : index
    %8 = vector.load %arg1[%c0_5, %c0_6] : memref<32x1xi32, #tpu.memory_space<vmem>>, vector<32x1xi32>
    %9 = vector.broadcast %8 : vector<32x1xi32> to vector<32x16xi32>
    %10 = arith.cmpi eq, %2, %9 : vector<32x16xi32>
    %11 = arith.extui %10 : vector<32x16xi1> to vector<32x16xi32>
    %12 = arith.sitofp %11 : vector<32x16xi32> to vector<32x16xf32>
    %13 = tpu.iota {dimensions = array<i32: 0>} : vector<16x32xi32>
    %c0_7 = arith.constant 0 : index
    %c0_8 = arith.constant 0 : index
    %14 = vector.load %arg2[%c0_7, %c0_8] : memref<1x32xi32, #tpu.memory_space<vmem>>, vector<1x32xi32>
    %15 = vector.broadcast %14 : vector<1x32xi32> to vector<16x32xi32>
    %16 = arith.cmpi eq, %13, %15 : vector<16x32xi32>
    %17 = arith.extui %16 : vector<16x32xi1> to vector<16x32xi32>
    %18 = arith.sitofp %17 : vector<16x32xi32> to vector<16x32xf32>
    %cst = arith.constant 1.000000e+00 : f32
    %19 = vector.broadcast %cst : f32 to vector<32x1xf32>
    %cst_9 = arith.constant dense<0.000000e+00> : vector<16x1xf32>
    %20 = tpu.matmul %18, %19, %cst_9 {dimension_numbers = #tpu.dot_dimension_numbers<[1], [0], [0], [1], [0, 0, 1, 1], [], []>} : vector<16x32xf32>, vector<32x1xf32>, vector<16x1xf32> -> vector<16x1xf32>
    %cst_10 = arith.constant 1.000000e+00 : f32
    %21 = vector.broadcast %cst_10 : f32 to vector<16x1xf32>
    %22 = arith.maximumf %20, %21 : vector<16x1xf32>
    %23 = tpu.reciprocal %22 : vector<16x1xf32> -> vector<16x1xf32>
    %24 = vector.broadcast %23 : vector<16x1xf32> to vector<16x32xf32>
    %25 = arith.mulf %18, %24 : vector<16x32xf32>
    %cst_11 = arith.constant dense<0.000000e+00> : vector<32x8xf32>
    %26 = tpu.matmul %7, %0, %cst_11 {dimension_numbers = #tpu.dot_dimension_numbers<[1], [0], [0], [1], [0, 0, 1, 1], [], []>} : vector<32x16xf32>, vector<16x8xf32>, vector<32x8xf32> -> vector<32x8xf32>
    %cst_12 = arith.constant dense<0.000000e+00> : vector<32x8xf32>
    %27 = tpu.matmul %12, %0, %cst_12 {dimension_numbers = #tpu.dot_dimension_numbers<[1], [0], [0], [1], [0, 0, 1, 1], [], []>} : vector<32x16xf32>, vector<16x8xf32>, vector<32x8xf32> -> vector<32x8xf32>
    %c0_13 = arith.constant 0 : index
    %c0_14 = arith.constant 0 : index
    %c0_15 = arith.constant 0 : index
    %28 = vector.load %arg5[%c0_13, %c0_14, %c0_15] : memref<67x1x8xf32, #tpu.memory_space<vmem>>, vector<1x1x8xf32>
    %29 = vector.shape_cast %28 : vector<1x1x8xf32> to vector<1x8xf32>
    %c1 = arith.constant 1 : index
    %c0_16 = arith.constant 0 : index
    %c0_17 = arith.constant 0 : index
    %30 = vector.load %arg5[%c1, %c0_16, %c0_17] : memref<67x1x8xf32, #tpu.memory_space<vmem>>, vector<1x1x8xf32>
    %31 = vector.shape_cast %30 : vector<1x1x8xf32> to vector<1x8xf32>
    %cst_18 = arith.constant dense<0.000000e+00> : vector<8xf32>
    %32 = vector.multi_reduction <add>, %26, %cst_18 [0] : vector<32x8xf32> to vector<8xf32>
    %33 = vector.shape_cast %32 : vector<8xf32> to vector<1x8xf32>
    %cst_19 = arith.constant 3.125000e-02 : f32
    %34 = vector.broadcast %cst_19 : f32 to vector<1x8xf32>
    %35 = arith.mulf %33, %34 : vector<1x8xf32>
    %36 = arith.mulf %26, %26 : vector<32x8xf32>
    %cst_20 = arith.constant dense<0.000000e+00> : vector<8xf32>
    %37 = vector.multi_reduction <add>, %36, %cst_20 [0] : vector<32x8xf32> to vector<8xf32>
    %38 = vector.shape_cast %37 : vector<8xf32> to vector<1x8xf32>
    %cst_21 = arith.constant 3.125000e-02 : f32
    %39 = vector.broadcast %cst_21 : f32 to vector<1x8xf32>
    %40 = arith.mulf %38, %39 : vector<1x8xf32>
    %41 = arith.mulf %35, %35 : vector<1x8xf32>
    %42 = arith.subf %40, %41 : vector<1x8xf32>
    %cst_22 = arith.constant 0.000000e+00 : f32
    %43 = vector.broadcast %cst_22 : f32 to vector<1x8xf32>
    %44 = arith.maximumf %42, %43 : vector<1x8xf32>
    %45 = vector.broadcast %35 : vector<1x8xf32> to vector<32x8xf32>
    %46 = arith.subf %26, %45 : vector<32x8xf32>
    %cst_23 = arith.constant 9.99999974E-6 : f32
    %47 = vector.broadcast %cst_23 : f32 to vector<1x8xf32>
    %48 = arith.addf %44, %47 : vector<1x8xf32>
    %49 = math.rsqrt %48 : vector<1x8xf32>
    %50 = vector.broadcast %49 : vector<1x8xf32> to vector<32x8xf32>
    %51 = arith.mulf %46, %50 : vector<32x8xf32>
    %52 = vector.broadcast %29 : vector<1x8xf32> to vector<32x8xf32>
    %53 = arith.mulf %51, %52 : vector<32x8xf32>
    %54 = vector.broadcast %31 : vector<1x8xf32> to vector<32x8xf32>
    %55 = arith.addf %53, %54 : vector<32x8xf32>
    %c2 = arith.constant 2 : index
    %c0_24 = arith.constant 0 : index
    %c0_25 = arith.constant 0 : index
    %56 = vector.load %arg5[%c2, %c0_24, %c0_25] : memref<67x1x8xf32, #tpu.memory_space<vmem>>, vector<1x1x8xf32>
    %57 = vector.shape_cast %56 : vector<1x1x8xf32> to vector<1x8xf32>
    %c3 = arith.constant 3 : index
    %c0_26 = arith.constant 0 : index
    %c0_27 = arith.constant 0 : index
    %58 = vector.load %arg5[%c3, %c0_26, %c0_27] : memref<67x1x8xf32, #tpu.memory_space<vmem>>, vector<1x1x8xf32>
    %59 = vector.shape_cast %58 : vector<1x1x8xf32> to vector<1x8xf32>
    %cst_28 = arith.constant dense<0.000000e+00> : vector<8xf32>
    %60 = vector.multi_reduction <add>, %27, %cst_28 [0] : vector<32x8xf32> to vector<8xf32>
    %61 = vector.shape_cast %60 : vector<8xf32> to vector<1x8xf32>
    %cst_29 = arith.constant 3.125000e-02 : f32
    %62 = vector.broadcast %cst_29 : f32 to vector<1x8xf32>
    %63 = arith.mulf %61, %62 : vector<1x8xf32>
    %64 = arith.mulf %27, %27 : vector<32x8xf32>
    %cst_30 = arith.constant dense<0.000000e+00> : vector<8xf32>
    %65 = vector.multi_reduction <add>, %64, %cst_30 [0] : vector<32x8xf32> to vector<8xf32>
    %66 = vector.shape_cast %65 : vector<8xf32> to vector<1x8xf32>
    %cst_31 = arith.constant 3.125000e-02 : f32
    %67 = vector.broadcast %cst_31 : f32 to vector<1x8xf32>
    %68 = arith.mulf %66, %67 : vector<1x8xf32>
    %69 = arith.mulf %63, %63 : vector<1x8xf32>
    %70 = arith.subf %68, %69 : vector<1x8xf32>
    %cst_32 = arith.constant 0.000000e+00 : f32
    %71 = vector.broadcast %cst_32 : f32 to vector<1x8xf32>
    %72 = arith.maximumf %70, %71 : vector<1x8xf32>
    %73 = vector.broadcast %63 : vector<1x8xf32> to vector<32x8xf32>
    %74 = arith.subf %27, %73 : vector<32x8xf32>
    %cst_33 = arith.constant 9.99999974E-6 : f32
    %75 = vector.broadcast %cst_33 : f32 to vector<1x8xf32>
    %76 = arith.addf %72, %75 : vector<1x8xf32>
    %77 = math.rsqrt %76 : vector<1x8xf32>
    %78 = vector.broadcast %77 : vector<1x8xf32> to vector<32x8xf32>
    %79 = arith.mulf %74, %78 : vector<32x8xf32>
    %80 = vector.broadcast %57 : vector<1x8xf32> to vector<32x8xf32>
    %81 = arith.mulf %79, %80 : vector<32x8xf32>
    %82 = vector.broadcast %59 : vector<1x8xf32> to vector<32x8xf32>
    %83 = arith.addf %81, %82 : vector<32x8xf32>
    %c4 = arith.constant 4 : index
    %c0_34 = arith.constant 0 : index
    %c0_35 = arith.constant 0 : index
    %84 = vector.load %arg5[%c4, %c0_34, %c0_35] : memref<67x1x8xf32, #tpu.memory_space<vmem>>, vector<1x1x8xf32>
    %85 = vector.shape_cast %84 : vector<1x1x8xf32> to vector<1x8xf32>
    %c5 = arith.constant 5 : index
    %c0_36 = arith.constant 0 : index
    %c0_37 = arith.constant 0 : index
    %86 = vector.load %arg5[%c5, %c0_36, %c0_37] : memref<67x1x8xf32, #tpu.memory_space<vmem>>, vector<1x1x8xf32>
    %87 = vector.shape_cast %86 : vector<1x1x8xf32> to vector<1x8xf32>
    %cst_38 = arith.constant dense<0.000000e+00> : vector<8xf32>
    %88 = vector.multi_reduction <add>, %55, %cst_38 [0] : vector<32x8xf32> to vector<8xf32>
    %89 = vector.shape_cast %88 : vector<8xf32> to vector<1x8xf32>
    %cst_39 = arith.constant 3.125000e-02 : f32
    %90 = vector.broadcast %cst_39 : f32 to vector<1x8xf32>
    %91 = arith.mulf %89, %90 : vector<1x8xf32>
    %92 = arith.mulf %55, %55 : vector<32x8xf32>
    %cst_40 = arith.constant dense<0.000000e+00> : vector<8xf32>
    %93 = vector.multi_reduction <add>, %92, %cst_40 [0] : vector<32x8xf32> to vector<8xf32>
    %94 = vector.shape_cast %93 : vector<8xf32> to vector<1x8xf32>
    %cst_41 = arith.constant 3.125000e-02 : f32
    %95 = vector.broadcast %cst_41 : f32 to vector<1x8xf32>
    %96 = arith.mulf %94, %95 : vector<1x8xf32>
    %97 = arith.mulf %91, %91 : vector<1x8xf32>
    %98 = arith.subf %96, %97 : vector<1x8xf32>
    %cst_42 = arith.constant 0.000000e+00 : f32
    %99 = vector.broadcast %cst_42 : f32 to vector<1x8xf32>
    %100 = arith.maximumf %98, %99 : vector<1x8xf32>
    %101 = vector.broadcast %91 : vector<1x8xf32> to vector<32x8xf32>
    %102 = arith.subf %55, %101 : vector<32x8xf32>
    %cst_43 = arith.constant 9.99999974E-6 : f32
    %103 = vector.broadcast %cst_43 : f32 to vector<1x8xf32>
    %104 = arith.addf %100, %103 : vector<1x8xf32>
    %105 = math.rsqrt %104 : vector<1x8xf32>
    %106 = vector.broadcast %105 : vector<1x8xf32> to vector<32x8xf32>
    %107 = arith.mulf %102, %106 : vector<32x8xf32>
    %108 = vector.broadcast %85 : vector<1x8xf32> to vector<32x8xf32>
    %109 = arith.mulf %107, %108 : vector<32x8xf32>
    %110 = vector.broadcast %87 : vector<1x8xf32> to vector<32x8xf32>
    %111 = arith.addf %109, %110 : vector<32x8xf32>
    %c6 = arith.constant 6 : index
    %c0_44 = arith.constant 0 : index
    %c0_45 = arith.constant 0 : index
    %112 = vector.load %arg5[%c6, %c0_44, %c0_45] : memref<67x1x8xf32, #tpu.memory_space<vmem>>, vector<1x1x8xf32>
    %113 = vector.shape_cast %112 : vector<1x1x8xf32> to vector<1x8xf32>
    %c7 = arith.constant 7 : index
    %c0_46 = arith.constant 0 : index
    %c0_47 = arith.constant 0 : index
    %114 = vector.load %arg5[%c7, %c0_46, %c0_47] : memref<67x1x8xf32, #tpu.memory_space<vmem>>, vector<1x1x8xf32>
    %115 = vector.shape_cast %114 : vector<1x1x8xf32> to vector<1x8xf32>
    %cst_48 = arith.constant dense<0.000000e+00> : vector<8xf32>
    %116 = vector.multi_reduction <add>, %83, %cst_48 [0] : vector<32x8xf32> to vector<8xf32>
    %117 = vector.shape_cast %116 : vector<8xf32> to vector<1x8xf32>
    %cst_49 = arith.constant 3.125000e-02 : f32
    %118 = vector.broadcast %cst_49 : f32 to vector<1x8xf32>
    %119 = arith.mulf %117, %118 : vector<1x8xf32>
    %120 = arith.mulf %83, %83 : vector<32x8xf32>
    %cst_50 = arith.constant dense<0.000000e+00> : vector<8xf32>
    %121 = vector.multi_reduction <add>, %120, %cst_50 [0] : vector<32x8xf32> to vector<8xf32>
    %122 = vector.shape_cast %121 : vector<8xf32> to vector<1x8xf32>
    %cst_51 = arith.constant 3.125000e-02 : f32
    %123 = vector.broadcast %cst_51 : f32 to vector<1x8xf32>
    %124 = arith.mulf %122, %123 : vector<1x8xf32>
    %125 = arith.mulf %119, %119 : vector<1x8xf32>
    %126 = arith.subf %124, %125 : vector<1x8xf32>
    %cst_52 = arith.constant 0.000000e+00 : f32
    %127 = vector.broadcast %cst_52 : f32 to vector<1x8xf32>
    %128 = arith.maximumf %126, %127 : vector<1x8xf32>
    %129 = vector.broadcast %119 : vector<1x8xf32> to vector<32x8xf32>
    %130 = arith.subf %83, %129 : vector<32x8xf32>
    %cst_53 = arith.constant 9.99999974E-6 : f32
    %131 = vector.broadcast %cst_53 : f32 to vector<1x8xf32>
    %132 = arith.addf %128, %131 : vector<1x8xf32>
    %133 = math.rsqrt %132 : vector<1x8xf32>
    %134 = vector.broadcast %133 : vector<1x8xf32> to vector<32x8xf32>
    %135 = arith.mulf %130, %134 : vector<32x8xf32>
    %136 = vector.broadcast %113 : vector<1x8xf32> to vector<32x8xf32>
    %137 = arith.mulf %135, %136 : vector<32x8xf32>
    %138 = vector.broadcast %115 : vector<1x8xf32> to vector<32x8xf32>
    %139 = arith.addf %137, %138 : vector<32x8xf32>
    %c8 = arith.constant 8 : index
    %c0_54 = arith.constant 0 : index
    %c0_55 = arith.constant 0 : index
    %140 = vector.load %arg5[%c8, %c0_54, %c0_55] : memref<67x1x8xf32, #tpu.memory_space<vmem>>, vector<1x1x8xf32>
    %141 = vector.shape_cast %140 : vector<1x1x8xf32> to vector<1x8xf32>
    %c9 = arith.constant 9 : index
    %c0_56 = arith.constant 0 : index
    %c0_57 = arith.constant 0 : index
    %142 = vector.load %arg5[%c9, %c0_56, %c0_57] : memref<67x1x8xf32, #tpu.memory_space<vmem>>, vector<1x1x8xf32>
    %143 = vector.shape_cast %142 : vector<1x1x8xf32> to vector<1x8xf32>
    %cst_58 = arith.constant dense<0.000000e+00> : vector<8xf32>
    %144 = vector.multi_reduction <add>, %1, %cst_58 [0] : vector<32x8xf32> to vector<8xf32>
    %145 = vector.shape_cast %144 : vector<8xf32> to vector<1x8xf32>
    %cst_59 = arith.constant 3.125000e-02 : f32
    %146 = vector.broadcast %cst_59 : f32 to vector<1x8xf32>
    %147 = arith.mulf %145, %146 : vector<1x8xf32>
    %148 = arith.mulf %1, %1 : vector<32x8xf32>
    %cst_60 = arith.constant dense<0.000000e+00> : vector<8xf32>
    %149 = vector.multi_reduction <add>, %148, %cst_60 [0] : vector<32x8xf32> to vector<8xf32>
    %150 = vector.shape_cast %149 : vector<8xf32> to vector<1x8xf32>
    %cst_61 = arith.constant 3.125000e-02 : f32
    %151 = vector.broadcast %cst_61 : f32 to vector<1x8xf32>
    %152 = arith.mulf %150, %151 : vector<1x8xf32>
    %153 = arith.mulf %147, %147 : vector<1x8xf32>
    %154 = arith.subf %152, %153 : vector<1x8xf32>
    %cst_62 = arith.constant 0.000000e+00 : f32
    %155 = vector.broadcast %cst_62 : f32 to vector<1x8xf32>
    %156 = arith.maximumf %154, %155 : vector<1x8xf32>
    %157 = vector.broadcast %147 : vector<1x8xf32> to vector<32x8xf32>
    %158 = arith.subf %1, %157 : vector<32x8xf32>
    %cst_63 = arith.constant 9.99999974E-6 : f32
    %159 = vector.broadcast %cst_63 : f32 to vector<1x8xf32>
    %160 = arith.addf %156, %159 : vector<1x8xf32>
    %161 = math.rsqrt %160 : vector<1x8xf32>
    %162 = vector.broadcast %161 : vector<1x8xf32> to vector<32x8xf32>
    %163 = arith.mulf %158, %162 : vector<32x8xf32>
    %164 = vector.broadcast %141 : vector<1x8xf32> to vector<32x8xf32>
    %165 = arith.mulf %163, %164 : vector<32x8xf32>
    %166 = vector.broadcast %143 : vector<1x8xf32> to vector<32x8xf32>
    %167 = arith.addf %165, %166 : vector<32x8xf32>
    %c0_64 = arith.constant 0 : index
    %c0_65 = arith.constant 0 : index
    %c0_66 = arith.constant 0 : index
    %168 = vector.load %arg6[%c0_64, %c0_65, %c0_66] : memref<13x8x8xf32, #tpu.memory_space<vmem>>, vector<1x8x8xf32>
    %169 = vector.shape_cast %168 : vector<1x8x8xf32> to vector<8x8xf32>
    %cst_67 = arith.constant dense<0.000000e+00> : vector<32x8xf32>
    %170 = tpu.matmul %111, %169, %cst_67 {dimension_numbers = #tpu.dot_dimension_numbers<[1], [0], [0], [1], [0, 0, 1, 1], [], []>} : vector<32x8xf32>, vector<8x8xf32>, vector<32x8xf32> -> vector<32x8xf32>
    %c1_68 = arith.constant 1 : index
    %c0_69 = arith.constant 0 : index
    %c0_70 = arith.constant 0 : index
    %171 = vector.load %arg6[%c1_68, %c0_69, %c0_70] : memref<13x8x8xf32, #tpu.memory_space<vmem>>, vector<1x8x8xf32>
    %172 = vector.shape_cast %171 : vector<1x8x8xf32> to vector<8x8xf32>
    %cst_71 = arith.constant dense<0.000000e+00> : vector<32x8xf32>
    %173 = tpu.matmul %139, %172, %cst_71 {dimension_numbers = #tpu.dot_dimension_numbers<[1], [0], [0], [1], [0, 0, 1, 1], [], []>} : vector<32x8xf32>, vector<8x8xf32>, vector<32x8xf32> -> vector<32x8xf32>
    %174 = arith.addf %170, %173 : vector<32x8xf32>
    %c2_72 = arith.constant 2 : index
    %c0_73 = arith.constant 0 : index
    %c0_74 = arith.constant 0 : index
    %175 = vector.load %arg6[%c2_72, %c0_73, %c0_74] : memref<13x8x8xf32, #tpu.memory_space<vmem>>, vector<1x8x8xf32>
    %176 = vector.shape_cast %175 : vector<1x8x8xf32> to vector<8x8xf32>
    %cst_75 = arith.constant dense<0.000000e+00> : vector<32x8xf32>
    %177 = tpu.matmul %167, %176, %cst_75 {dimension_numbers = #tpu.dot_dimension_numbers<[1], [0], [0], [1], [0, 0, 1, 1], [], []>} : vector<32x8xf32>, vector<8x8xf32>, vector<32x8xf32> -> vector<32x8xf32>
    %178 = arith.addf %174, %177 : vector<32x8xf32>
    %c10 = arith.constant 10 : index
    %c0_76 = arith.constant 0 : index
    %c0_77 = arith.constant 0 : index
    %179 = vector.load %arg5[%c10, %c0_76, %c0_77] : memref<67x1x8xf32, #tpu.memory_space<vmem>>, vector<1x1x8xf32>
    %180 = vector.shape_cast %179 : vector<1x1x8xf32> to vector<1x8xf32>
    %181 = vector.broadcast %180 : vector<1x8xf32> to vector<32x8xf32>
    %182 = arith.addf %178, %181 : vector<32x8xf32>
    %c11 = arith.constant 11 : index
    %c0_78 = arith.constant 0 : index
    %c0_79 = arith.constant 0 : index
    %183 = vector.load %arg5[%c11, %c0_78, %c0_79] : memref<67x1x8xf32, #tpu.memory_space<vmem>>, vector<1x1x8xf32>
    %184 = vector.shape_cast %183 : vector<1x1x8xf32> to vector<1x8xf32>
    %c12 = arith.constant 12 : index
    %c0_80 = arith.constant 0 : index
    %c0_81 = arith.constant 0 : index
    %185 = vector.load %arg5[%c12, %c0_80, %c0_81] : memref<67x1x8xf32, #tpu.memory_space<vmem>>, vector<1x1x8xf32>
    %186 = vector.shape_cast %185 : vector<1x1x8xf32> to vector<1x8xf32>
    %cst_82 = arith.constant dense<0.000000e+00> : vector<8xf32>
    %187 = vector.multi_reduction <add>, %182, %cst_82 [0] : vector<32x8xf32> to vector<8xf32>
    %188 = vector.shape_cast %187 : vector<8xf32> to vector<1x8xf32>
    %cst_83 = arith.constant 3.125000e-02 : f32
    %189 = vector.broadcast %cst_83 : f32 to vector<1x8xf32>
    %190 = arith.mulf %188, %189 : vector<1x8xf32>
    %191 = arith.mulf %182, %182 : vector<32x8xf32>
    %cst_84 = arith.constant dense<0.000000e+00> : vector<8xf32>
    %192 = vector.multi_reduction <add>, %191, %cst_84 [0] : vector<32x8xf32> to vector<8xf32>
    %193 = vector.shape_cast %192 : vector<8xf32> to vector<1x8xf32>
    %cst_85 = arith.constant 3.125000e-02 : f32
    %194 = vector.broadcast %cst_85 : f32 to vector<1x8xf32>
    %195 = arith.mulf %193, %194 : vector<1x8xf32>
    %196 = arith.mulf %190, %190 : vector<1x8xf32>
    %197 = arith.subf %195, %196 : vector<1x8xf32>
    %cst_86 = arith.constant 0.000000e+00 : f32
    %198 = vector.broadcast %cst_86 : f32 to vector<1x8xf32>
    %199 = arith.maximumf %197, %198 : vector<1x8xf32>
    %200 = vector.broadcast %190 : vector<1x8xf32> to vector<32x8xf32>
    %201 = arith.subf %182, %200 : vector<32x8xf32>
    %cst_87 = arith.constant 9.99999974E-6 : f32
    %202 = vector.broadcast %cst_87 : f32 to vector<1x8xf32>
    %203 = arith.addf %199, %202 : vector<1x8xf32>
    %204 = math.rsqrt %203 : vector<1x8xf32>
    %205 = vector.broadcast %204 : vector<1x8xf32> to vector<32x8xf32>
    %206 = arith.mulf %201, %205 : vector<32x8xf32>
    %207 = vector.broadcast %184 : vector<1x8xf32> to vector<32x8xf32>
    %208 = arith.mulf %206, %207 : vector<32x8xf32>
    %209 = vector.broadcast %186 : vector<1x8xf32> to vector<32x8xf32>
    %210 = arith.addf %208, %209 : vector<32x8xf32>
    %cst_88 = arith.constant 2.000000e+01 : f32
    %211 = vector.broadcast %cst_88 : f32 to vector<32x8xf32>
    %212 = arith.cmpf ogt, %210, %211 : vector<32x8xf32>
    %cst_89 = arith.constant 2.000000e+01 : f32
    %213 = vector.broadcast %cst_89 : f32 to vector<32x8xf32>
    %214 = arith.minimumf %210, %213 : vector<32x8xf32>
    %215 = math.exp %214 : vector<32x8xf32>
    %216 = math.log1p %215 : vector<32x8xf32>
    %217 = arith.select %212, %210, %216 : vector<32x8xi1>, vector<32x8xf32>
    %218 = arith.addf %1, %217 : vector<32x8xf32>
    %c13 = arith.constant 13 : index
    %c0_90 = arith.constant 0 : index
    %c0_91 = arith.constant 0 : index
    %219 = vector.load %arg5[%c13, %c0_90, %c0_91] : memref<67x1x8xf32, #tpu.memory_space<vmem>>, vector<1x1x8xf32>
    %220 = vector.shape_cast %219 : vector<1x1x8xf32> to vector<1x8xf32>
    %c14 = arith.constant 14 : index
    %c0_92 = arith.constant 0 : index
    %c0_93 = arith.constant 0 : index
    %221 = vector.load %arg5[%c14, %c0_92, %c0_93] : memref<67x1x8xf32, #tpu.memory_space<vmem>>, vector<1x1x8xf32>
    %222 = vector.shape_cast %221 : vector<1x1x8xf32> to vector<1x8xf32>
    %cst_94 = arith.constant dense<0.000000e+00> : vector<8xf32>
    %223 = vector.multi_reduction <add>, %218, %cst_94 [0] : vector<32x8xf32> to vector<8xf32>
    %224 = vector.shape_cast %223 : vector<8xf32> to vector<1x8xf32>
    %cst_95 = arith.constant 3.125000e-02 : f32
    %225 = vector.broadcast %cst_95 : f32 to vector<1x8xf32>
    %226 = arith.mulf %224, %225 : vector<1x8xf32>
    %227 = arith.mulf %218, %218 : vector<32x8xf32>
    %cst_96 = arith.constant dense<0.000000e+00> : vector<8xf32>
    %228 = vector.multi_reduction <add>, %227, %cst_96 [0] : vector<32x8xf32> to vector<8xf32>
    %229 = vector.shape_cast %228 : vector<8xf32> to vector<1x8xf32>
    %cst_97 = arith.constant 3.125000e-02 : f32
    %230 = vector.broadcast %cst_97 : f32 to vector<1x8xf32>
    %231 = arith.mulf %229, %230 : vector<1x8xf32>
    %232 = arith.mulf %226, %226 : vector<1x8xf32>
    %233 = arith.subf %231, %232 : vector<1x8xf32>
    %cst_98 = arith.constant 0.000000e+00 : f32
    %234 = vector.broadcast %cst_98 : f32 to vector<1x8xf32>
    %235 = arith.maximumf %233, %234 : vector<1x8xf32>
    %236 = vector.broadcast %226 : vector<1x8xf32> to vector<32x8xf32>
    %237 = arith.subf %218, %236 : vector<32x8xf32>
    %cst_99 = arith.constant 9.99999974E-6 : f32
    %238 = vector.broadcast %cst_99 : f32 to vector<1x8xf32>
    %239 = arith.addf %235, %238 : vector<1x8xf32>
    %240 = math.rsqrt %239 : vector<1x8xf32>
    %241 = vector.broadcast %240 : vector<1x8xf32> to vector<32x8xf32>
    %242 = arith.mulf %237, %241 : vector<32x8xf32>
    %243 = vector.broadcast %220 : vector<1x8xf32> to vector<32x8xf32>
    %244 = arith.mulf %242, %243 : vector<32x8xf32>
    %245 = vector.broadcast %222 : vector<1x8xf32> to vector<32x8xf32>
    %246 = arith.addf %244, %245 : vector<32x8xf32>
    %cst_100 = arith.constant dense<0.000000e+00> : vector<16x8xf32>
    %247 = tpu.matmul %25, %246, %cst_100 {dimension_numbers = #tpu.dot_dimension_numbers<[1], [0], [0], [1], [0, 0, 1, 1], [], []>} : vector<16x32xf32>, vector<32x8xf32>, vector<16x8xf32> -> vector<16x8xf32>
    %c15 = arith.constant 15 : index
    %c0_101 = arith.constant 0 : index
    %c0_102 = arith.constant 0 : index
    %248 = vector.load %arg5[%c15, %c0_101, %c0_102] : memref<67x1x8xf32, #tpu.memory_space<vmem>>, vector<1x1x8xf32>
    %249 = vector.shape_cast %248 : vector<1x1x8xf32> to vector<1x8xf32>
    %c16 = arith.constant 16 : index
    %c0_103 = arith.constant 0 : index
    %c0_104 = arith.constant 0 : index
    %250 = vector.load %arg5[%c16, %c0_103, %c0_104] : memref<67x1x8xf32, #tpu.memory_space<vmem>>, vector<1x1x8xf32>
    %251 = vector.shape_cast %250 : vector<1x1x8xf32> to vector<1x8xf32>
    %cst_105 = arith.constant dense<0.000000e+00> : vector<8xf32>
    %252 = vector.multi_reduction <add>, %247, %cst_105 [0] : vector<16x8xf32> to vector<8xf32>
    %253 = vector.shape_cast %252 : vector<8xf32> to vector<1x8xf32>
    %cst_106 = arith.constant 6.250000e-02 : f32
    %254 = vector.broadcast %cst_106 : f32 to vector<1x8xf32>
    %255 = arith.mulf %253, %254 : vector<1x8xf32>
    %256 = arith.mulf %247, %247 : vector<16x8xf32>
    %cst_107 = arith.constant dense<0.000000e+00> : vector<8xf32>
    %257 = vector.multi_reduction <add>, %256, %cst_107 [0] : vector<16x8xf32> to vector<8xf32>
    %258 = vector.shape_cast %257 : vector<8xf32> to vector<1x8xf32>
    %cst_108 = arith.constant 6.250000e-02 : f32
    %259 = vector.broadcast %cst_108 : f32 to vector<1x8xf32>
    %260 = arith.mulf %258, %259 : vector<1x8xf32>
    %261 = arith.mulf %255, %255 : vector<1x8xf32>
    %262 = arith.subf %260, %261 : vector<1x8xf32>
    %cst_109 = arith.constant 0.000000e+00 : f32
    %263 = vector.broadcast %cst_109 : f32 to vector<1x8xf32>
    %264 = arith.maximumf %262, %263 : vector<1x8xf32>
    %265 = vector.broadcast %255 : vector<1x8xf32> to vector<16x8xf32>
    %266 = arith.subf %247, %265 : vector<16x8xf32>
    %cst_110 = arith.constant 9.99999974E-6 : f32
    %267 = vector.broadcast %cst_110 : f32 to vector<1x8xf32>
    %268 = arith.addf %264, %267 : vector<1x8xf32>
    %269 = math.rsqrt %268 : vector<1x8xf32>
    %270 = vector.broadcast %269 : vector<1x8xf32> to vector<16x8xf32>
    %271 = arith.mulf %266, %270 : vector<16x8xf32>
    %272 = vector.broadcast %249 : vector<1x8xf32> to vector<16x8xf32>
    %273 = arith.mulf %271, %272 : vector<16x8xf32>
    %274 = vector.broadcast %251 : vector<1x8xf32> to vector<16x8xf32>
    %275 = arith.addf %273, %274 : vector<16x8xf32>
    %c17 = arith.constant 17 : index
    %c0_111 = arith.constant 0 : index
    %c0_112 = arith.constant 0 : index
    %276 = vector.load %arg5[%c17, %c0_111, %c0_112] : memref<67x1x8xf32, #tpu.memory_space<vmem>>, vector<1x1x8xf32>
    %277 = vector.shape_cast %276 : vector<1x1x8xf32> to vector<1x8xf32>
    %c18 = arith.constant 18 : index
    %c0_113 = arith.constant 0 : index
    %c0_114 = arith.constant 0 : index
    %278 = vector.load %arg5[%c18, %c0_113, %c0_114] : memref<67x1x8xf32, #tpu.memory_space<vmem>>, vector<1x1x8xf32>
    %279 = vector.shape_cast %278 : vector<1x1x8xf32> to vector<1x8xf32>
    %cst_115 = arith.constant dense<0.000000e+00> : vector<8xf32>
    %280 = vector.multi_reduction <add>, %0, %cst_115 [0] : vector<16x8xf32> to vector<8xf32>
    %281 = vector.shape_cast %280 : vector<8xf32> to vector<1x8xf32>
    %cst_116 = arith.constant 6.250000e-02 : f32
    %282 = vector.broadcast %cst_116 : f32 to vector<1x8xf32>
    %283 = arith.mulf %281, %282 : vector<1x8xf32>
    %284 = arith.mulf %0, %0 : vector<16x8xf32>
    %cst_117 = arith.constant dense<0.000000e+00> : vector<8xf32>
    %285 = vector.multi_reduction <add>, %284, %cst_117 [0] : vector<16x8xf32> to vector<8xf32>
    %286 = vector.shape_cast %285 : vector<8xf32> to vector<1x8xf32>
    %cst_118 = arith.constant 6.250000e-02 : f32
    %287 = vector.broadcast %cst_118 : f32 to vector<1x8xf32>
    %288 = arith.mulf %286, %287 : vector<1x8xf32>
    %289 = arith.mulf %283, %283 : vector<1x8xf32>
    %290 = arith.subf %288, %289 : vector<1x8xf32>
    %cst_119 = arith.constant 0.000000e+00 : f32
    %291 = vector.broadcast %cst_119 : f32 to vector<1x8xf32>
    %292 = arith.maximumf %290, %291 : vector<1x8xf32>
    %293 = vector.broadcast %283 : vector<1x8xf32> to vector<16x8xf32>
    %294 = arith.subf %0, %293 : vector<16x8xf32>
    %cst_120 = arith.constant 9.99999974E-6 : f32
    %295 = vector.broadcast %cst_120 : f32 to vector<1x8xf32>
    %296 = arith.addf %292, %295 : vector<1x8xf32>
    %297 = math.rsqrt %296 : vector<1x8xf32>
    %298 = vector.broadcast %297 : vector<1x8xf32> to vector<16x8xf32>
    %299 = arith.mulf %294, %298 : vector<16x8xf32>
    %300 = vector.broadcast %277 : vector<1x8xf32> to vector<16x8xf32>
    %301 = arith.mulf %299, %300 : vector<16x8xf32>
    %302 = vector.broadcast %279 : vector<1x8xf32> to vector<16x8xf32>
    %303 = arith.addf %301, %302 : vector<16x8xf32>
    %c19 = arith.constant 19 : index
    %c0_121 = arith.constant 0 : index
    %c0_122 = arith.constant 0 : index
    %304 = vector.load %arg5[%c19, %c0_121, %c0_122] : memref<67x1x8xf32, #tpu.memory_space<vmem>>, vector<1x1x8xf32>
    %305 = vector.shape_cast %304 : vector<1x1x8xf32> to vector<1x8xf32>
    %c20 = arith.constant 20 : index
    %c0_123 = arith.constant 0 : index
    %c0_124 = arith.constant 0 : index
    %306 = vector.load %arg5[%c20, %c0_123, %c0_124] : memref<67x1x8xf32, #tpu.memory_space<vmem>>, vector<1x1x8xf32>
    %307 = vector.shape_cast %306 : vector<1x1x8xf32> to vector<1x8xf32>
    %cst_125 = arith.constant dense<0.000000e+00> : vector<8xf32>
    %308 = vector.multi_reduction <add>, %275, %cst_125 [0] : vector<16x8xf32> to vector<8xf32>
    %309 = vector.shape_cast %308 : vector<8xf32> to vector<1x8xf32>
    %cst_126 = arith.constant 6.250000e-02 : f32
    %310 = vector.broadcast %cst_126 : f32 to vector<1x8xf32>
    %311 = arith.mulf %309, %310 : vector<1x8xf32>
    %312 = arith.mulf %275, %275 : vector<16x8xf32>
    %cst_127 = arith.constant dense<0.000000e+00> : vector<8xf32>
    %313 = vector.multi_reduction <add>, %312, %cst_127 [0] : vector<16x8xf32> to vector<8xf32>
    %314 = vector.shape_cast %313 : vector<8xf32> to vector<1x8xf32>
    %cst_128 = arith.constant 6.250000e-02 : f32
    %315 = vector.broadcast %cst_128 : f32 to vector<1x8xf32>
    %316 = arith.mulf %314, %315 : vector<1x8xf32>
    %317 = arith.mulf %311, %311 : vector<1x8xf32>
    %318 = arith.subf %316, %317 : vector<1x8xf32>
    %cst_129 = arith.constant 0.000000e+00 : f32
    %319 = vector.broadcast %cst_129 : f32 to vector<1x8xf32>
    %320 = arith.maximumf %318, %319 : vector<1x8xf32>
    %321 = vector.broadcast %311 : vector<1x8xf32> to vector<16x8xf32>
    %322 = arith.subf %275, %321 : vector<16x8xf32>
    %cst_130 = arith.constant 9.99999974E-6 : f32
    %323 = vector.broadcast %cst_130 : f32 to vector<1x8xf32>
    %324 = arith.addf %320, %323 : vector<1x8xf32>
    %325 = math.rsqrt %324 : vector<1x8xf32>
    %326 = vector.broadcast %325 : vector<1x8xf32> to vector<16x8xf32>
    %327 = arith.mulf %322, %326 : vector<16x8xf32>
    %328 = vector.broadcast %305 : vector<1x8xf32> to vector<16x8xf32>
    %329 = arith.mulf %327, %328 : vector<16x8xf32>
    %330 = vector.broadcast %307 : vector<1x8xf32> to vector<16x8xf32>
    %331 = arith.addf %329, %330 : vector<16x8xf32>
    %c3_131 = arith.constant 3 : index
    %c0_132 = arith.constant 0 : index
    %c0_133 = arith.constant 0 : index
    %332 = vector.load %arg6[%c3_131, %c0_132, %c0_133] : memref<13x8x8xf32, #tpu.memory_space<vmem>>, vector<1x8x8xf32>
    %333 = vector.shape_cast %332 : vector<1x8x8xf32> to vector<8x8xf32>
    %cst_134 = arith.constant dense<0.000000e+00> : vector<16x8xf32>
    %334 = tpu.matmul %303, %333, %cst_134 {dimension_numbers = #tpu.dot_dimension_numbers<[1], [0], [0], [1], [0, 0, 1, 1], [], []>} : vector<16x8xf32>, vector<8x8xf32>, vector<16x8xf32> -> vector<16x8xf32>
    %c4_135 = arith.constant 4 : index
    %c0_136 = arith.constant 0 : index
    %c0_137 = arith.constant 0 : index
    %335 = vector.load %arg6[%c4_135, %c0_136, %c0_137] : memref<13x8x8xf32, #tpu.memory_space<vmem>>, vector<1x8x8xf32>
    %336 = vector.shape_cast %335 : vector<1x8x8xf32> to vector<8x8xf32>
    %cst_138 = arith.constant dense<0.000000e+00> : vector<16x8xf32>
    %337 = tpu.matmul %331, %336, %cst_138 {dimension_numbers = #tpu.dot_dimension_numbers<[1], [0], [0], [1], [0, 0, 1, 1], [], []>} : vector<16x8xf32>, vector<8x8xf32>, vector<16x8xf32> -> vector<16x8xf32>
    %338 = arith.addf %334, %337 : vector<16x8xf32>
    %c21 = arith.constant 21 : index
    %c0_139 = arith.constant 0 : index
    %c0_140 = arith.constant 0 : index
    %339 = vector.load %arg5[%c21, %c0_139, %c0_140] : memref<67x1x8xf32, #tpu.memory_space<vmem>>, vector<1x1x8xf32>
    %340 = vector.shape_cast %339 : vector<1x1x8xf32> to vector<1x8xf32>
    %341 = vector.broadcast %340 : vector<1x8xf32> to vector<16x8xf32>
    %342 = arith.addf %338, %341 : vector<16x8xf32>
    %c22 = arith.constant 22 : index
    %c0_141 = arith.constant 0 : index
    %c0_142 = arith.constant 0 : index
    %343 = vector.load %arg5[%c22, %c0_141, %c0_142] : memref<67x1x8xf32, #tpu.memory_space<vmem>>, vector<1x1x8xf32>
    %344 = vector.shape_cast %343 : vector<1x1x8xf32> to vector<1x8xf32>
    %c23 = arith.constant 23 : index
    %c0_143 = arith.constant 0 : index
    %c0_144 = arith.constant 0 : index
    %345 = vector.load %arg5[%c23, %c0_143, %c0_144] : memref<67x1x8xf32, #tpu.memory_space<vmem>>, vector<1x1x8xf32>
    %346 = vector.shape_cast %345 : vector<1x1x8xf32> to vector<1x8xf32>
    %cst_145 = arith.constant dense<0.000000e+00> : vector<8xf32>
    %347 = vector.multi_reduction <add>, %342, %cst_145 [0] : vector<16x8xf32> to vector<8xf32>
    %348 = vector.shape_cast %347 : vector<8xf32> to vector<1x8xf32>
    %cst_146 = arith.constant 6.250000e-02 : f32
    %349 = vector.broadcast %cst_146 : f32 to vector<1x8xf32>
    %350 = arith.mulf %348, %349 : vector<1x8xf32>
    %351 = arith.mulf %342, %342 : vector<16x8xf32>
    %cst_147 = arith.constant dense<0.000000e+00> : vector<8xf32>
    %352 = vector.multi_reduction <add>, %351, %cst_147 [0] : vector<16x8xf32> to vector<8xf32>
    %353 = vector.shape_cast %352 : vector<8xf32> to vector<1x8xf32>
    %cst_148 = arith.constant 6.250000e-02 : f32
    %354 = vector.broadcast %cst_148 : f32 to vector<1x8xf32>
    %355 = arith.mulf %353, %354 : vector<1x8xf32>
    %356 = arith.mulf %350, %350 : vector<1x8xf32>
    %357 = arith.subf %355, %356 : vector<1x8xf32>
    %cst_149 = arith.constant 0.000000e+00 : f32
    %358 = vector.broadcast %cst_149 : f32 to vector<1x8xf32>
    %359 = arith.maximumf %357, %358 : vector<1x8xf32>
    %360 = vector.broadcast %350 : vector<1x8xf32> to vector<16x8xf32>
    %361 = arith.subf %342, %360 : vector<16x8xf32>
    %cst_150 = arith.constant 9.99999974E-6 : f32
    %362 = vector.broadcast %cst_150 : f32 to vector<1x8xf32>
    %363 = arith.addf %359, %362 : vector<1x8xf32>
    %364 = math.rsqrt %363 : vector<1x8xf32>
    %365 = vector.broadcast %364 : vector<1x8xf32> to vector<16x8xf32>
    %366 = arith.mulf %361, %365 : vector<16x8xf32>
    %367 = vector.broadcast %344 : vector<1x8xf32> to vector<16x8xf32>
    %368 = arith.mulf %366, %367 : vector<16x8xf32>
    %369 = vector.broadcast %346 : vector<1x8xf32> to vector<16x8xf32>
    %370 = arith.addf %368, %369 : vector<16x8xf32>
    %cst_151 = arith.constant 2.000000e+01 : f32
    %371 = vector.broadcast %cst_151 : f32 to vector<16x8xf32>
    %372 = arith.cmpf ogt, %370, %371 : vector<16x8xf32>
    %cst_152 = arith.constant 2.000000e+01 : f32
    %373 = vector.broadcast %cst_152 : f32 to vector<16x8xf32>
    %374 = arith.minimumf %370, %373 : vector<16x8xf32>
    %375 = math.exp %374 : vector<16x8xf32>
    %376 = math.log1p %375 : vector<16x8xf32>
    %377 = arith.select %372, %370, %376 : vector<16x8xi1>, vector<16x8xf32>
    %378 = arith.addf %0, %377 : vector<16x8xf32>
    %c24 = arith.constant 24 : index
    %c0_153 = arith.constant 0 : index
    %c0_154 = arith.constant 0 : index
    %379 = vector.load %arg5[%c24, %c0_153, %c0_154] : memref<67x1x8xf32, #tpu.memory_space<vmem>>, vector<1x1x8xf32>
    %380 = vector.shape_cast %379 : vector<1x1x8xf32> to vector<1x8xf32>
    %c25 = arith.constant 25 : index
    %c0_155 = arith.constant 0 : index
    %c0_156 = arith.constant 0 : index
    %381 = vector.load %arg5[%c25, %c0_155, %c0_156] : memref<67x1x8xf32, #tpu.memory_space<vmem>>, vector<1x1x8xf32>
    %382 = vector.shape_cast %381 : vector<1x1x8xf32> to vector<1x8xf32>
    %cst_157 = arith.constant dense<0.000000e+00> : vector<8xf32>
    %383 = vector.multi_reduction <add>, %378, %cst_157 [0] : vector<16x8xf32> to vector<8xf32>
    %384 = vector.shape_cast %383 : vector<8xf32> to vector<1x8xf32>
    %cst_158 = arith.constant 6.250000e-02 : f32
    %385 = vector.broadcast %cst_158 : f32 to vector<1x8xf32>
    %386 = arith.mulf %384, %385 : vector<1x8xf32>
    %387 = arith.mulf %378, %378 : vector<16x8xf32>
    %cst_159 = arith.constant dense<0.000000e+00> : vector<8xf32>
    %388 = vector.multi_reduction <add>, %387, %cst_159 [0] : vector<16x8xf32> to vector<8xf32>
    %389 = vector.shape_cast %388 : vector<8xf32> to vector<1x8xf32>
    %cst_160 = arith.constant 6.250000e-02 : f32
    %390 = vector.broadcast %cst_160 : f32 to vector<1x8xf32>
    %391 = arith.mulf %389, %390 : vector<1x8xf32>
    %392 = arith.mulf %386, %386 : vector<1x8xf32>
    %393 = arith.subf %391, %392 : vector<1x8xf32>
    %cst_161 = arith.constant 0.000000e+00 : f32
    %394 = vector.broadcast %cst_161 : f32 to vector<1x8xf32>
    %395 = arith.maximumf %393, %394 : vector<1x8xf32>
    %396 = vector.broadcast %386 : vector<1x8xf32> to vector<16x8xf32>
    %397 = arith.subf %378, %396 : vector<16x8xf32>
    %cst_162 = arith.constant 9.99999974E-6 : f32
    %398 = vector.broadcast %cst_162 : f32 to vector<1x8xf32>
    %399 = arith.addf %395, %398 : vector<1x8xf32>
    %400 = math.rsqrt %399 : vector<1x8xf32>
    %401 = vector.broadcast %400 : vector<1x8xf32> to vector<16x8xf32>
    %402 = arith.mulf %397, %401 : vector<16x8xf32>
    %403 = vector.broadcast %380 : vector<1x8xf32> to vector<16x8xf32>
    %404 = arith.mulf %402, %403 : vector<16x8xf32>
    %405 = vector.broadcast %382 : vector<1x8xf32> to vector<16x8xf32>
    %406 = arith.addf %404, %405 : vector<16x8xf32>
    %cst_163 = arith.constant dense<0.000000e+00> : vector<32x8xf32>
    %407 = tpu.matmul %7, %406, %cst_163 {dimension_numbers = #tpu.dot_dimension_numbers<[1], [0], [0], [1], [0, 0, 1, 1], [], []>} : vector<32x16xf32>, vector<16x8xf32>, vector<32x8xf32> -> vector<32x8xf32>
    %cst_164 = arith.constant dense<0.000000e+00> : vector<32x8xf32>
    %408 = tpu.matmul %12, %406, %cst_164 {dimension_numbers = #tpu.dot_dimension_numbers<[1], [0], [0], [1], [0, 0, 1, 1], [], []>} : vector<32x16xf32>, vector<16x8xf32>, vector<32x8xf32> -> vector<32x8xf32>
    %c26 = arith.constant 26 : index
    %c0_165 = arith.constant 0 : index
    %c0_166 = arith.constant 0 : index
    %409 = vector.load %arg5[%c26, %c0_165, %c0_166] : memref<67x1x8xf32, #tpu.memory_space<vmem>>, vector<1x1x8xf32>
    %410 = vector.shape_cast %409 : vector<1x1x8xf32> to vector<1x8xf32>
    %c27 = arith.constant 27 : index
    %c0_167 = arith.constant 0 : index
    %c0_168 = arith.constant 0 : index
    %411 = vector.load %arg5[%c27, %c0_167, %c0_168] : memref<67x1x8xf32, #tpu.memory_space<vmem>>, vector<1x1x8xf32>
    %412 = vector.shape_cast %411 : vector<1x1x8xf32> to vector<1x8xf32>
    %cst_169 = arith.constant dense<0.000000e+00> : vector<8xf32>
    %413 = vector.multi_reduction <add>, %407, %cst_169 [0] : vector<32x8xf32> to vector<8xf32>
    %414 = vector.shape_cast %413 : vector<8xf32> to vector<1x8xf32>
    %cst_170 = arith.constant 3.125000e-02 : f32
    %415 = vector.broadcast %cst_170 : f32 to vector<1x8xf32>
    %416 = arith.mulf %414, %415 : vector<1x8xf32>
    %417 = arith.mulf %407, %407 : vector<32x8xf32>
    %cst_171 = arith.constant dense<0.000000e+00> : vector<8xf32>
    %418 = vector.multi_reduction <add>, %417, %cst_171 [0] : vector<32x8xf32> to vector<8xf32>
    %419 = vector.shape_cast %418 : vector<8xf32> to vector<1x8xf32>
    %cst_172 = arith.constant 3.125000e-02 : f32
    %420 = vector.broadcast %cst_172 : f32 to vector<1x8xf32>
    %421 = arith.mulf %419, %420 : vector<1x8xf32>
    %422 = arith.mulf %416, %416 : vector<1x8xf32>
    %423 = arith.subf %421, %422 : vector<1x8xf32>
    %cst_173 = arith.constant 0.000000e+00 : f32
    %424 = vector.broadcast %cst_173 : f32 to vector<1x8xf32>
    %425 = arith.maximumf %423, %424 : vector<1x8xf32>
    %426 = vector.broadcast %416 : vector<1x8xf32> to vector<32x8xf32>
    %427 = arith.subf %407, %426 : vector<32x8xf32>
    %cst_174 = arith.constant 9.99999974E-6 : f32
    %428 = vector.broadcast %cst_174 : f32 to vector<1x8xf32>
    %429 = arith.addf %425, %428 : vector<1x8xf32>
    %430 = math.rsqrt %429 : vector<1x8xf32>
    %431 = vector.broadcast %430 : vector<1x8xf32> to vector<32x8xf32>
    %432 = arith.mulf %427, %431 : vector<32x8xf32>
    %433 = vector.broadcast %410 : vector<1x8xf32> to vector<32x8xf32>
    %434 = arith.mulf %432, %433 : vector<32x8xf32>
    %435 = vector.broadcast %412 : vector<1x8xf32> to vector<32x8xf32>
    %436 = arith.addf %434, %435 : vector<32x8xf32>
    %c28 = arith.constant 28 : index
    %c0_175 = arith.constant 0 : index
    %c0_176 = arith.constant 0 : index
    %437 = vector.load %arg5[%c28, %c0_175, %c0_176] : memref<67x1x8xf32, #tpu.memory_space<vmem>>, vector<1x1x8xf32>
    %438 = vector.shape_cast %437 : vector<1x1x8xf32> to vector<1x8xf32>
    %c29 = arith.constant 29 : index
    %c0_177 = arith.constant 0 : index
    %c0_178 = arith.constant 0 : index
    %439 = vector.load %arg5[%c29, %c0_177, %c0_178] : memref<67x1x8xf32, #tpu.memory_space<vmem>>, vector<1x1x8xf32>
    %440 = vector.shape_cast %439 : vector<1x1x8xf32> to vector<1x8xf32>
    %cst_179 = arith.constant dense<0.000000e+00> : vector<8xf32>
    %441 = vector.multi_reduction <add>, %408, %cst_179 [0] : vector<32x8xf32> to vector<8xf32>
    %442 = vector.shape_cast %441 : vector<8xf32> to vector<1x8xf32>
    %cst_180 = arith.constant 3.125000e-02 : f32
    %443 = vector.broadcast %cst_180 : f32 to vector<1x8xf32>
    %444 = arith.mulf %442, %443 : vector<1x8xf32>
    %445 = arith.mulf %408, %408 : vector<32x8xf32>
    %cst_181 = arith.constant dense<0.000000e+00> : vector<8xf32>
    %446 = vector.multi_reduction <add>, %445, %cst_181 [0] : vector<32x8xf32> to vector<8xf32>
    %447 = vector.shape_cast %446 : vector<8xf32> to vector<1x8xf32>
    %cst_182 = arith.constant 3.125000e-02 : f32
    %448 = vector.broadcast %cst_182 : f32 to vector<1x8xf32>
    %449 = arith.mulf %447, %448 : vector<1x8xf32>
    %450 = arith.mulf %444, %444 : vector<1x8xf32>
    %451 = arith.subf %449, %450 : vector<1x8xf32>
    %cst_183 = arith.constant 0.000000e+00 : f32
    %452 = vector.broadcast %cst_183 : f32 to vector<1x8xf32>
    %453 = arith.maximumf %451, %452 : vector<1x8xf32>
    %454 = vector.broadcast %444 : vector<1x8xf32> to vector<32x8xf32>
    %455 = arith.subf %408, %454 : vector<32x8xf32>
    %cst_184 = arith.constant 9.99999974E-6 : f32
    %456 = vector.broadcast %cst_184 : f32 to vector<1x8xf32>
    %457 = arith.addf %453, %456 : vector<1x8xf32>
    %458 = math.rsqrt %457 : vector<1x8xf32>
    %459 = vector.broadcast %458 : vector<1x8xf32> to vector<32x8xf32>
    %460 = arith.mulf %455, %459 : vector<32x8xf32>
    %461 = vector.broadcast %438 : vector<1x8xf32> to vector<32x8xf32>
    %462 = arith.mulf %460, %461 : vector<32x8xf32>
    %463 = vector.broadcast %440 : vector<1x8xf32> to vector<32x8xf32>
    %464 = arith.addf %462, %463 : vector<32x8xf32>
    %c30 = arith.constant 30 : index
    %c0_185 = arith.constant 0 : index
    %c0_186 = arith.constant 0 : index
    %465 = vector.load %arg5[%c30, %c0_185, %c0_186] : memref<67x1x8xf32, #tpu.memory_space<vmem>>, vector<1x1x8xf32>
    %466 = vector.shape_cast %465 : vector<1x1x8xf32> to vector<1x8xf32>
    %c31 = arith.constant 31 : index
    %c0_187 = arith.constant 0 : index
    %c0_188 = arith.constant 0 : index
    %467 = vector.load %arg5[%c31, %c0_187, %c0_188] : memref<67x1x8xf32, #tpu.memory_space<vmem>>, vector<1x1x8xf32>
    %468 = vector.shape_cast %467 : vector<1x1x8xf32> to vector<1x8xf32>
    %cst_189 = arith.constant dense<0.000000e+00> : vector<8xf32>
    %469 = vector.multi_reduction <add>, %436, %cst_189 [0] : vector<32x8xf32> to vector<8xf32>
    %470 = vector.shape_cast %469 : vector<8xf32> to vector<1x8xf32>
    %cst_190 = arith.constant 3.125000e-02 : f32
    %471 = vector.broadcast %cst_190 : f32 to vector<1x8xf32>
    %472 = arith.mulf %470, %471 : vector<1x8xf32>
    %473 = arith.mulf %436, %436 : vector<32x8xf32>
    %cst_191 = arith.constant dense<0.000000e+00> : vector<8xf32>
    %474 = vector.multi_reduction <add>, %473, %cst_191 [0] : vector<32x8xf32> to vector<8xf32>
    %475 = vector.shape_cast %474 : vector<8xf32> to vector<1x8xf32>
    %cst_192 = arith.constant 3.125000e-02 : f32
    %476 = vector.broadcast %cst_192 : f32 to vector<1x8xf32>
    %477 = arith.mulf %475, %476 : vector<1x8xf32>
    %478 = arith.mulf %472, %472 : vector<1x8xf32>
    %479 = arith.subf %477, %478 : vector<1x8xf32>
    %cst_193 = arith.constant 0.000000e+00 : f32
    %480 = vector.broadcast %cst_193 : f32 to vector<1x8xf32>
    %481 = arith.maximumf %479, %480 : vector<1x8xf32>
    %482 = vector.broadcast %472 : vector<1x8xf32> to vector<32x8xf32>
    %483 = arith.subf %436, %482 : vector<32x8xf32>
    %cst_194 = arith.constant 9.99999974E-6 : f32
    %484 = vector.broadcast %cst_194 : f32 to vector<1x8xf32>
    %485 = arith.addf %481, %484 : vector<1x8xf32>
    %486 = math.rsqrt %485 : vector<1x8xf32>
    %487 = vector.broadcast %486 : vector<1x8xf32> to vector<32x8xf32>
    %488 = arith.mulf %483, %487 : vector<32x8xf32>
    %489 = vector.broadcast %466 : vector<1x8xf32> to vector<32x8xf32>
    %490 = arith.mulf %488, %489 : vector<32x8xf32>
    %491 = vector.broadcast %468 : vector<1x8xf32> to vector<32x8xf32>
    %492 = arith.addf %490, %491 : vector<32x8xf32>
    %c32 = arith.constant 32 : index
    %c0_195 = arith.constant 0 : index
    %c0_196 = arith.constant 0 : index
    %493 = vector.load %arg5[%c32, %c0_195, %c0_196] : memref<67x1x8xf32, #tpu.memory_space<vmem>>, vector<1x1x8xf32>
    %494 = vector.shape_cast %493 : vector<1x1x8xf32> to vector<1x8xf32>
    %c33 = arith.constant 33 : index
    %c0_197 = arith.constant 0 : index
    %c0_198 = arith.constant 0 : index
    %495 = vector.load %arg5[%c33, %c0_197, %c0_198] : memref<67x1x8xf32, #tpu.memory_space<vmem>>, vector<1x1x8xf32>
    %496 = vector.shape_cast %495 : vector<1x1x8xf32> to vector<1x8xf32>
    %cst_199 = arith.constant dense<0.000000e+00> : vector<8xf32>
    %497 = vector.multi_reduction <add>, %464, %cst_199 [0] : vector<32x8xf32> to vector<8xf32>
    %498 = vector.shape_cast %497 : vector<8xf32> to vector<1x8xf32>
    %cst_200 = arith.constant 3.125000e-02 : f32
    %499 = vector.broadcast %cst_200 : f32 to vector<1x8xf32>
    %500 = arith.mulf %498, %499 : vector<1x8xf32>
    %501 = arith.mulf %464, %464 : vector<32x8xf32>
    %cst_201 = arith.constant dense<0.000000e+00> : vector<8xf32>
    %502 = vector.multi_reduction <add>, %501, %cst_201 [0] : vector<32x8xf32> to vector<8xf32>
    %503 = vector.shape_cast %502 : vector<8xf32> to vector<1x8xf32>
    %cst_202 = arith.constant 3.125000e-02 : f32
    %504 = vector.broadcast %cst_202 : f32 to vector<1x8xf32>
    %505 = arith.mulf %503, %504 : vector<1x8xf32>
    %506 = arith.mulf %500, %500 : vector<1x8xf32>
    %507 = arith.subf %505, %506 : vector<1x8xf32>
    %cst_203 = arith.constant 0.000000e+00 : f32
    %508 = vector.broadcast %cst_203 : f32 to vector<1x8xf32>
    %509 = arith.maximumf %507, %508 : vector<1x8xf32>
    %510 = vector.broadcast %500 : vector<1x8xf32> to vector<32x8xf32>
    %511 = arith.subf %464, %510 : vector<32x8xf32>
    %cst_204 = arith.constant 9.99999974E-6 : f32
    %512 = vector.broadcast %cst_204 : f32 to vector<1x8xf32>
    %513 = arith.addf %509, %512 : vector<1x8xf32>
    %514 = math.rsqrt %513 : vector<1x8xf32>
    %515 = vector.broadcast %514 : vector<1x8xf32> to vector<32x8xf32>
    %516 = arith.mulf %511, %515 : vector<32x8xf32>
    %517 = vector.broadcast %494 : vector<1x8xf32> to vector<32x8xf32>
    %518 = arith.mulf %516, %517 : vector<32x8xf32>
    %519 = vector.broadcast %496 : vector<1x8xf32> to vector<32x8xf32>
    %520 = arith.addf %518, %519 : vector<32x8xf32>
    %c34 = arith.constant 34 : index
    %c0_205 = arith.constant 0 : index
    %c0_206 = arith.constant 0 : index
    %521 = vector.load %arg5[%c34, %c0_205, %c0_206] : memref<67x1x8xf32, #tpu.memory_space<vmem>>, vector<1x1x8xf32>
    %522 = vector.shape_cast %521 : vector<1x1x8xf32> to vector<1x8xf32>
    %c35 = arith.constant 35 : index
    %c0_207 = arith.constant 0 : index
    %c0_208 = arith.constant 0 : index
    %523 = vector.load %arg5[%c35, %c0_207, %c0_208] : memref<67x1x8xf32, #tpu.memory_space<vmem>>, vector<1x1x8xf32>
    %524 = vector.shape_cast %523 : vector<1x1x8xf32> to vector<1x8xf32>
    %cst_209 = arith.constant dense<0.000000e+00> : vector<8xf32>
    %525 = vector.multi_reduction <add>, %246, %cst_209 [0] : vector<32x8xf32> to vector<8xf32>
    %526 = vector.shape_cast %525 : vector<8xf32> to vector<1x8xf32>
    %cst_210 = arith.constant 3.125000e-02 : f32
    %527 = vector.broadcast %cst_210 : f32 to vector<1x8xf32>
    %528 = arith.mulf %526, %527 : vector<1x8xf32>
    %529 = arith.mulf %246, %246 : vector<32x8xf32>
    %cst_211 = arith.constant dense<0.000000e+00> : vector<8xf32>
    %530 = vector.multi_reduction <add>, %529, %cst_211 [0] : vector<32x8xf32> to vector<8xf32>
    %531 = vector.shape_cast %530 : vector<8xf32> to vector<1x8xf32>
    %cst_212 = arith.constant 3.125000e-02 : f32
    %532 = vector.broadcast %cst_212 : f32 to vector<1x8xf32>
    %533 = arith.mulf %531, %532 : vector<1x8xf32>
    %534 = arith.mulf %528, %528 : vector<1x8xf32>
    %535 = arith.subf %533, %534 : vector<1x8xf32>
    %cst_213 = arith.constant 0.000000e+00 : f32
    %536 = vector.broadcast %cst_213 : f32 to vector<1x8xf32>
    %537 = arith.maximumf %535, %536 : vector<1x8xf32>
    %538 = vector.broadcast %528 : vector<1x8xf32> to vector<32x8xf32>
    %539 = arith.subf %246, %538 : vector<32x8xf32>
    %cst_214 = arith.constant 9.99999974E-6 : f32
    %540 = vector.broadcast %cst_214 : f32 to vector<1x8xf32>
    %541 = arith.addf %537, %540 : vector<1x8xf32>
    %542 = math.rsqrt %541 : vector<1x8xf32>
    %543 = vector.broadcast %542 : vector<1x8xf32> to vector<32x8xf32>
    %544 = arith.mulf %539, %543 : vector<32x8xf32>
    %545 = vector.broadcast %522 : vector<1x8xf32> to vector<32x8xf32>
    %546 = arith.mulf %544, %545 : vector<32x8xf32>
    %547 = vector.broadcast %524 : vector<1x8xf32> to vector<32x8xf32>
    %548 = arith.addf %546, %547 : vector<32x8xf32>
    %c5_215 = arith.constant 5 : index
    %c0_216 = arith.constant 0 : index
    %c0_217 = arith.constant 0 : index
    %549 = vector.load %arg6[%c5_215, %c0_216, %c0_217] : memref<13x8x8xf32, #tpu.memory_space<vmem>>, vector<1x8x8xf32>
    %550 = vector.shape_cast %549 : vector<1x8x8xf32> to vector<8x8xf32>
    %cst_218 = arith.constant dense<0.000000e+00> : vector<32x8xf32>
    %551 = tpu.matmul %492, %550, %cst_218 {dimension_numbers = #tpu.dot_dimension_numbers<[1], [0], [0], [1], [0, 0, 1, 1], [], []>} : vector<32x8xf32>, vector<8x8xf32>, vector<32x8xf32> -> vector<32x8xf32>
    %c6_219 = arith.constant 6 : index
    %c0_220 = arith.constant 0 : index
    %c0_221 = arith.constant 0 : index
    %552 = vector.load %arg6[%c6_219, %c0_220, %c0_221] : memref<13x8x8xf32, #tpu.memory_space<vmem>>, vector<1x8x8xf32>
    %553 = vector.shape_cast %552 : vector<1x8x8xf32> to vector<8x8xf32>
    %cst_222 = arith.constant dense<0.000000e+00> : vector<32x8xf32>
    %554 = tpu.matmul %520, %553, %cst_222 {dimension_numbers = #tpu.dot_dimension_numbers<[1], [0], [0], [1], [0, 0, 1, 1], [], []>} : vector<32x8xf32>, vector<8x8xf32>, vector<32x8xf32> -> vector<32x8xf32>
    %555 = arith.addf %551, %554 : vector<32x8xf32>
    %c7_223 = arith.constant 7 : index
    %c0_224 = arith.constant 0 : index
    %c0_225 = arith.constant 0 : index
    %556 = vector.load %arg6[%c7_223, %c0_224, %c0_225] : memref<13x8x8xf32, #tpu.memory_space<vmem>>, vector<1x8x8xf32>
    %557 = vector.shape_cast %556 : vector<1x8x8xf32> to vector<8x8xf32>
    %cst_226 = arith.constant dense<0.000000e+00> : vector<32x8xf32>
    %558 = tpu.matmul %548, %557, %cst_226 {dimension_numbers = #tpu.dot_dimension_numbers<[1], [0], [0], [1], [0, 0, 1, 1], [], []>} : vector<32x8xf32>, vector<8x8xf32>, vector<32x8xf32> -> vector<32x8xf32>
    %559 = arith.addf %555, %558 : vector<32x8xf32>
    %c36 = arith.constant 36 : index
    %c0_227 = arith.constant 0 : index
    %c0_228 = arith.constant 0 : index
    %560 = vector.load %arg5[%c36, %c0_227, %c0_228] : memref<67x1x8xf32, #tpu.memory_space<vmem>>, vector<1x1x8xf32>
    %561 = vector.shape_cast %560 : vector<1x1x8xf32> to vector<1x8xf32>
    %562 = vector.broadcast %561 : vector<1x8xf32> to vector<32x8xf32>
    %563 = arith.addf %559, %562 : vector<32x8xf32>
    %c37 = arith.constant 37 : index
    %c0_229 = arith.constant 0 : index
    %c0_230 = arith.constant 0 : index
    %564 = vector.load %arg5[%c37, %c0_229, %c0_230] : memref<67x1x8xf32, #tpu.memory_space<vmem>>, vector<1x1x8xf32>
    %565 = vector.shape_cast %564 : vector<1x1x8xf32> to vector<1x8xf32>
    %c38 = arith.constant 38 : index
    %c0_231 = arith.constant 0 : index
    %c0_232 = arith.constant 0 : index
    %566 = vector.load %arg5[%c38, %c0_231, %c0_232] : memref<67x1x8xf32, #tpu.memory_space<vmem>>, vector<1x1x8xf32>
    %567 = vector.shape_cast %566 : vector<1x1x8xf32> to vector<1x8xf32>
    %cst_233 = arith.constant dense<0.000000e+00> : vector<8xf32>
    %568 = vector.multi_reduction <add>, %563, %cst_233 [0] : vector<32x8xf32> to vector<8xf32>
    %569 = vector.shape_cast %568 : vector<8xf32> to vector<1x8xf32>
    %cst_234 = arith.constant 3.125000e-02 : f32
    %570 = vector.broadcast %cst_234 : f32 to vector<1x8xf32>
    %571 = arith.mulf %569, %570 : vector<1x8xf32>
    %572 = arith.mulf %563, %563 : vector<32x8xf32>
    %cst_235 = arith.constant dense<0.000000e+00> : vector<8xf32>
    %573 = vector.multi_reduction <add>, %572, %cst_235 [0] : vector<32x8xf32> to vector<8xf32>
    %574 = vector.shape_cast %573 : vector<8xf32> to vector<1x8xf32>
    %cst_236 = arith.constant 3.125000e-02 : f32
    %575 = vector.broadcast %cst_236 : f32 to vector<1x8xf32>
    %576 = arith.mulf %574, %575 : vector<1x8xf32>
    %577 = arith.mulf %571, %571 : vector<1x8xf32>
    %578 = arith.subf %576, %577 : vector<1x8xf32>
    %cst_237 = arith.constant 0.000000e+00 : f32
    %579 = vector.broadcast %cst_237 : f32 to vector<1x8xf32>
    %580 = arith.maximumf %578, %579 : vector<1x8xf32>
    %581 = vector.broadcast %571 : vector<1x8xf32> to vector<32x8xf32>
    %582 = arith.subf %563, %581 : vector<32x8xf32>
    %cst_238 = arith.constant 9.99999974E-6 : f32
    %583 = vector.broadcast %cst_238 : f32 to vector<1x8xf32>
    %584 = arith.addf %580, %583 : vector<1x8xf32>
    %585 = math.rsqrt %584 : vector<1x8xf32>
    %586 = vector.broadcast %585 : vector<1x8xf32> to vector<32x8xf32>
    %587 = arith.mulf %582, %586 : vector<32x8xf32>
    %588 = vector.broadcast %565 : vector<1x8xf32> to vector<32x8xf32>
    %589 = arith.mulf %587, %588 : vector<32x8xf32>
    %590 = vector.broadcast %567 : vector<1x8xf32> to vector<32x8xf32>
    %591 = arith.addf %589, %590 : vector<32x8xf32>
    %cst_239 = arith.constant 2.000000e+01 : f32
    %592 = vector.broadcast %cst_239 : f32 to vector<32x8xf32>
    %593 = arith.cmpf ogt, %591, %592 : vector<32x8xf32>
    %cst_240 = arith.constant 2.000000e+01 : f32
    %594 = vector.broadcast %cst_240 : f32 to vector<32x8xf32>
    %595 = arith.minimumf %591, %594 : vector<32x8xf32>
    %596 = math.exp %595 : vector<32x8xf32>
    %597 = math.log1p %596 : vector<32x8xf32>
    %598 = arith.select %593, %591, %597 : vector<32x8xi1>, vector<32x8xf32>
    %599 = arith.addf %246, %598 : vector<32x8xf32>
    %c39 = arith.constant 39 : index
    %c0_241 = arith.constant 0 : index
    %c0_242 = arith.constant 0 : index
    %600 = vector.load %arg5[%c39, %c0_241, %c0_242] : memref<67x1x8xf32, #tpu.memory_space<vmem>>, vector<1x1x8xf32>
    %601 = vector.shape_cast %600 : vector<1x1x8xf32> to vector<1x8xf32>
    %c40 = arith.constant 40 : index
    %c0_243 = arith.constant 0 : index
    %c0_244 = arith.constant 0 : index
    %602 = vector.load %arg5[%c40, %c0_243, %c0_244] : memref<67x1x8xf32, #tpu.memory_space<vmem>>, vector<1x1x8xf32>
    %603 = vector.shape_cast %602 : vector<1x1x8xf32> to vector<1x8xf32>
    %cst_245 = arith.constant dense<0.000000e+00> : vector<8xf32>
    %604 = vector.multi_reduction <add>, %599, %cst_245 [0] : vector<32x8xf32> to vector<8xf32>
    %605 = vector.shape_cast %604 : vector<8xf32> to vector<1x8xf32>
    %cst_246 = arith.constant 3.125000e-02 : f32
    %606 = vector.broadcast %cst_246 : f32 to vector<1x8xf32>
    %607 = arith.mulf %605, %606 : vector<1x8xf32>
    %608 = arith.mulf %599, %599 : vector<32x8xf32>
    %cst_247 = arith.constant dense<0.000000e+00> : vector<8xf32>
    %609 = vector.multi_reduction <add>, %608, %cst_247 [0] : vector<32x8xf32> to vector<8xf32>
    %610 = vector.shape_cast %609 : vector<8xf32> to vector<1x8xf32>
    %cst_248 = arith.constant 3.125000e-02 : f32
    %611 = vector.broadcast %cst_248 : f32 to vector<1x8xf32>
    %612 = arith.mulf %610, %611 : vector<1x8xf32>
    %613 = arith.mulf %607, %607 : vector<1x8xf32>
    %614 = arith.subf %612, %613 : vector<1x8xf32>
    %cst_249 = arith.constant 0.000000e+00 : f32
    %615 = vector.broadcast %cst_249 : f32 to vector<1x8xf32>
    %616 = arith.maximumf %614, %615 : vector<1x8xf32>
    %617 = vector.broadcast %607 : vector<1x8xf32> to vector<32x8xf32>
    %618 = arith.subf %599, %617 : vector<32x8xf32>
    %cst_250 = arith.constant 9.99999974E-6 : f32
    %619 = vector.broadcast %cst_250 : f32 to vector<1x8xf32>
    %620 = arith.addf %616, %619 : vector<1x8xf32>
    %621 = math.rsqrt %620 : vector<1x8xf32>
    %622 = vector.broadcast %621 : vector<1x8xf32> to vector<32x8xf32>
    %623 = arith.mulf %618, %622 : vector<32x8xf32>
    %624 = vector.broadcast %601 : vector<1x8xf32> to vector<32x8xf32>
    %625 = arith.mulf %623, %624 : vector<32x8xf32>
    %626 = vector.broadcast %603 : vector<1x8xf32> to vector<32x8xf32>
    %627 = arith.addf %625, %626 : vector<32x8xf32>
    %cst_251 = arith.constant dense<0.000000e+00> : vector<16x8xf32>
    %628 = tpu.matmul %25, %627, %cst_251 {dimension_numbers = #tpu.dot_dimension_numbers<[1], [0], [0], [1], [0, 0, 1, 1], [], []>} : vector<16x32xf32>, vector<32x8xf32>, vector<16x8xf32> -> vector<16x8xf32>
    %c41 = arith.constant 41 : index
    %c0_252 = arith.constant 0 : index
    %c0_253 = arith.constant 0 : index
    %629 = vector.load %arg5[%c41, %c0_252, %c0_253] : memref<67x1x8xf32, #tpu.memory_space<vmem>>, vector<1x1x8xf32>
    %630 = vector.shape_cast %629 : vector<1x1x8xf32> to vector<1x8xf32>
    %c42 = arith.constant 42 : index
    %c0_254 = arith.constant 0 : index
    %c0_255 = arith.constant 0 : index
    %631 = vector.load %arg5[%c42, %c0_254, %c0_255] : memref<67x1x8xf32, #tpu.memory_space<vmem>>, vector<1x1x8xf32>
    %632 = vector.shape_cast %631 : vector<1x1x8xf32> to vector<1x8xf32>
    %cst_256 = arith.constant dense<0.000000e+00> : vector<8xf32>
    %633 = vector.multi_reduction <add>, %628, %cst_256 [0] : vector<16x8xf32> to vector<8xf32>
    %634 = vector.shape_cast %633 : vector<8xf32> to vector<1x8xf32>
    %cst_257 = arith.constant 6.250000e-02 : f32
    %635 = vector.broadcast %cst_257 : f32 to vector<1x8xf32>
    %636 = arith.mulf %634, %635 : vector<1x8xf32>
    %637 = arith.mulf %628, %628 : vector<16x8xf32>
    %cst_258 = arith.constant dense<0.000000e+00> : vector<8xf32>
    %638 = vector.multi_reduction <add>, %637, %cst_258 [0] : vector<16x8xf32> to vector<8xf32>
    %639 = vector.shape_cast %638 : vector<8xf32> to vector<1x8xf32>
    %cst_259 = arith.constant 6.250000e-02 : f32
    %640 = vector.broadcast %cst_259 : f32 to vector<1x8xf32>
    %641 = arith.mulf %639, %640 : vector<1x8xf32>
    %642 = arith.mulf %636, %636 : vector<1x8xf32>
    %643 = arith.subf %641, %642 : vector<1x8xf32>
    %cst_260 = arith.constant 0.000000e+00 : f32
    %644 = vector.broadcast %cst_260 : f32 to vector<1x8xf32>
    %645 = arith.maximumf %643, %644 : vector<1x8xf32>
    %646 = vector.broadcast %636 : vector<1x8xf32> to vector<16x8xf32>
    %647 = arith.subf %628, %646 : vector<16x8xf32>
    %cst_261 = arith.constant 9.99999974E-6 : f32
    %648 = vector.broadcast %cst_261 : f32 to vector<1x8xf32>
    %649 = arith.addf %645, %648 : vector<1x8xf32>
    %650 = math.rsqrt %649 : vector<1x8xf32>
    %651 = vector.broadcast %650 : vector<1x8xf32> to vector<16x8xf32>
    %652 = arith.mulf %647, %651 : vector<16x8xf32>
    %653 = vector.broadcast %630 : vector<1x8xf32> to vector<16x8xf32>
    %654 = arith.mulf %652, %653 : vector<16x8xf32>
    %655 = vector.broadcast %632 : vector<1x8xf32> to vector<16x8xf32>
    %656 = arith.addf %654, %655 : vector<16x8xf32>
    %c43 = arith.constant 43 : index
    %c0_262 = arith.constant 0 : index
    %c0_263 = arith.constant 0 : index
    %657 = vector.load %arg5[%c43, %c0_262, %c0_263] : memref<67x1x8xf32, #tpu.memory_space<vmem>>, vector<1x1x8xf32>
    %658 = vector.shape_cast %657 : vector<1x1x8xf32> to vector<1x8xf32>
    %c44 = arith.constant 44 : index
    %c0_264 = arith.constant 0 : index
    %c0_265 = arith.constant 0 : index
    %659 = vector.load %arg5[%c44, %c0_264, %c0_265] : memref<67x1x8xf32, #tpu.memory_space<vmem>>, vector<1x1x8xf32>
    %660 = vector.shape_cast %659 : vector<1x1x8xf32> to vector<1x8xf32>
    %cst_266 = arith.constant dense<0.000000e+00> : vector<8xf32>
    %661 = vector.multi_reduction <add>, %406, %cst_266 [0] : vector<16x8xf32> to vector<8xf32>
    %662 = vector.shape_cast %661 : vector<8xf32> to vector<1x8xf32>
    %cst_267 = arith.constant 6.250000e-02 : f32
    %663 = vector.broadcast %cst_267 : f32 to vector<1x8xf32>
    %664 = arith.mulf %662, %663 : vector<1x8xf32>
    %665 = arith.mulf %406, %406 : vector<16x8xf32>
    %cst_268 = arith.constant dense<0.000000e+00> : vector<8xf32>
    %666 = vector.multi_reduction <add>, %665, %cst_268 [0] : vector<16x8xf32> to vector<8xf32>
    %667 = vector.shape_cast %666 : vector<8xf32> to vector<1x8xf32>
    %cst_269 = arith.constant 6.250000e-02 : f32
    %668 = vector.broadcast %cst_269 : f32 to vector<1x8xf32>
    %669 = arith.mulf %667, %668 : vector<1x8xf32>
    %670 = arith.mulf %664, %664 : vector<1x8xf32>
    %671 = arith.subf %669, %670 : vector<1x8xf32>
    %cst_270 = arith.constant 0.000000e+00 : f32
    %672 = vector.broadcast %cst_270 : f32 to vector<1x8xf32>
    %673 = arith.maximumf %671, %672 : vector<1x8xf32>
    %674 = vector.broadcast %664 : vector<1x8xf32> to vector<16x8xf32>
    %675 = arith.subf %406, %674 : vector<16x8xf32>
    %cst_271 = arith.constant 9.99999974E-6 : f32
    %676 = vector.broadcast %cst_271 : f32 to vector<1x8xf32>
    %677 = arith.addf %673, %676 : vector<1x8xf32>
    %678 = math.rsqrt %677 : vector<1x8xf32>
    %679 = vector.broadcast %678 : vector<1x8xf32> to vector<16x8xf32>
    %680 = arith.mulf %675, %679 : vector<16x8xf32>
    %681 = vector.broadcast %658 : vector<1x8xf32> to vector<16x8xf32>
    %682 = arith.mulf %680, %681 : vector<16x8xf32>
    %683 = vector.broadcast %660 : vector<1x8xf32> to vector<16x8xf32>
    %684 = arith.addf %682, %683 : vector<16x8xf32>
    %c45 = arith.constant 45 : index
    %c0_272 = arith.constant 0 : index
    %c0_273 = arith.constant 0 : index
    %685 = vector.load %arg5[%c45, %c0_272, %c0_273] : memref<67x1x8xf32, #tpu.memory_space<vmem>>, vector<1x1x8xf32>
    %686 = vector.shape_cast %685 : vector<1x1x8xf32> to vector<1x8xf32>
    %c46 = arith.constant 46 : index
    %c0_274 = arith.constant 0 : index
    %c0_275 = arith.constant 0 : index
    %687 = vector.load %arg5[%c46, %c0_274, %c0_275] : memref<67x1x8xf32, #tpu.memory_space<vmem>>, vector<1x1x8xf32>
    %688 = vector.shape_cast %687 : vector<1x1x8xf32> to vector<1x8xf32>
    %cst_276 = arith.constant dense<0.000000e+00> : vector<8xf32>
    %689 = vector.multi_reduction <add>, %656, %cst_276 [0] : vector<16x8xf32> to vector<8xf32>
    %690 = vector.shape_cast %689 : vector<8xf32> to vector<1x8xf32>
    %cst_277 = arith.constant 6.250000e-02 : f32
    %691 = vector.broadcast %cst_277 : f32 to vector<1x8xf32>
    %692 = arith.mulf %690, %691 : vector<1x8xf32>
    %693 = arith.mulf %656, %656 : vector<16x8xf32>
    %cst_278 = arith.constant dense<0.000000e+00> : vector<8xf32>
    %694 = vector.multi_reduction <add>, %693, %cst_278 [0] : vector<16x8xf32> to vector<8xf32>
    %695 = vector.shape_cast %694 : vector<8xf32> to vector<1x8xf32>
    %cst_279 = arith.constant 6.250000e-02 : f32
    %696 = vector.broadcast %cst_279 : f32 to vector<1x8xf32>
    %697 = arith.mulf %695, %696 : vector<1x8xf32>
    %698 = arith.mulf %692, %692 : vector<1x8xf32>
    %699 = arith.subf %697, %698 : vector<1x8xf32>
    %cst_280 = arith.constant 0.000000e+00 : f32
    %700 = vector.broadcast %cst_280 : f32 to vector<1x8xf32>
    %701 = arith.maximumf %699, %700 : vector<1x8xf32>
    %702 = vector.broadcast %692 : vector<1x8xf32> to vector<16x8xf32>
    %703 = arith.subf %656, %702 : vector<16x8xf32>
    %cst_281 = arith.constant 9.99999974E-6 : f32
    %704 = vector.broadcast %cst_281 : f32 to vector<1x8xf32>
    %705 = arith.addf %701, %704 : vector<1x8xf32>
    %706 = math.rsqrt %705 : vector<1x8xf32>
    %707 = vector.broadcast %706 : vector<1x8xf32> to vector<16x8xf32>
    %708 = arith.mulf %703, %707 : vector<16x8xf32>
    %709 = vector.broadcast %686 : vector<1x8xf32> to vector<16x8xf32>
    %710 = arith.mulf %708, %709 : vector<16x8xf32>
    %711 = vector.broadcast %688 : vector<1x8xf32> to vector<16x8xf32>
    %712 = arith.addf %710, %711 : vector<16x8xf32>
    %c8_282 = arith.constant 8 : index
    %c0_283 = arith.constant 0 : index
    %c0_284 = arith.constant 0 : index
    %713 = vector.load %arg6[%c8_282, %c0_283, %c0_284] : memref<13x8x8xf32, #tpu.memory_space<vmem>>, vector<1x8x8xf32>
    %714 = vector.shape_cast %713 : vector<1x8x8xf32> to vector<8x8xf32>
    %cst_285 = arith.constant dense<0.000000e+00> : vector<16x8xf32>
    %715 = tpu.matmul %684, %714, %cst_285 {dimension_numbers = #tpu.dot_dimension_numbers<[1], [0], [0], [1], [0, 0, 1, 1], [], []>} : vector<16x8xf32>, vector<8x8xf32>, vector<16x8xf32> -> vector<16x8xf32>
    %c9_286 = arith.constant 9 : index
    %c0_287 = arith.constant 0 : index
    %c0_288 = arith.constant 0 : index
    %716 = vector.load %arg6[%c9_286, %c0_287, %c0_288] : memref<13x8x8xf32, #tpu.memory_space<vmem>>, vector<1x8x8xf32>
    %717 = vector.shape_cast %716 : vector<1x8x8xf32> to vector<8x8xf32>
    %cst_289 = arith.constant dense<0.000000e+00> : vector<16x8xf32>
    %718 = tpu.matmul %712, %717, %cst_289 {dimension_numbers = #tpu.dot_dimension_numbers<[1], [0], [0], [1], [0, 0, 1, 1], [], []>} : vector<16x8xf32>, vector<8x8xf32>, vector<16x8xf32> -> vector<16x8xf32>
    %719 = arith.addf %715, %718 : vector<16x8xf32>
    %c47 = arith.constant 47 : index
    %c0_290 = arith.constant 0 : index
    %c0_291 = arith.constant 0 : index
    %720 = vector.load %arg5[%c47, %c0_290, %c0_291] : memref<67x1x8xf32, #tpu.memory_space<vmem>>, vector<1x1x8xf32>
    %721 = vector.shape_cast %720 : vector<1x1x8xf32> to vector<1x8xf32>
    %722 = vector.broadcast %721 : vector<1x8xf32> to vector<16x8xf32>
    %723 = arith.addf %719, %722 : vector<16x8xf32>
    %c48 = arith.constant 48 : index
    %c0_292 = arith.constant 0 : index
    %c0_293 = arith.constant 0 : index
    %724 = vector.load %arg5[%c48, %c0_292, %c0_293] : memref<67x1x8xf32, #tpu.memory_space<vmem>>, vector<1x1x8xf32>
    %725 = vector.shape_cast %724 : vector<1x1x8xf32> to vector<1x8xf32>
    %c49 = arith.constant 49 : index
    %c0_294 = arith.constant 0 : index
    %c0_295 = arith.constant 0 : index
    %726 = vector.load %arg5[%c49, %c0_294, %c0_295] : memref<67x1x8xf32, #tpu.memory_space<vmem>>, vector<1x1x8xf32>
    %727 = vector.shape_cast %726 : vector<1x1x8xf32> to vector<1x8xf32>
    %cst_296 = arith.constant dense<0.000000e+00> : vector<8xf32>
    %728 = vector.multi_reduction <add>, %723, %cst_296 [0] : vector<16x8xf32> to vector<8xf32>
    %729 = vector.shape_cast %728 : vector<8xf32> to vector<1x8xf32>
    %cst_297 = arith.constant 6.250000e-02 : f32
    %730 = vector.broadcast %cst_297 : f32 to vector<1x8xf32>
    %731 = arith.mulf %729, %730 : vector<1x8xf32>
    %732 = arith.mulf %723, %723 : vector<16x8xf32>
    %cst_298 = arith.constant dense<0.000000e+00> : vector<8xf32>
    %733 = vector.multi_reduction <add>, %732, %cst_298 [0] : vector<16x8xf32> to vector<8xf32>
    %734 = vector.shape_cast %733 : vector<8xf32> to vector<1x8xf32>
    %cst_299 = arith.constant 6.250000e-02 : f32
    %735 = vector.broadcast %cst_299 : f32 to vector<1x8xf32>
    %736 = arith.mulf %734, %735 : vector<1x8xf32>
    %737 = arith.mulf %731, %731 : vector<1x8xf32>
    %738 = arith.subf %736, %737 : vector<1x8xf32>
    %cst_300 = arith.constant 0.000000e+00 : f32
    %739 = vector.broadcast %cst_300 : f32 to vector<1x8xf32>
    %740 = arith.maximumf %738, %739 : vector<1x8xf32>
    %741 = vector.broadcast %731 : vector<1x8xf32> to vector<16x8xf32>
    %742 = arith.subf %723, %741 : vector<16x8xf32>
    %cst_301 = arith.constant 9.99999974E-6 : f32
    %743 = vector.broadcast %cst_301 : f32 to vector<1x8xf32>
    %744 = arith.addf %740, %743 : vector<1x8xf32>
    %745 = math.rsqrt %744 : vector<1x8xf32>
    %746 = vector.broadcast %745 : vector<1x8xf32> to vector<16x8xf32>
    %747 = arith.mulf %742, %746 : vector<16x8xf32>
    %748 = vector.broadcast %725 : vector<1x8xf32> to vector<16x8xf32>
    %749 = arith.mulf %747, %748 : vector<16x8xf32>
    %750 = vector.broadcast %727 : vector<1x8xf32> to vector<16x8xf32>
    %751 = arith.addf %749, %750 : vector<16x8xf32>
    %cst_302 = arith.constant 2.000000e+01 : f32
    %752 = vector.broadcast %cst_302 : f32 to vector<16x8xf32>
    %753 = arith.cmpf ogt, %751, %752 : vector<16x8xf32>
    %cst_303 = arith.constant 2.000000e+01 : f32
    %754 = vector.broadcast %cst_303 : f32 to vector<16x8xf32>
    %755 = arith.minimumf %751, %754 : vector<16x8xf32>
    %756 = math.exp %755 : vector<16x8xf32>
    %757 = math.log1p %756 : vector<16x8xf32>
    %758 = arith.select %753, %751, %757 : vector<16x8xi1>, vector<16x8xf32>
    %759 = arith.addf %406, %758 : vector<16x8xf32>
    %c50 = arith.constant 50 : index
    %c0_304 = arith.constant 0 : index
    %c0_305 = arith.constant 0 : index
    %760 = vector.load %arg5[%c50, %c0_304, %c0_305] : memref<67x1x8xf32, #tpu.memory_space<vmem>>, vector<1x1x8xf32>
    %761 = vector.shape_cast %760 : vector<1x1x8xf32> to vector<1x8xf32>
    %c51 = arith.constant 51 : index
    %c0_306 = arith.constant 0 : index
    %c0_307 = arith.constant 0 : index
    %762 = vector.load %arg5[%c51, %c0_306, %c0_307] : memref<67x1x8xf32, #tpu.memory_space<vmem>>, vector<1x1x8xf32>
    %763 = vector.shape_cast %762 : vector<1x1x8xf32> to vector<1x8xf32>
    %cst_308 = arith.constant dense<0.000000e+00> : vector<8xf32>
    %764 = vector.multi_reduction <add>, %759, %cst_308 [0] : vector<16x8xf32> to vector<8xf32>
    %765 = vector.shape_cast %764 : vector<8xf32> to vector<1x8xf32>
    %cst_309 = arith.constant 6.250000e-02 : f32
    %766 = vector.broadcast %cst_309 : f32 to vector<1x8xf32>
    %767 = arith.mulf %765, %766 : vector<1x8xf32>
    %768 = arith.mulf %759, %759 : vector<16x8xf32>
    %cst_310 = arith.constant dense<0.000000e+00> : vector<8xf32>
    %769 = vector.multi_reduction <add>, %768, %cst_310 [0] : vector<16x8xf32> to vector<8xf32>
    %770 = vector.shape_cast %769 : vector<8xf32> to vector<1x8xf32>
    %cst_311 = arith.constant 6.250000e-02 : f32
    %771 = vector.broadcast %cst_311 : f32 to vector<1x8xf32>
    %772 = arith.mulf %770, %771 : vector<1x8xf32>
    %773 = arith.mulf %767, %767 : vector<1x8xf32>
    %774 = arith.subf %772, %773 : vector<1x8xf32>
    %cst_312 = arith.constant 0.000000e+00 : f32
    %775 = vector.broadcast %cst_312 : f32 to vector<1x8xf32>
    %776 = arith.maximumf %774, %775 : vector<1x8xf32>
    %777 = vector.broadcast %767 : vector<1x8xf32> to vector<16x8xf32>
    %778 = arith.subf %759, %777 : vector<16x8xf32>
    %cst_313 = arith.constant 9.99999974E-6 : f32
    %779 = vector.broadcast %cst_313 : f32 to vector<1x8xf32>
    %780 = arith.addf %776, %779 : vector<1x8xf32>
    %781 = math.rsqrt %780 : vector<1x8xf32>
    %782 = vector.broadcast %781 : vector<1x8xf32> to vector<16x8xf32>
    %783 = arith.mulf %778, %782 : vector<16x8xf32>
    %784 = vector.broadcast %761 : vector<1x8xf32> to vector<16x8xf32>
    %785 = arith.mulf %783, %784 : vector<16x8xf32>
    %786 = vector.broadcast %763 : vector<1x8xf32> to vector<16x8xf32>
    %787 = arith.addf %785, %786 : vector<16x8xf32>
    %cst_314 = arith.constant dense<0.000000e+00> : vector<32x8xf32>
    %788 = tpu.matmul %7, %787, %cst_314 {dimension_numbers = #tpu.dot_dimension_numbers<[1], [0], [0], [1], [0, 0, 1, 1], [], []>} : vector<32x16xf32>, vector<16x8xf32>, vector<32x8xf32> -> vector<32x8xf32>
    %cst_315 = arith.constant dense<0.000000e+00> : vector<32x8xf32>
    %789 = tpu.matmul %12, %787, %cst_315 {dimension_numbers = #tpu.dot_dimension_numbers<[1], [0], [0], [1], [0, 0, 1, 1], [], []>} : vector<32x16xf32>, vector<16x8xf32>, vector<32x8xf32> -> vector<32x8xf32>
    %c52 = arith.constant 52 : index
    %c0_316 = arith.constant 0 : index
    %c0_317 = arith.constant 0 : index
    %790 = vector.load %arg5[%c52, %c0_316, %c0_317] : memref<67x1x8xf32, #tpu.memory_space<vmem>>, vector<1x1x8xf32>
    %791 = vector.shape_cast %790 : vector<1x1x8xf32> to vector<1x8xf32>
    %c53 = arith.constant 53 : index
    %c0_318 = arith.constant 0 : index
    %c0_319 = arith.constant 0 : index
    %792 = vector.load %arg5[%c53, %c0_318, %c0_319] : memref<67x1x8xf32, #tpu.memory_space<vmem>>, vector<1x1x8xf32>
    %793 = vector.shape_cast %792 : vector<1x1x8xf32> to vector<1x8xf32>
    %cst_320 = arith.constant dense<0.000000e+00> : vector<8xf32>
    %794 = vector.multi_reduction <add>, %788, %cst_320 [0] : vector<32x8xf32> to vector<8xf32>
    %795 = vector.shape_cast %794 : vector<8xf32> to vector<1x8xf32>
    %cst_321 = arith.constant 3.125000e-02 : f32
    %796 = vector.broadcast %cst_321 : f32 to vector<1x8xf32>
    %797 = arith.mulf %795, %796 : vector<1x8xf32>
    %798 = arith.mulf %788, %788 : vector<32x8xf32>
    %cst_322 = arith.constant dense<0.000000e+00> : vector<8xf32>
    %799 = vector.multi_reduction <add>, %798, %cst_322 [0] : vector<32x8xf32> to vector<8xf32>
    %800 = vector.shape_cast %799 : vector<8xf32> to vector<1x8xf32>
    %cst_323 = arith.constant 3.125000e-02 : f32
    %801 = vector.broadcast %cst_323 : f32 to vector<1x8xf32>
    %802 = arith.mulf %800, %801 : vector<1x8xf32>
    %803 = arith.mulf %797, %797 : vector<1x8xf32>
    %804 = arith.subf %802, %803 : vector<1x8xf32>
    %cst_324 = arith.constant 0.000000e+00 : f32
    %805 = vector.broadcast %cst_324 : f32 to vector<1x8xf32>
    %806 = arith.maximumf %804, %805 : vector<1x8xf32>
    %807 = vector.broadcast %797 : vector<1x8xf32> to vector<32x8xf32>
    %808 = arith.subf %788, %807 : vector<32x8xf32>
    %cst_325 = arith.constant 9.99999974E-6 : f32
    %809 = vector.broadcast %cst_325 : f32 to vector<1x8xf32>
    %810 = arith.addf %806, %809 : vector<1x8xf32>
    %811 = math.rsqrt %810 : vector<1x8xf32>
    %812 = vector.broadcast %811 : vector<1x8xf32> to vector<32x8xf32>
    %813 = arith.mulf %808, %812 : vector<32x8xf32>
    %814 = vector.broadcast %791 : vector<1x8xf32> to vector<32x8xf32>
    %815 = arith.mulf %813, %814 : vector<32x8xf32>
    %816 = vector.broadcast %793 : vector<1x8xf32> to vector<32x8xf32>
    %817 = arith.addf %815, %816 : vector<32x8xf32>
    %c54 = arith.constant 54 : index
    %c0_326 = arith.constant 0 : index
    %c0_327 = arith.constant 0 : index
    %818 = vector.load %arg5[%c54, %c0_326, %c0_327] : memref<67x1x8xf32, #tpu.memory_space<vmem>>, vector<1x1x8xf32>
    %819 = vector.shape_cast %818 : vector<1x1x8xf32> to vector<1x8xf32>
    %c55 = arith.constant 55 : index
    %c0_328 = arith.constant 0 : index
    %c0_329 = arith.constant 0 : index
    %820 = vector.load %arg5[%c55, %c0_328, %c0_329] : memref<67x1x8xf32, #tpu.memory_space<vmem>>, vector<1x1x8xf32>
    %821 = vector.shape_cast %820 : vector<1x1x8xf32> to vector<1x8xf32>
    %cst_330 = arith.constant dense<0.000000e+00> : vector<8xf32>
    %822 = vector.multi_reduction <add>, %789, %cst_330 [0] : vector<32x8xf32> to vector<8xf32>
    %823 = vector.shape_cast %822 : vector<8xf32> to vector<1x8xf32>
    %cst_331 = arith.constant 3.125000e-02 : f32
    %824 = vector.broadcast %cst_331 : f32 to vector<1x8xf32>
    %825 = arith.mulf %823, %824 : vector<1x8xf32>
    %826 = arith.mulf %789, %789 : vector<32x8xf32>
    %cst_332 = arith.constant dense<0.000000e+00> : vector<8xf32>
    %827 = vector.multi_reduction <add>, %826, %cst_332 [0] : vector<32x8xf32> to vector<8xf32>
    %828 = vector.shape_cast %827 : vector<8xf32> to vector<1x8xf32>
    %cst_333 = arith.constant 3.125000e-02 : f32
    %829 = vector.broadcast %cst_333 : f32 to vector<1x8xf32>
    %830 = arith.mulf %828, %829 : vector<1x8xf32>
    %831 = arith.mulf %825, %825 : vector<1x8xf32>
    %832 = arith.subf %830, %831 : vector<1x8xf32>
    %cst_334 = arith.constant 0.000000e+00 : f32
    %833 = vector.broadcast %cst_334 : f32 to vector<1x8xf32>
    %834 = arith.maximumf %832, %833 : vector<1x8xf32>
    %835 = vector.broadcast %825 : vector<1x8xf32> to vector<32x8xf32>
    %836 = arith.subf %789, %835 : vector<32x8xf32>
    %cst_335 = arith.constant 9.99999974E-6 : f32
    %837 = vector.broadcast %cst_335 : f32 to vector<1x8xf32>
    %838 = arith.addf %834, %837 : vector<1x8xf32>
    %839 = math.rsqrt %838 : vector<1x8xf32>
    %840 = vector.broadcast %839 : vector<1x8xf32> to vector<32x8xf32>
    %841 = arith.mulf %836, %840 : vector<32x8xf32>
    %842 = vector.broadcast %819 : vector<1x8xf32> to vector<32x8xf32>
    %843 = arith.mulf %841, %842 : vector<32x8xf32>
    %844 = vector.broadcast %821 : vector<1x8xf32> to vector<32x8xf32>
    %845 = arith.addf %843, %844 : vector<32x8xf32>
    %c56 = arith.constant 56 : index
    %c0_336 = arith.constant 0 : index
    %c0_337 = arith.constant 0 : index
    %846 = vector.load %arg5[%c56, %c0_336, %c0_337] : memref<67x1x8xf32, #tpu.memory_space<vmem>>, vector<1x1x8xf32>
    %847 = vector.shape_cast %846 : vector<1x1x8xf32> to vector<1x8xf32>
    %c57 = arith.constant 57 : index
    %c0_338 = arith.constant 0 : index
    %c0_339 = arith.constant 0 : index
    %848 = vector.load %arg5[%c57, %c0_338, %c0_339] : memref<67x1x8xf32, #tpu.memory_space<vmem>>, vector<1x1x8xf32>
    %849 = vector.shape_cast %848 : vector<1x1x8xf32> to vector<1x8xf32>
    %cst_340 = arith.constant dense<0.000000e+00> : vector<8xf32>
    %850 = vector.multi_reduction <add>, %817, %cst_340 [0] : vector<32x8xf32> to vector<8xf32>
    %851 = vector.shape_cast %850 : vector<8xf32> to vector<1x8xf32>
    %cst_341 = arith.constant 3.125000e-02 : f32
    %852 = vector.broadcast %cst_341 : f32 to vector<1x8xf32>
    %853 = arith.mulf %851, %852 : vector<1x8xf32>
    %854 = arith.mulf %817, %817 : vector<32x8xf32>
    %cst_342 = arith.constant dense<0.000000e+00> : vector<8xf32>
    %855 = vector.multi_reduction <add>, %854, %cst_342 [0] : vector<32x8xf32> to vector<8xf32>
    %856 = vector.shape_cast %855 : vector<8xf32> to vector<1x8xf32>
    %cst_343 = arith.constant 3.125000e-02 : f32
    %857 = vector.broadcast %cst_343 : f32 to vector<1x8xf32>
    %858 = arith.mulf %856, %857 : vector<1x8xf32>
    %859 = arith.mulf %853, %853 : vector<1x8xf32>
    %860 = arith.subf %858, %859 : vector<1x8xf32>
    %cst_344 = arith.constant 0.000000e+00 : f32
    %861 = vector.broadcast %cst_344 : f32 to vector<1x8xf32>
    %862 = arith.maximumf %860, %861 : vector<1x8xf32>
    %863 = vector.broadcast %853 : vector<1x8xf32> to vector<32x8xf32>
    %864 = arith.subf %817, %863 : vector<32x8xf32>
    %cst_345 = arith.constant 9.99999974E-6 : f32
    %865 = vector.broadcast %cst_345 : f32 to vector<1x8xf32>
    %866 = arith.addf %862, %865 : vector<1x8xf32>
    %867 = math.rsqrt %866 : vector<1x8xf32>
    %868 = vector.broadcast %867 : vector<1x8xf32> to vector<32x8xf32>
    %869 = arith.mulf %864, %868 : vector<32x8xf32>
    %870 = vector.broadcast %847 : vector<1x8xf32> to vector<32x8xf32>
    %871 = arith.mulf %869, %870 : vector<32x8xf32>
    %872 = vector.broadcast %849 : vector<1x8xf32> to vector<32x8xf32>
    %873 = arith.addf %871, %872 : vector<32x8xf32>
    %c58 = arith.constant 58 : index
    %c0_346 = arith.constant 0 : index
    %c0_347 = arith.constant 0 : index
    %874 = vector.load %arg5[%c58, %c0_346, %c0_347] : memref<67x1x8xf32, #tpu.memory_space<vmem>>, vector<1x1x8xf32>
    %875 = vector.shape_cast %874 : vector<1x1x8xf32> to vector<1x8xf32>
    %c59 = arith.constant 59 : index
    %c0_348 = arith.constant 0 : index
    %c0_349 = arith.constant 0 : index
    %876 = vector.load %arg5[%c59, %c0_348, %c0_349] : memref<67x1x8xf32, #tpu.memory_space<vmem>>, vector<1x1x8xf32>
    %877 = vector.shape_cast %876 : vector<1x1x8xf32> to vector<1x8xf32>
    %cst_350 = arith.constant dense<0.000000e+00> : vector<8xf32>
    %878 = vector.multi_reduction <add>, %845, %cst_350 [0] : vector<32x8xf32> to vector<8xf32>
    %879 = vector.shape_cast %878 : vector<8xf32> to vector<1x8xf32>
    %cst_351 = arith.constant 3.125000e-02 : f32
    %880 = vector.broadcast %cst_351 : f32 to vector<1x8xf32>
    %881 = arith.mulf %879, %880 : vector<1x8xf32>
    %882 = arith.mulf %845, %845 : vector<32x8xf32>
    %cst_352 = arith.constant dense<0.000000e+00> : vector<8xf32>
    %883 = vector.multi_reduction <add>, %882, %cst_352 [0] : vector<32x8xf32> to vector<8xf32>
    %884 = vector.shape_cast %883 : vector<8xf32> to vector<1x8xf32>
    %cst_353 = arith.constant 3.125000e-02 : f32
    %885 = vector.broadcast %cst_353 : f32 to vector<1x8xf32>
    %886 = arith.mulf %884, %885 : vector<1x8xf32>
    %887 = arith.mulf %881, %881 : vector<1x8xf32>
    %888 = arith.subf %886, %887 : vector<1x8xf32>
    %cst_354 = arith.constant 0.000000e+00 : f32
    %889 = vector.broadcast %cst_354 : f32 to vector<1x8xf32>
    %890 = arith.maximumf %888, %889 : vector<1x8xf32>
    %891 = vector.broadcast %881 : vector<1x8xf32> to vector<32x8xf32>
    %892 = arith.subf %845, %891 : vector<32x8xf32>
    %cst_355 = arith.constant 9.99999974E-6 : f32
    %893 = vector.broadcast %cst_355 : f32 to vector<1x8xf32>
    %894 = arith.addf %890, %893 : vector<1x8xf32>
    %895 = math.rsqrt %894 : vector<1x8xf32>
    %896 = vector.broadcast %895 : vector<1x8xf32> to vector<32x8xf32>
    %897 = arith.mulf %892, %896 : vector<32x8xf32>
    %898 = vector.broadcast %875 : vector<1x8xf32> to vector<32x8xf32>
    %899 = arith.mulf %897, %898 : vector<32x8xf32>
    %900 = vector.broadcast %877 : vector<1x8xf32> to vector<32x8xf32>
    %901 = arith.addf %899, %900 : vector<32x8xf32>
    %c60 = arith.constant 60 : index
    %c0_356 = arith.constant 0 : index
    %c0_357 = arith.constant 0 : index
    %902 = vector.load %arg5[%c60, %c0_356, %c0_357] : memref<67x1x8xf32, #tpu.memory_space<vmem>>, vector<1x1x8xf32>
    %903 = vector.shape_cast %902 : vector<1x1x8xf32> to vector<1x8xf32>
    %c61 = arith.constant 61 : index
    %c0_358 = arith.constant 0 : index
    %c0_359 = arith.constant 0 : index
    %904 = vector.load %arg5[%c61, %c0_358, %c0_359] : memref<67x1x8xf32, #tpu.memory_space<vmem>>, vector<1x1x8xf32>
    %905 = vector.shape_cast %904 : vector<1x1x8xf32> to vector<1x8xf32>
    %cst_360 = arith.constant dense<0.000000e+00> : vector<8xf32>
    %906 = vector.multi_reduction <add>, %627, %cst_360 [0] : vector<32x8xf32> to vector<8xf32>
    %907 = vector.shape_cast %906 : vector<8xf32> to vector<1x8xf32>
    %cst_361 = arith.constant 3.125000e-02 : f32
    %908 = vector.broadcast %cst_361 : f32 to vector<1x8xf32>
    %909 = arith.mulf %907, %908 : vector<1x8xf32>
    %910 = arith.mulf %627, %627 : vector<32x8xf32>
    %cst_362 = arith.constant dense<0.000000e+00> : vector<8xf32>
    %911 = vector.multi_reduction <add>, %910, %cst_362 [0] : vector<32x8xf32> to vector<8xf32>
    %912 = vector.shape_cast %911 : vector<8xf32> to vector<1x8xf32>
    %cst_363 = arith.constant 3.125000e-02 : f32
    %913 = vector.broadcast %cst_363 : f32 to vector<1x8xf32>
    %914 = arith.mulf %912, %913 : vector<1x8xf32>
    %915 = arith.mulf %909, %909 : vector<1x8xf32>
    %916 = arith.subf %914, %915 : vector<1x8xf32>
    %cst_364 = arith.constant 0.000000e+00 : f32
    %917 = vector.broadcast %cst_364 : f32 to vector<1x8xf32>
    %918 = arith.maximumf %916, %917 : vector<1x8xf32>
    %919 = vector.broadcast %909 : vector<1x8xf32> to vector<32x8xf32>
    %920 = arith.subf %627, %919 : vector<32x8xf32>
    %cst_365 = arith.constant 9.99999974E-6 : f32
    %921 = vector.broadcast %cst_365 : f32 to vector<1x8xf32>
    %922 = arith.addf %918, %921 : vector<1x8xf32>
    %923 = math.rsqrt %922 : vector<1x8xf32>
    %924 = vector.broadcast %923 : vector<1x8xf32> to vector<32x8xf32>
    %925 = arith.mulf %920, %924 : vector<32x8xf32>
    %926 = vector.broadcast %903 : vector<1x8xf32> to vector<32x8xf32>
    %927 = arith.mulf %925, %926 : vector<32x8xf32>
    %928 = vector.broadcast %905 : vector<1x8xf32> to vector<32x8xf32>
    %929 = arith.addf %927, %928 : vector<32x8xf32>
    %c10_366 = arith.constant 10 : index
    %c0_367 = arith.constant 0 : index
    %c0_368 = arith.constant 0 : index
    %930 = vector.load %arg6[%c10_366, %c0_367, %c0_368] : memref<13x8x8xf32, #tpu.memory_space<vmem>>, vector<1x8x8xf32>
    %931 = vector.shape_cast %930 : vector<1x8x8xf32> to vector<8x8xf32>
    %cst_369 = arith.constant dense<0.000000e+00> : vector<32x8xf32>
    %932 = tpu.matmul %873, %931, %cst_369 {dimension_numbers = #tpu.dot_dimension_numbers<[1], [0], [0], [1], [0, 0, 1, 1], [], []>} : vector<32x8xf32>, vector<8x8xf32>, vector<32x8xf32> -> vector<32x8xf32>
    %c11_370 = arith.constant 11 : index
    %c0_371 = arith.constant 0 : index
    %c0_372 = arith.constant 0 : index
    %933 = vector.load %arg6[%c11_370, %c0_371, %c0_372] : memref<13x8x8xf32, #tpu.memory_space<vmem>>, vector<1x8x8xf32>
    %934 = vector.shape_cast %933 : vector<1x8x8xf32> to vector<8x8xf32>
    %cst_373 = arith.constant dense<0.000000e+00> : vector<32x8xf32>
    %935 = tpu.matmul %901, %934, %cst_373 {dimension_numbers = #tpu.dot_dimension_numbers<[1], [0], [0], [1], [0, 0, 1, 1], [], []>} : vector<32x8xf32>, vector<8x8xf32>, vector<32x8xf32> -> vector<32x8xf32>
    %936 = arith.addf %932, %935 : vector<32x8xf32>
    %c12_374 = arith.constant 12 : index
    %c0_375 = arith.constant 0 : index
    %c0_376 = arith.constant 0 : index
    %937 = vector.load %arg6[%c12_374, %c0_375, %c0_376] : memref<13x8x8xf32, #tpu.memory_space<vmem>>, vector<1x8x8xf32>
    %938 = vector.shape_cast %937 : vector<1x8x8xf32> to vector<8x8xf32>
    %cst_377 = arith.constant dense<0.000000e+00> : vector<32x8xf32>
    %939 = tpu.matmul %929, %938, %cst_377 {dimension_numbers = #tpu.dot_dimension_numbers<[1], [0], [0], [1], [0, 0, 1, 1], [], []>} : vector<32x8xf32>, vector<8x8xf32>, vector<32x8xf32> -> vector<32x8xf32>
    %940 = arith.addf %936, %939 : vector<32x8xf32>
    %c62 = arith.constant 62 : index
    %c0_378 = arith.constant 0 : index
    %c0_379 = arith.constant 0 : index
    %941 = vector.load %arg5[%c62, %c0_378, %c0_379] : memref<67x1x8xf32, #tpu.memory_space<vmem>>, vector<1x1x8xf32>
    %942 = vector.shape_cast %941 : vector<1x1x8xf32> to vector<1x8xf32>
    %943 = vector.broadcast %942 : vector<1x8xf32> to vector<32x8xf32>
    %944 = arith.addf %940, %943 : vector<32x8xf32>
    %c63 = arith.constant 63 : index
    %c0_380 = arith.constant 0 : index
    %c0_381 = arith.constant 0 : index
    %945 = vector.load %arg5[%c63, %c0_380, %c0_381] : memref<67x1x8xf32, #tpu.memory_space<vmem>>, vector<1x1x8xf32>
    %946 = vector.shape_cast %945 : vector<1x1x8xf32> to vector<1x8xf32>
    %c64 = arith.constant 64 : index
    %c0_382 = arith.constant 0 : index
    %c0_383 = arith.constant 0 : index
    %947 = vector.load %arg5[%c64, %c0_382, %c0_383] : memref<67x1x8xf32, #tpu.memory_space<vmem>>, vector<1x1x8xf32>
    %948 = vector.shape_cast %947 : vector<1x1x8xf32> to vector<1x8xf32>
    %cst_384 = arith.constant dense<0.000000e+00> : vector<8xf32>
    %949 = vector.multi_reduction <add>, %944, %cst_384 [0] : vector<32x8xf32> to vector<8xf32>
    %950 = vector.shape_cast %949 : vector<8xf32> to vector<1x8xf32>
    %cst_385 = arith.constant 3.125000e-02 : f32
    %951 = vector.broadcast %cst_385 : f32 to vector<1x8xf32>
    %952 = arith.mulf %950, %951 : vector<1x8xf32>
    %953 = arith.mulf %944, %944 : vector<32x8xf32>
    %cst_386 = arith.constant dense<0.000000e+00> : vector<8xf32>
    %954 = vector.multi_reduction <add>, %953, %cst_386 [0] : vector<32x8xf32> to vector<8xf32>
    %955 = vector.shape_cast %954 : vector<8xf32> to vector<1x8xf32>
    %cst_387 = arith.constant 3.125000e-02 : f32
    %956 = vector.broadcast %cst_387 : f32 to vector<1x8xf32>
    %957 = arith.mulf %955, %956 : vector<1x8xf32>
    %958 = arith.mulf %952, %952 : vector<1x8xf32>
    %959 = arith.subf %957, %958 : vector<1x8xf32>
    %cst_388 = arith.constant 0.000000e+00 : f32
    %960 = vector.broadcast %cst_388 : f32 to vector<1x8xf32>
    %961 = arith.maximumf %959, %960 : vector<1x8xf32>
    %962 = vector.broadcast %952 : vector<1x8xf32> to vector<32x8xf32>
    %963 = arith.subf %944, %962 : vector<32x8xf32>
    %cst_389 = arith.constant 9.99999974E-6 : f32
    %964 = vector.broadcast %cst_389 : f32 to vector<1x8xf32>
    %965 = arith.addf %961, %964 : vector<1x8xf32>
    %966 = math.rsqrt %965 : vector<1x8xf32>
    %967 = vector.broadcast %966 : vector<1x8xf32> to vector<32x8xf32>
    %968 = arith.mulf %963, %967 : vector<32x8xf32>
    %969 = vector.broadcast %946 : vector<1x8xf32> to vector<32x8xf32>
    %970 = arith.mulf %968, %969 : vector<32x8xf32>
    %971 = vector.broadcast %948 : vector<1x8xf32> to vector<32x8xf32>
    %972 = arith.addf %970, %971 : vector<32x8xf32>
    %cst_390 = arith.constant 2.000000e+01 : f32
    %973 = vector.broadcast %cst_390 : f32 to vector<32x8xf32>
    %974 = arith.cmpf ogt, %972, %973 : vector<32x8xf32>
    %cst_391 = arith.constant 2.000000e+01 : f32
    %975 = vector.broadcast %cst_391 : f32 to vector<32x8xf32>
    %976 = arith.minimumf %972, %975 : vector<32x8xf32>
    %977 = math.exp %976 : vector<32x8xf32>
    %978 = math.log1p %977 : vector<32x8xf32>
    %979 = arith.select %974, %972, %978 : vector<32x8xi1>, vector<32x8xf32>
    %980 = arith.addf %627, %979 : vector<32x8xf32>
    %c65 = arith.constant 65 : index
    %c0_392 = arith.constant 0 : index
    %c0_393 = arith.constant 0 : index
    %981 = vector.load %arg5[%c65, %c0_392, %c0_393] : memref<67x1x8xf32, #tpu.memory_space<vmem>>, vector<1x1x8xf32>
    %982 = vector.shape_cast %981 : vector<1x1x8xf32> to vector<1x8xf32>
    %c66 = arith.constant 66 : index
    %c0_394 = arith.constant 0 : index
    %c0_395 = arith.constant 0 : index
    %983 = vector.load %arg5[%c66, %c0_394, %c0_395] : memref<67x1x8xf32, #tpu.memory_space<vmem>>, vector<1x1x8xf32>
    %984 = vector.shape_cast %983 : vector<1x1x8xf32> to vector<1x8xf32>
    %cst_396 = arith.constant dense<0.000000e+00> : vector<8xf32>
    %985 = vector.multi_reduction <add>, %980, %cst_396 [0] : vector<32x8xf32> to vector<8xf32>
    %986 = vector.shape_cast %985 : vector<8xf32> to vector<1x8xf32>
    %cst_397 = arith.constant 3.125000e-02 : f32
    %987 = vector.broadcast %cst_397 : f32 to vector<1x8xf32>
    %988 = arith.mulf %986, %987 : vector<1x8xf32>
    %989 = arith.mulf %980, %980 : vector<32x8xf32>
    %cst_398 = arith.constant dense<0.000000e+00> : vector<8xf32>
    %990 = vector.multi_reduction <add>, %989, %cst_398 [0] : vector<32x8xf32> to vector<8xf32>
    %991 = vector.shape_cast %990 : vector<8xf32> to vector<1x8xf32>
    %cst_399 = arith.constant 3.125000e-02 : f32
    %992 = vector.broadcast %cst_399 : f32 to vector<1x8xf32>
    %993 = arith.mulf %991, %992 : vector<1x8xf32>
    %994 = arith.mulf %988, %988 : vector<1x8xf32>
    %995 = arith.subf %993, %994 : vector<1x8xf32>
    %cst_400 = arith.constant 0.000000e+00 : f32
    %996 = vector.broadcast %cst_400 : f32 to vector<1x8xf32>
    %997 = arith.maximumf %995, %996 : vector<1x8xf32>
    %998 = vector.broadcast %988 : vector<1x8xf32> to vector<32x8xf32>
    %999 = arith.subf %980, %998 : vector<32x8xf32>
    %cst_401 = arith.constant 9.99999974E-6 : f32
    %1000 = vector.broadcast %cst_401 : f32 to vector<1x8xf32>
    %1001 = arith.addf %997, %1000 : vector<1x8xf32>
    %1002 = math.rsqrt %1001 : vector<1x8xf32>
    %1003 = vector.broadcast %1002 : vector<1x8xf32> to vector<32x8xf32>
    %1004 = arith.mulf %999, %1003 : vector<32x8xf32>
    %1005 = vector.broadcast %982 : vector<1x8xf32> to vector<32x8xf32>
    %1006 = arith.mulf %1004, %1005 : vector<32x8xf32>
    %1007 = vector.broadcast %984 : vector<1x8xf32> to vector<32x8xf32>
    %1008 = arith.addf %1006, %1007 : vector<32x8xf32>
    %c0_402 = arith.constant 0 : index
    %c0_403 = arith.constant 0 : index
    %1009 = vector.load %arg7[%c0_402, %c0_403] : memref<32x8xf32, #tpu.memory_space<vmem>>, vector<32x8xf32>
    tpu.vector_store %arg7[%c0_402, %c0_403], %1008 {strides = array<i32>} : memref<32x8xf32, #tpu.memory_space<vmem>>, vector<32x8xf32>,
    return
  }
}

</mosaic_0001>

<llo_original>
// kernel: conv_layer_pallas.1
$region0: #{conv_layer_pallas.1}
  #allocation0 [shape = 'u32[]', space=smem, size = 0x4, offset = 0x4, fixed_abs, tag = 'smem constant byte address 0x4 - core index']
  #allocation1 [shape = 'u32[144,128]{1,0:T(1,128)}', space=vmem, size = 0x12000, scoped, tag = 'internal scratch']
  %s0 = inlined_call_operand.vmem [shape: s32[32,1], index: 0, kind: input, shape index: {}]
  %s1 = inlined_call_operand.vmem [shape: s32[32,1], index: 1, kind: input, shape index: {}]
  %s2 = inlined_call_operand.vmem [shape: s32[1,32], index: 2, kind: input, shape index: {}]
  %s3 = inlined_call_operand.vmem [shape: f32[16,8], index: 3, kind: input, shape index: {}]
  %s4 = inlined_call_operand.vmem [shape: f32[32,8], index: 4, kind: input, shape index: {}]
  %s5 = inlined_call_operand.vmem [shape: f32[67,1,8], index: 5, kind: input, shape index: {}]
  %s6 = inlined_call_operand.vmem [shape: f32[13,8,8], index: 6, kind: input, shape index: {}]
  %s7 = inlined_call_operand.vmem [shape: f32[32,8], index: 7, kind: output, shape index: {}]
  %s8 = sld [smem:[#allocation0]]
  $region38: #{conv_layer_pallas.1} parent=0
    _
  %s10 = ssub.s32 1, %s8
  %s11 = scalar_select 0, %s10, %s8
  // Predicated region
  $region2: #{conv_layer_pallas.1} parent=0 // pred_check
    _
  $region3: #{conv_layer_pallas.1} parent=0 // pred_check_branch
    %13 = sbr.rel (0) target = $region5
  $region4: #{conv_layer_pallas.1} parent=0 // pred_region
    _
  $region5: #{conv_layer_pallas.1} parent=0 // pred_fallthru
    _
  // Predicated region
  $region6: #{conv_layer_pallas.1} parent=0 // pred_check
    _
  $region7: #{conv_layer_pallas.1} parent=0 // pred_check_branch
    %15 = sbr.rel (0) target = $region9
  $region8: #{conv_layer_pallas.1} parent=0 // pred_region
    _
  $region9: #{conv_layer_pallas.1} parent=0 // pred_fallthru
    _
  // Predicated region
  $region10: #{conv_layer_pallas.1} parent=0 // pred_check
    _
  $region11: #{conv_layer_pallas.1} parent=0 // pred_check_branch
    %17 = sbr.rel (0) target = $region13
  $region12: #{conv_layer_pallas.1} parent=0 // pred_region
    _
  $region13: #{conv_layer_pallas.1} parent=0 // pred_fallthru
    _
  // Predicated region
  $region14: #{conv_layer_pallas.1} parent=0 // pred_check
    _
  $region15: #{conv_layer_pallas.1} parent=0 // pred_check_branch
    %19 = sbr.rel (0) target = $region17
  $region16: #{conv_layer_pallas.1} parent=0 // pred_region
    _
  $region17: #{conv_layer_pallas.1} parent=0 // pred_fallthru
    _
  // Predicated region
  $region18: #{conv_layer_pallas.1} parent=0 // pred_check
    _
  $region19: #{conv_layer_pallas.1} parent=0 // pred_check_branch
    %21 = sbr.rel (0) target = $region21
  $region20: #{conv_layer_pallas.1} parent=0 // pred_region
    _
  $region21: #{conv_layer_pallas.1} parent=0 // pred_fallthru
    _
  // Predicated region
  $region22: #{conv_layer_pallas.1} parent=0 // pred_check
    _
  $region23: #{conv_layer_pallas.1} parent=0 // pred_check_branch
    %23 = sbr.rel (0) target = $region25
  $region24: #{conv_layer_pallas.1} parent=0 // pred_region
    _
  $region25: #{conv_layer_pallas.1} parent=0 // pred_fallthru
    _
  // Predicated region
  $region26: #{conv_layer_pallas.1} parent=0 // pred_check
    _
  $region27: #{conv_layer_pallas.1} parent=0 // pred_check_branch
    %25 = sbr.rel (0) target = $region29
  $region28: #{conv_layer_pallas.1} parent=0 // pred_region
    _
  $region29: #{conv_layer_pallas.1} parent=0 // pred_fallthru
    _
  %v26 = vld [vmem:[%s3] sm:$0xff]
  %v27 = vld [vmem:[%s3 + $0x8] sm:$0xff]
  %v28 = vld [vmem:[%s4] sm:$0xff]
  %v29 = vld [vmem:[%s4 + $0x8] sm:$0xff]
  %v30 = vld [vmem:[%s4 + $0x10] sm:$0xff]
  %v31 = vld [vmem:[%s4 + $0x18] sm:$0xff]
  %v32 = vlaneseq
  %v33 = vand.u32 %v32, 127
  %v34 = vld [vmem:[%s0] sm:$0xff]
  %v35 = vld [vmem:[%s0 + $0x8] sm:$0xff]
  %v36 = vld [vmem:[%s0 + $0x10] sm:$0xff]
  %v37 = vld [vmem:[%s0 + $0x18] sm:$0xff]
  %38 = vset.pattern.permute.xlu0 0
  %39 = vperm.xlu0 %38, %v34
  %v40 = vpop.permute.xlu0 %39
  %41 = vset.pattern.permute.xlu0 0
  %42 = vperm.xlu0 %41, %v35
  %v43 = vpop.permute.xlu0 %42
  %44 = vset.pattern.permute.xlu0 0
  %45 = vperm.xlu0 %44, %v36
  %v46 = vpop.permute.xlu0 %45
  %47 = vset.pattern.permute.xlu0 0
  %48 = vperm.xlu0 %47, %v37
  %v49 = vpop.permute.xlu0 %48
  %vm50 = vcmp.eq.s32.totalorder %v33, %v40
  %vm51 = vcmp.eq.s32.totalorder %v33, %v43
  %vm52 = vcmp.eq.s32.totalorder %v33, %v46
  %vm53 = vcmp.eq.s32.totalorder %v33, %v49
  %v54 = vsel %vm50, 1, 0
  %v55 = vsel %vm51, 1, 0
  %v56 = vsel %vm52, 1, 0
  %v57 = vsel %vm53, 1, 0
  %v58 = vcvt.s32.f32 %v54
  %v59 = vcvt.s32.f32 %v55
  %v60 = vcvt.s32.f32 %v56
  %v61 = vcvt.s32.f32 %v57
  %v62 = vld [vmem:[%s1] sm:$0xff]
  %v63 = vld [vmem:[%s1 + $0x8] sm:$0xff]
  %v64 = vld [vmem:[%s1 + $0x10] sm:$0xff]
  %v65 = vld [vmem:[%s1 + $0x18] sm:$0xff]
  %66 = vset.pattern.permute.xlu0 0
  %67 = vperm.xlu0 %66, %v62
  %v68 = vpop.permute.xlu0 %67
  %69 = vset.pattern.permute.xlu0 0
  %70 = vperm.xlu0 %69, %v63
  %v71 = vpop.permute.xlu0 %70
  %72 = vset.pattern.permute.xlu0 0
  %73 = vperm.xlu0 %72, %v64
  %v74 = vpop.permute.xlu0 %73
  %75 = vset.pattern.permute.xlu0 0
  %76 = vperm.xlu0 %75, %v65
  %v77 = vpop.permute.xlu0 %76
  %vm78 = vcmp.eq.s32.totalorder %v33, %v68
  %vm79 = vcmp.eq.s32.totalorder %v33, %v71
  %vm80 = vcmp.eq.s32.totalorder %v33, %v74
  %vm81 = vcmp.eq.s32.totalorder %v33, %v77
  %v82 = vsel %vm78, 1, 0
  %v83 = vsel %vm79, 1, 0
  %v84 = vsel %vm80, 1, 0
  %v85 = vsel %vm81, 1, 0
  %v86 = vcvt.s32.f32 %v82
  %v87 = vcvt.s32.f32 %v83
  %v88 = vcvt.s32.f32 %v84
  %v89 = vcvt.s32.f32 %v85
  %v90 = vlaneseq
  %v91 = vshrl.u32 %v90, 7
  %v92 = vadd.s32 %v91, 8
  %v93 = vld [vmem:[%s2] sm:$0x1]
  %v94 = vlaneseq
  %v95 = vshrl.u32 %v94, 7
  %v96 = vsub.s32 0, %v95
  %v97 = vrot.slane %v93, %v96
  %vm98 = vcmp.eq.s32.totalorder %v91, %v97
  %vm99 = vcmp.eq.s32.totalorder %v92, %v97
  %v100 = vsel %vm98, 1, 0
  %v101 = vsel %vm99, 1, 0
  %v102 = vcvt.s32.f32 %v100
  %v103 = vcvt.s32.f32 %v101
  %vm104 = vcmask 261120
  %v106 = vsel %vm104, %v102, 0
  %v109 = vsel %vm104, %v103, 0
  %111 = vmatprep.subr.mxu0 0.0
  %112 = vmatpush1.msra.mxu0 0.0
  %113 = vmatprep.subr.mxu0 0.0
  %114 = vmatpush1.msra.mxu0 0.0
  %115 = vmatprep.subr.mxu0 0.0
  %116 = vmatpush1.msra.mxu0 0.0
  %117 = vmatprep.subr.mxu0 0.0
  %118 = vmatpush1.msra.mxu0 0.0
  %119 = vmatprep.subr.mxu0 0.0
  %120 = vmatpush1.msra.mxu0 0.0
  %121 = vmatprep.subr.mxu0 0.0
  %122 = vmatpush1.msra.mxu0 0.0
  %123 = vmatprep.subr.mxu0 0.0
  %124 = vmatpush1.msra.mxu0 0.0
  %125 = vmatprep.subr.mxu0 0.0
  %126 = vmatpush1.msra.mxu0 0.0
  %127 = vmatprep.subr.mxu0 0.0
  %128 = vmatpush1.msra.mxu0 0.0
  %129 = vmatprep.subr.mxu0 0.0
  %130 = vmatpush1.msra.mxu0 0.0
  %131 = vmatprep.subr.mxu0 0.0
  %132 = vmatpush1.msra.mxu0 0.0
  %133 = vmatprep.subr.mxu0 0.0
  %134 = vmatpush1.msra.mxu0 0.0
  %135 = vmatprep.subr.mxu0 0.0
  %136 = vmatpush1.msra.mxu0 1.0
  %137 = vmatprep.subr.mxu0 0.0
  %138 = vmatpush1.msra.mxu0 1.0
  %139 = vmatprep.subr.mxu0 0.0
  %140 = vmatpush1.msra.mxu0 1.0
  %141 = vmatprep.subr.mxu0 0.0
  %142 = vmatpush1.msra.mxu0 1.0
  %143 = vmatprep.subr.mxu0 0.0
  %144 = vmatpush2.msra.mxu0 0.0
  %145 = vmatprep.subr.mxu0 0.0
  %146 = vmatpush2.msra.mxu0 0.0
  %147 = vmatprep.subr.mxu0 0.0
  %148 = vmatpush2.msra.mxu0 0.0
  %149 = vmatprep.subr.mxu0 0.0
  %150 = vmatpush2.msra.mxu0 0.0
  %151 = vmatprep.subr.mxu0 0.0
  %152 = vmatpush2.msra.mxu0 0.0
  %153 = vmatprep.subr.mxu0 0.0
  %154 = vmatpush2.msra.mxu0 0.0
  %155 = vmatprep.subr.mxu0 0.0
  %156 = vmatpush2.msra.mxu0 0.0
  %157 = vmatprep.subr.mxu0 0.0
  %158 = vmatpush2.msra.mxu0 0.0
  %159 = vmatprep.subr.mxu0 0.0
  %160 = vmatpush2.msra.mxu0 0.0
  %161 = vmatprep.subr.mxu0 0.0
  %162 = vmatpush2.msra.mxu0 0.0
  %163 = vmatprep.subr.mxu0 0.0
  %164 = vmatpush2.msra.mxu0 0.0
  %165 = vmatprep.subr.mxu0 0.0
  %166 = vmatpush2.msra.mxu0 0.0
  %167 = vmatprep.subr.mxu0 0.0
  %168 = vmatpush2.msra.mxu0 0.0
  %169 = vmatprep.subr.mxu0 0.0
  %170 = vmatpush2.msra.mxu0 0.0
  %171 = vmatprep.subr.mxu0 0.0
  %172 = vmatpush2.msra.mxu0 0.0
  %173 = vmatprep.subr.mxu0 0.0
  %174 = vmatpush2.msra.mxu0 0.0
  %175 = vmatprep.mubr.f32.mxu0 0.0
  %176 = vmatmul.mubr.f32.gmra.mxu0 %v106
  %v177 = vpop.f32.mrf.mxu0
  %v178 = vadd.f32 0.0, %v177
  %v179 = vpop.f32.mrf.mxu0
  %180 = vmatprep.mubr.f32.mxu0 0.0
  %181 = vmatmul.mubr.f32.gmra.mxu0 %v109
  %v182 = vpop.f32.mrf.mxu0
  %v183 = vadd.f32 0.0, %v182
  %v184 = vpop.f32.mrf.mxu0
  %185 = vdwg.mxu0
  %v186 = vmax.f32 %v178, 1.0
  %v187 = vmax.f32 %v183, 1.0
  %v188 = vrcp.pop %v186
  %v189 = vrcp.pop %v187
  %191 = vset.pattern.permute.xlu0 0
  %192 = vperm.xlu0 %191, %v188
  %v193 = vpop.permute.xlu0 %192
  %196 = vset.pattern.permute.xlu0 0
  %197 = vperm.xlu0 %196, %v189
  %v198 = vpop.permute.xlu0 %197
  %v200 = vmul.f32 %v102, %v193
  %v201 = vmul.f32 %v103, %v198
  %vm202 = vcmask 130048
  %v204 = vsel %vm202, %v58, 0
  %v207 = vsel %vm202, %v59, 0
  %v210 = vsel %vm202, %v60, 0
  %v213 = vsel %vm202, %v61, 0
  %215 = vmatprep.subr.mxu0 0.0
  %216 = vmatpush1.msra.mxu0 0.0
  %217 = vmatprep.subr.mxu0 0.0
  %218 = vmatpush1.msra.mxu0 0.0
  %219 = vmatprep.subr.mxu0 0.0
  %220 = vmatpush1.msra.mxu0 0.0
  %221 = vmatprep.subr.mxu0 0.0
  %222 = vmatpush1.msra.mxu0 0.0
  %223 = vmatprep.subr.mxu0 0.0
  %224 = vmatpush1.msra.mxu0 0.0
  %225 = vmatprep.subr.mxu0 0.0
  %226 = vmatpush1.msra.mxu0 0.0
  %227 = vmatprep.subr.mxu0 0.0
  %228 = vmatpush1.msra.mxu0 0.0
  %229 = vmatprep.subr.mxu0 0.0
  %230 = vmatpush1.msra.mxu0 0.0
  %231 = vmatprep.subr.mxu0 0.0
  %232 = vmatpush1.msra.mxu0 0.0
  %233 = vmatprep.subr.mxu0 0.0
  %234 = vmatpush1.msra.mxu0 0.0
  %235 = vmatprep.subr.mxu0 0.0
  %236 = vmatpush1.msra.mxu0 0.0
  %237 = vmatprep.subr.mxu0 0.0
  %238 = vmatpush1.msra.mxu0 0.0
  %239 = vmatprep.subr.mxu0 0.0
  %240 = vmatpush1.msra.mxu0 0.0
  %241 = vmatprep.subr.mxu0 0.0
  %242 = vmatpush1.msra.mxu0 0.0
  %243 = vmatprep.subr.mxu0 0.0
  %244 = vmatpush1.msra.mxu0 %v27
  %245 = vmatprep.subr.mxu0 0.0
  %246 = vmatpush1.msra.mxu0 %v26
  %247 = vmatprep.subr.mxu0 0.0
  %248 = vmatpush2.msra.mxu0 0.0
  %249 = vmatprep.subr.mxu0 0.0
  %250 = vmatpush2.msra.mxu0 0.0
  %251 = vmatprep.subr.mxu0 0.0
  %252 = vmatpush2.msra.mxu0 0.0
  %253 = vmatprep.subr.mxu0 0.0
  %254 = vmatpush2.msra.mxu0 0.0
  %255 = vmatprep.subr.mxu0 0.0
  %256 = vmatpush2.msra.mxu0 0.0
  %257 = vmatprep.subr.mxu0 0.0
  %258 = vmatpush2.msra.mxu0 0.0
  %259 = vmatprep.subr.mxu0 0.0
  %260 = vmatpush2.msra.mxu0 0.0
  %261 = vmatprep.subr.mxu0 0.0
  %262 = vmatpush2.msra.mxu0 0.0
  %263 = vmatprep.subr.mxu0 0.0
  %264 = vmatpush2.msra.mxu0 0.0
  %265 = vmatprep.subr.mxu0 0.0
  %266 = vmatpush2.msra.mxu0 0.0
  %267 = vmatprep.subr.mxu0 0.0
  %268 = vmatpush2.msra.mxu0 0.0
  %269 = vmatprep.subr.mxu0 0.0
  %270 = vmatpush2.msra.mxu0 0.0
  %271 = vmatprep.subr.mxu0 0.0
  %272 = vmatpush2.msra.mxu0 0.0
  %273 = vmatprep.subr.mxu0 0.0
  %274 = vmatpush2.msra.mxu0 0.0
  %275 = vmatprep.subr.mxu0 0.0
  %276 = vmatpush2.msra.mxu0 0.0
  %277 = vmatprep.subr.mxu0 0.0
  %278 = vmatpush2.msra.mxu0 0.0
  %279 = vmatprep.mubr.f32.mxu0 0.0
  %280 = vmatmul.mubr.f32.gmra.mxu0 %v204
  %v281 = vpop.f32.mrf.mxu0
  %v282 = vadd.f32 0.0, %v281
  %v283 = vpop.f32.mrf.mxu0
  %284 = vmatprep.mubr.f32.mxu0 0.0
  %285 = vmatmul.mubr.f32.gmra.mxu0 %v207
  %v286 = vpop.f32.mrf.mxu0
  %v287 = vadd.f32 0.0, %v286
  %v288 = vpop.f32.mrf.mxu0
  %289 = vmatprep.mubr.f32.mxu0 0.0
  %290 = vmatmul.mubr.f32.gmra.mxu0 %v210
  %v291 = vpop.f32.mrf.mxu0
  %v292 = vadd.f32 0.0, %v291
  %v293 = vpop.f32.mrf.mxu0
  %294 = vmatprep.mubr.f32.mxu0 0.0
  %295 = vmatmul.mubr.f32.gmra.mxu0 %v213
  %v296 = vpop.f32.mrf.mxu0
  %v297 = vadd.f32 0.0, %v296
  %v298 = vpop.f32.mrf.mxu0
  %299 = vdwg.mxu0
  %v301 = vsel %vm202, %v86, 0
  %v304 = vsel %vm202, %v87, 0
  %v307 = vsel %vm202, %v88, 0
  %v310 = vsel %vm202, %v89, 0
  %312 = vmatprep.subr.mxu0 0.0
  %313 = vmatpush1.msra.mxu0 0.0
  %314 = vmatprep.subr.mxu0 0.0
  %315 = vmatpush1.msra.mxu0 0.0
  %316 = vmatprep.subr.mxu0 0.0
  %317 = vmatpush1.msra.mxu0 0.0
  %318 = vmatprep.subr.mxu0 0.0
  %319 = vmatpush1.msra.mxu0 0.0
  %320 = vmatprep.subr.mxu0 0.0
  %321 = vmatpush1.msra.mxu0 0.0
  %322 = vmatprep.subr.mxu0 0.0
  %323 = vmatpush1.msra.mxu0 0.0
  %324 = vmatprep.subr.mxu0 0.0
  %325 = vmatpush1.msra.mxu0 0.0
  %326 = vmatprep.subr.mxu0 0.0
  %327 = vmatpush1.msra.mxu0 0.0
  %328 = vmatprep.subr.mxu0 0.0
  %329 = vmatpush1.msra.mxu0 0.0
  %330 = vmatprep.subr.mxu0 0.0
  %331 = vmatpush1.msra.mxu0 0.0
  %332 = vmatprep.subr.mxu0 0.0
  %333 = vmatpush1.msra.mxu0 0.0
  %334 = vmatprep.subr.mxu0 0.0
  %335 = vmatpush1.msra.mxu0 0.0
  %336 = vmatprep.subr.mxu0 0.0
  %337 = vmatpush1.msra.mxu0 0.0
  %338 = vmatprep.subr.mxu0 0.0
  %339 = vmatpush1.msra.mxu0 0.0
  %340 = vmatprep.subr.mxu0 0.0
  %341 = vmatpush1.msra.mxu0 %v27
  %342 = vmatprep.subr.mxu0 0.0
  %343 = vmatpush1.msra.mxu0 %v26
  %344 = vmatprep.subr.mxu0 0.0
  %345 = vmatpush2.msra.mxu0 0.0
  %346 = vmatprep.subr.mxu0 0.0
  %347 = vmatpush2.msra.mxu0 0.0
  %348 = vmatprep.subr.mxu0 0.0
  %349 = vmatpush2.msra.mxu0 0.0
  %350 = vmatprep.subr.mxu0 0.0
  %351 = vmatpush2.msra.mxu0 0.0
  %352 = vmatprep.subr.mxu0 0.0
  %353 = vmatpush2.msra.mxu0 0.0
  %354 = vmatprep.subr.mxu0 0.0
  %355 = vmatpush2.msra.mxu0 0.0
  %356 = vmatprep.subr.mxu0 0.0
  %357 = vmatpush2.msra.mxu0 0.0
  %358 = vmatprep.subr.mxu0 0.0
  %359 = vmatpush2.msra.mxu0 0.0
  %360 = vmatprep.subr.mxu0 0.0
  %361 = vmatpush2.msra.mxu0 0.0
  %362 = vmatprep.subr.mxu0 0.0
  %363 = vmatpush2.msra.mxu0 0.0
  %364 = vmatprep.subr.mxu0 0.0
  %365 = vmatpush2.msra.mxu0 0.0
  %366 = vmatprep.subr.mxu0 0.0
  %367 = vmatpush2.msra.mxu0 0.0
  %368 = vmatprep.subr.mxu0 0.0
  %369 = vmatpush2.msra.mxu0 0.0
  %370 = vmatprep.subr.mxu0 0.0
  %371 = vmatpush2.msra.mxu0 0.0
  %372 = vmatprep.subr.mxu0 0.0
  %373 = vmatpush2.msra.mxu0 0.0
  %374 = vmatprep.subr.mxu0 0.0
  %375 = vmatpush2.msra.mxu0 0.0
  %376 = vmatprep.mubr.f32.mxu0 0.0
  %377 = vmatmul.mubr.f32.gmra.mxu0 %v301
  %v378 = vpop.f32.mrf.mxu0
  %v379 = vadd.f32 0.0, %v378
  %v380 = vpop.f32.mrf.mxu0
  %381 = vmatprep.mubr.f32.mxu0 0.0
  %382 = vmatmul.mubr.f32.gmra.mxu0 %v304
  %v383 = vpop.f32.mrf.mxu0
  %v384 = vadd.f32 0.0, %v383
  %v385 = vpop.f32.mrf.mxu0
  %386 = vmatprep.mubr.f32.mxu0 0.0
  %387 = vmatmul.mubr.f32.gmra.mxu0 %v307
  %v388 = vpop.f32.mrf.mxu0
  %v389 = vadd.f32 0.0, %v388
  %v390 = vpop.f32.mrf.mxu0
  %391 = vmatprep.mubr.f32.mxu0 0.0
  %392 = vmatmul.mubr.f32.gmra.mxu0 %v310
  %v393 = vpop.f32.mrf.mxu0
  %v394 = vadd.f32 0.0, %v393
  %v395 = vpop.f32.mrf.mxu0
  %396 = vdwg.mxu0
  %v397 = vld [vmem:[%s5] sm:$0x1]
  %s398 = scalar_lea.vmem %s5, 1
  %v399 = vld [vmem:[%s398] sm:$0x1]
  %vm400 = vcmask 64512
  %v401 = vsel %vm400, %v282, 0.0
  %v402 = vsel %vm400, %v287, 0.0
  %v403 = vadd.f32 %v401, %v402
  %v404 = vsel %vm400, %v292, 0.0
  %v405 = vadd.f32 %v403, %v404
  %v406 = vsel %vm400, %v297, 0.0
  %v407 = vadd.f32 %v405, %v406
  %v408 = vrot.slane %v407, 4
  %v409 = vadd.f32 %v407, %v408
  %v410 = vrot.slane %v409, 2
  %v411 = vadd.f32 %v409, %v410
  %v412 = vrot.slane %v411, 1
  %v413 = vadd.f32 %v411, %v412
  %v414 = vmul.f32 %v413, 0.03125
  %v415 = vmul.f32 %v282, %v282
  %v416 = vmul.f32 %v287, %v287
  %v417 = vmul.f32 %v292, %v292
  %v418 = vmul.f32 %v297, %v297
  %v419 = vsel %vm400, %v415, 0.0
  %v420 = vsel %vm400, %v416, 0.0
  %v421 = vadd.f32 %v419, %v420
  %v422 = vsel %vm400, %v417, 0.0
  %v423 = vadd.f32 %v421, %v422
  %v424 = vsel %vm400, %v418, 0.0
  %v425 = vadd.f32 %v423, %v424
  %v426 = vrot.slane %v425, 4
  %v427 = vadd.f32 %v425, %v426
  %v428 = vrot.slane %v427, 2
  %v429 = vadd.f32 %v427, %v428
  %v430 = vrot.slane %v429, 1
  %v431 = vadd.f32 %v429, %v430
  %v432 = vmul.f32 %v431, 0.03125
  %v433 = vmul.f32 %v414, %v414
  %v434 = vsub.f32 %v432, %v433
  %v435 = vmax.f32 %v434, 0.0
  %v436 = vsub.f32 %v282, %v414
  %v437 = vsub.f32 %v287, %v414
  %v438 = vsub.f32 %v292, %v414
  %v439 = vsub.f32 %v297, %v414
  %v440 = vadd.f32 %v435, 1e-05
  %v441 = vrsqrt.pop %v440
  %v442 = vmul.f32 %v436, %v441
  %v443 = vmul.f32 %v437, %v441
  %v444 = vmul.f32 %v438, %v441
  %v445 = vmul.f32 %v439, %v441
  %v447 = vlaneseq
  %v448 = vshrl.u32 %v447, 7
  %v449 = vsub.s32 0, %v448
  %v450 = vrot.slane %v397, %v449
  %v452 = vmul.f32 %v442, %v450
  %v453 = vmul.f32 %v443, %v450
  %v454 = vmul.f32 %v444, %v450
  %v455 = vmul.f32 %v445, %v450
  %v457 = vlaneseq
  %v458 = vshrl.u32 %v457, 7
  %v459 = vsub.s32 0, %v458
  %v460 = vrot.slane %v399, %v459
  %v462 = vadd.f32 %v452, %v460
  %v463 = vadd.f32 %v453, %v460
  %v464 = vadd.f32 %v454, %v460
  %v465 = vadd.f32 %v455, %v460
  %s466 = scalar_lea.vmem %s5, 2
  %v467 = vld [vmem:[%s466] sm:$0x1]
  %s468 = scalar_lea.vmem %s5, 3
  %v469 = vld [vmem:[%s468] sm:$0x1]
  %v470 = vsel %vm400, %v379, 0.0
  %v471 = vsel %vm400, %v384, 0.0
  %v472 = vadd.f32 %v470, %v471
  %v473 = vsel %vm400, %v389, 0.0
  %v474 = vadd.f32 %v472, %v473
  %v475 = vsel %vm400, %v394, 0.0
  %v476 = vadd.f32 %v474, %v475
  %v477 = vrot.slane %v476, 4
  %v478 = vadd.f32 %v476, %v477
  %v479 = vrot.slane %v478, 2
  %v480 = vadd.f32 %v478, %v479
  %v481 = vrot.slane %v480, 1
  %v482 = vadd.f32 %v480, %v481
  %v483 = vmul.f32 %v482, 0.03125
  %v484 = vmul.f32 %v379, %v379
  %v485 = vmul.f32 %v384, %v384
  %v486 = vmul.f32 %v389, %v389
  %v487 = vmul.f32 %v394, %v394
  %v488 = vsel %vm400, %v484, 0.0
  %v489 = vsel %vm400, %v485, 0.0
  %v490 = vadd.f32 %v488, %v489
  %v491 = vsel %vm400, %v486, 0.0
  %v492 = vadd.f32 %v490, %v491
  %v493 = vsel %vm400, %v487, 0.0
  %v494 = vadd.f32 %v492, %v493
  %v495 = vrot.slane %v494, 4
  %v496 = vadd.f32 %v494, %v495
  %v497 = vrot.slane %v496, 2
  %v498 = vadd.f32 %v496, %v497
  %v499 = vrot.slane %v498, 1
  %v500 = vadd.f32 %v498, %v499
  %v501 = vmul.f32 %v500, 0.03125
  %v502 = vmul.f32 %v483, %v483
  %v503 = vsub.f32 %v501, %v502
  %v504 = vmax.f32 %v503, 0.0
  %v505 = vsub.f32 %v379, %v483
  %v506 = vsub.f32 %v384, %v483
  %v507 = vsub.f32 %v389, %v483
  %v508 = vsub.f32 %v394, %v483
  %v509 = vadd.f32 %v504, 1e-05
  %v510 = vrsqrt.pop %v509
  %v511 = vmul.f32 %v505, %v510
  %v512 = vmul.f32 %v506, %v510
  %v513 = vmul.f32 %v507, %v510
  %v514 = vmul.f32 %v508, %v510
  %v516 = vlaneseq
  %v517 = vshrl.u32 %v516, 7
  %v518 = vsub.s32 0, %v517
  %v519 = vrot.slane %v467, %v518
  %v521 = vmul.f32 %v511, %v519
  %v522 = vmul.f32 %v512, %v519
  %v523 = vmul.f32 %v513, %v519
  %v524 = vmul.f32 %v514, %v519
  %v526 = vlaneseq
  %v527 = vshrl.u32 %v526, 7
  %v528 = vsub.s32 0, %v527
  %v529 = vrot.slane %v469, %v528
  %v531 = vadd.f32 %v521, %v529
  %v532 = vadd.f32 %v522, %v529
  %v533 = vadd.f32 %v523, %v529
  %v534 = vadd.f32 %v524, %v529
  %s535 = scalar_lea.vmem %s5, 4
  %v536 = vld [vmem:[%s535] sm:$0x1]
  %s537 = scalar_lea.vmem %s5, 5
  %v538 = vld [vmem:[%s537] sm:$0x1]
  %v539 = vsel %vm400, %v462, 0.0
  %v540 = vsel %vm400, %v463, 0.0
  %v541 = vadd.f32 %v539, %v540
  %v542 = vsel %vm400, %v464, 0.0
  %v543 = vadd.f32 %v541, %v542
  %v544 = vsel %vm400, %v465, 0.0
  %v545 = vadd.f32 %v543, %v544
  %v546 = vrot.slane %v545, 4
  %v547 = vadd.f32 %v545, %v546
  %v548 = vrot.slane %v547, 2
  %v549 = vadd.f32 %v547, %v548
  %v550 = vrot.slane %v549, 1
  %v551 = vadd.f32 %v549, %v550
  %v552 = vmul.f32 %v551, 0.03125
  %v553 = vmul.f32 %v462, %v462
  %v554 = vmul.f32 %v463, %v463
  %v555 = vmul.f32 %v464, %v464
  %v556 = vmul.f32 %v465, %v465
  %v557 = vsel %vm400, %v553, 0.0
  %v558 = vsel %vm400, %v554, 0.0
  %v559 = vadd.f32 %v557, %v558
  %v560 = vsel %vm400, %v555, 0.0
  %v561 = vadd.f32 %v559, %v560
  %v562 = vsel %vm400, %v556, 0.0
  %v563 = vadd.f32 %v561, %v562
  %v564 = vrot.slane %v563, 4
  %v565 = vadd.f32 %v563, %v564
  %v566 = vrot.slane %v565, 2
  %v567 = vadd.f32 %v565, %v566
  %v568 = vrot.slane %v567, 1
  %v569 = vadd.f32 %v567, %v568
  %v570 = vmul.f32 %v569, 0.03125
  %v571 = vmul.f32 %v552, %v552
  %v572 = vsub.f32 %v570, %v571
  %v573 = vmax.f32 %v572, 0.0
  %v574 = vsub.f32 %v462, %v552
  %v575 = vsub.f32 %v463, %v552
  %v576 = vsub.f32 %v464, %v552
  %v577 = vsub.f32 %v465, %v552
  %v578 = vadd.f32 %v573, 1e-05
  %v579 = vrsqrt.pop %v578
  %v580 = vmul.f32 %v574, %v579
  %v581 = vmul.f32 %v575, %v579
  %v582 = vmul.f32 %v576, %v579
  %v583 = vmul.f32 %v577, %v579
  %v585 = vlaneseq
  %v586 = vshrl.u32 %v585, 7
  %v587 = vsub.s32 0, %v586
  %v588 = vrot.slane %v536, %v587
  %v590 = vmul.f32 %v580, %v588
  %v591 = vmul.f32 %v581, %v588
  %v592 = vmul.f32 %v582, %v588
  %v593 = vmul.f32 %v583, %v588
  %v595 = vlaneseq
  %v596 = vshrl.u32 %v595, 7
  %v597 = vsub.s32 0, %v596
  %v598 = vrot.slane %v538, %v597
  %v600 = vadd.f32 %v590, %v598
  %v601 = vadd.f32 %v591, %v598
  %v602 = vadd.f32 %v592, %v598
  %v603 = vadd.f32 %v593, %v598
  %s604 = scalar_lea.vmem %s5, 6
  %v605 = vld [vmem:[%s604] sm:$0x1]
  %s606 = scalar_lea.vmem %s5, 7
  %v607 = vld [vmem:[%s606] sm:$0x1]
  %v608 = vsel %vm400, %v531, 0.0
  %v609 = vsel %vm400, %v532, 0.0
  %v610 = vadd.f32 %v608, %v609
  %v611 = vsel %vm400, %v533, 0.0
  %v612 = vadd.f32 %v610, %v611
  %v613 = vsel %vm400, %v534, 0.0
  %v614 = vadd.f32 %v612, %v613
  %v615 = vrot.slane %v614, 4
  %v616 = vadd.f32 %v614, %v615
  %v617 = vrot.slane %v616, 2
  %v618 = vadd.f32 %v616, %v617
  %v619 = vrot.slane %v618, 1
  %v620 = vadd.f32 %v618, %v619
  %v621 = vmul.f32 %v620, 0.03125
  %v622 = vmul.f32 %v531, %v531
  %v623 = vmul.f32 %v532, %v532
  %v624 = vmul.f32 %v533, %v533
  %v625 = vmul.f32 %v534, %v534
  %v626 = vsel %vm400, %v622, 0.0
  %v627 = vsel %vm400, %v623, 0.0
  %v628 = vadd.f32 %v626, %v627
  %v629 = vsel %vm400, %v624, 0.0
  %v630 = vadd.f32 %v628, %v629
  %v631 = vsel %vm400, %v625, 0.0
  %v632 = vadd.f32 %v630, %v631
  %v633 = vrot.slane %v632, 4
  %v634 = vadd.f32 %v632, %v633
  %v635 = vrot.slane %v634, 2
  %v636 = vadd.f32 %v634, %v635
  %v637 = vrot.slane %v636, 1
  %v638 = vadd.f32 %v636, %v637
  %v639 = vmul.f32 %v638, 0.03125
  %v640 = vmul.f32 %v621, %v621
  %v641 = vsub.f32 %v639, %v640
  %v642 = vmax.f32 %v641, 0.0
  %v643 = vsub.f32 %v531, %v621
  %v644 = vsub.f32 %v532, %v621
  %v645 = vsub.f32 %v533, %v621
  %v646 = vsub.f32 %v534, %v621
  %v647 = vadd.f32 %v642, 1e-05
  %v648 = vrsqrt.pop %v647
  %v649 = vmul.f32 %v643, %v648
  %v650 = vmul.f32 %v644, %v648
  %v651 = vmul.f32 %v645, %v648
  %v652 = vmul.f32 %v646, %v648
  %v654 = vlaneseq
  %v655 = vshrl.u32 %v654, 7
  %v656 = vsub.s32 0, %v655
  %v657 = vrot.slane %v605, %v656
  %v659 = vmul.f32 %v649, %v657
  %v660 = vmul.f32 %v650, %v657
  %v661 = vmul.f32 %v651, %v657
  %v662 = vmul.f32 %v652, %v657
  %v664 = vlaneseq
  %v665 = vshrl.u32 %v664, 7
  %v666 = vsub.s32 0, %v665
  %v667 = vrot.slane %v607, %v666
  %v669 = vadd.f32 %v659, %v667
  %v670 = vadd.f32 %v660, %v667
  %v671 = vadd.f32 %v661, %v667
  %v672 = vadd.f32 %v662, %v667
  %s673 = scalar_lea.vmem %s5, 8
  %v674 = vld [vmem:[%s673] sm:$0x1]
  %s675 = scalar_lea.vmem %s5, 9
  %v676 = vld [vmem:[%s675] sm:$0x1]
  %v677 = vsel %vm400, %v28, 0.0
  %v678 = vsel %vm400, %v29, 0.0
  %v679 = vadd.f32 %v677, %v678
  %v680 = vsel %vm400, %v30, 0.0
  %v681 = vadd.f32 %v679, %v680
  %v682 = vsel %vm400, %v31, 0.0
  %v683 = vadd.f32 %v681, %v682
  %v684 = vrot.slane %v683, 4
  %v685 = vadd.f32 %v683, %v684
  %v686 = vrot.slane %v685, 2
  %v687 = vadd.f32 %v685, %v686
  %v688 = vrot.slane %v687, 1
  %v689 = vadd.f32 %v687, %v688
  %v690 = vmul.f32 %v689, 0.03125
  %v691 = vmul.f32 %v28, %v28
  %v692 = vmul.f32 %v29, %v29
  %v693 = vmul.f32 %v30, %v30
  %v694 = vmul.f32 %v31, %v31
  %v695 = vsel %vm400, %v691, 0.0
  %v696 = vsel %vm400, %v692, 0.0
  %v697 = vadd.f32 %v695, %v696
  %v698 = vsel %vm400, %v693, 0.0
  %v699 = vadd.f32 %v697, %v698
  %v700 = vsel %vm400, %v694, 0.0
  %v701 = vadd.f32 %v699, %v700
  %v702 = vrot.slane %v701, 4
  %v703 = vadd.f32 %v701, %v702
  %v704 = vrot.slane %v703, 2
  %v705 = vadd.f32 %v703, %v704
  %v706 = vrot.slane %v705, 1
  %v707 = vadd.f32 %v705, %v706
  %v708 = vmul.f32 %v707, 0.03125
  %v709 = vmul.f32 %v690, %v690
  %v710 = vsub.f32 %v708, %v709
  %v711 = vmax.f32 %v710, 0.0
  %v712 = vsub.f32 %v28, %v690
  %v713 = vsub.f32 %v29, %v690
  %v714 = vsub.f32 %v30, %v690
  %v715 = vsub.f32 %v31, %v690
  %v716 = vadd.f32 %v711, 1e-05
  %v717 = vrsqrt.pop %v716
  %v718 = vmul.f32 %v712, %v717
  %v719 = vmul.f32 %v713, %v717
  %v720 = vmul.f32 %v714, %v717
  %v721 = vmul.f32 %v715, %v717
  %v723 = vlaneseq
  %v724 = vshrl.u32 %v723, 7
  %v725 = vsub.s32 0, %v724
  %v726 = vrot.slane %v674, %v725
  %v728 = vmul.f32 %v718, %v726
  %v729 = vmul.f32 %v719, %v726
  %v730 = vmul.f32 %v720, %v726
  %v731 = vmul.f32 %v721, %v726
  %v733 = vlaneseq
  %v734 = vshrl.u32 %v733, 7
  %v735 = vsub.s32 0, %v734
  %v736 = vrot.slane %v676, %v735
  %v738 = vadd.f32 %v728, %v736
  %v739 = vadd.f32 %v729, %v736
  %v740 = vadd.f32 %v730, %v736
  %v741 = vadd.f32 %v731, %v736
  %v742 = vld [vmem:[%s6] sm:$0xff]
  %s743 = scalar_lea.vmem %s6, 8
  %v744 = vld [vmem:[%s743] sm:$0xff]
  %v746 = vsel %vm400, %v669, 0
  %v749 = vsel %vm400, %v670, 0
  %v752 = vsel %vm400, %v671, 0
  %v755 = vsel %vm400, %v672, 0
  %757 = vmatprep.subr.mxu0 0.0
  %758 = vmatpush1.msra.mxu0 0.0
  %759 = vmatprep.subr.mxu0 0.0
  %760 = vmatpush1.msra.mxu0 0.0
  %761 = vmatprep.subr.mxu0 0.0
  %762 = vmatpush1.msra.mxu0 0.0
  %763 = vmatprep.subr.mxu0 0.0
  %764 = vmatpush1.msra.mxu0 0.0
  %765 = vmatprep.subr.mxu0 0.0
  %766 = vmatpush1.msra.mxu0 0.0
  %767 = vmatprep.subr.mxu0 0.0
  %768 = vmatpush1.msra.mxu0 0.0
  %769 = vmatprep.subr.mxu0 0.0
  %770 = vmatpush1.msra.mxu0 0.0
  %771 = vmatprep.subr.mxu0 0.0
  %772 = vmatpush1.msra.mxu0 0.0
  %773 = vmatprep.subr.mxu0 0.0
  %774 = vmatpush1.msra.mxu0 0.0
  %775 = vmatprep.subr.mxu0 0.0
  %776 = vmatpush1.msra.mxu0 0.0
  %777 = vmatprep.subr.mxu0 0.0
  %778 = vmatpush1.msra.mxu0 0.0
  %779 = vmatprep.subr.mxu0 0.0
  %780 = vmatpush1.msra.mxu0 0.0
  %781 = vmatprep.subr.mxu0 0.0
  %782 = vmatpush1.msra.mxu0 0.0
  %783 = vmatprep.subr.mxu0 0.0
  %784 = vmatpush1.msra.mxu0 0.0
  %785 = vmatprep.subr.mxu0 0.0
  %786 = vmatpush1.msra.mxu0 0.0
  %787 = vmatprep.subr.mxu0 0.0
  %788 = vmatpush1.msra.mxu0 %v744
  %789 = vmatprep.subr.mxu0 0.0
  %790 = vmatpush2.msra.mxu0 0.0
  %791 = vmatprep.subr.mxu0 0.0
  %792 = vmatpush2.msra.mxu0 0.0
  %793 = vmatprep.subr.mxu0 0.0
  %794 = vmatpush2.msra.mxu0 0.0
  %795 = vmatprep.subr.mxu0 0.0
  %796 = vmatpush2.msra.mxu0 0.0
  %797 = vmatprep.subr.mxu0 0.0
  %798 = vmatpush2.msra.mxu0 0.0
  %799 = vmatprep.subr.mxu0 0.0
  %800 = vmatpush2.msra.mxu0 0.0
  %801 = vmatprep.subr.mxu0 0.0
  %802 = vmatpush2.msra.mxu0 0.0
  %803 = vmatprep.subr.mxu0 0.0
  %804 = vmatpush2.msra.mxu0 0.0
  %805 = vmatprep.subr.mxu0 0.0
  %806 = vmatpush2.msra.mxu0 0.0
  %807 = vmatprep.subr.mxu0 0.0
  %808 = vmatpush2.msra.mxu0 0.0
  %809 = vmatprep.subr.mxu0 0.0
  %810 = vmatpush2.msra.mxu0 0.0
  %811 = vmatprep.subr.mxu0 0.0
  %812 = vmatpush2.msra.mxu0 0.0
  %813 = vmatprep.subr.mxu0 0.0
  %814 = vmatpush2.msra.mxu0 0.0
  %815 = vmatprep.subr.mxu0 0.0
  %816 = vmatpush2.msra.mxu0 0.0
  %817 = vmatprep.subr.mxu0 0.0
  %818 = vmatpush2.msra.mxu0 0.0
  %819 = vmatprep.subr.mxu0 0.0
  %820 = vmatpush2.msra.mxu0 0.0
  %821 = vmatprep.mubr.f32.mxu0 0.0
  %822 = vmatmul.mubr.f32.gmra.mxu0 %v746
  %v823 = vpop.f32.mrf.mxu0
  %v824 = vadd.f32 0.0, %v823
  %v825 = vpop.f32.mrf.mxu0
  %826 = vmatprep.mubr.f32.mxu0 0.0
  %827 = vmatmul.mubr.f32.gmra.mxu0 %v749
  %v828 = vpop.f32.mrf.mxu0
  %v829 = vadd.f32 0.0, %v828
  %v830 = vpop.f32.mrf.mxu0
  %831 = vmatprep.mubr.f32.mxu0 0.0
  %832 = vmatmul.mubr.f32.gmra.mxu0 %v752
  %v833 = vpop.f32.mrf.mxu0
  %v834 = vadd.f32 0.0, %v833
  %v835 = vpop.f32.mrf.mxu0
  %836 = vmatprep.mubr.f32.mxu0 0.0
  %837 = vmatmul.mubr.f32.gmra.mxu0 %v755
  %v838 = vpop.f32.mrf.mxu0
  %v839 = vadd.f32 0.0, %v838
  %v840 = vpop.f32.mrf.mxu0
  %841 = vdwg.mxu0
  %v843 = vsel %vm400, %v600, 0
  %v846 = vsel %vm400, %v601, 0
  %v849 = vsel %vm400, %v602, 0
  %v852 = vsel %vm400, %v603, 0
  %854 = vmatprep.subr.mxu0 0.0
  %855 = vmatpush1.msra.mxu0 0.0
  %856 = vmatprep.subr.mxu0 0.0
  %857 = vmatpush1.msra.mxu0 0.0
  %858 = vmatprep.subr.mxu0 0.0
  %859 = vmatpush1.msra.mxu0 0.0
  %860 = vmatprep.subr.mxu0 0.0
  %861 = vmatpush1.msra.mxu0 0.0
  %862 = vmatprep.subr.mxu0 0.0
  %863 = vmatpush1.msra.mxu0 0.0
  %864 = vmatprep.subr.mxu0 0.0
  %865 = vmatpush1.msra.mxu0 0.0
  %866 = vmatprep.subr.mxu0 0.0
  %867 = vmatpush1.msra.mxu0 0.0
  %868 = vmatprep.subr.mxu0 0.0
  %869 = vmatpush1.msra.mxu0 0.0
  %870 = vmatprep.subr.mxu0 0.0
  %871 = vmatpush1.msra.mxu0 0.0
  %872 = vmatprep.subr.mxu0 0.0
  %873 = vmatpush1.msra.mxu0 0.0
  %874 = vmatprep.subr.mxu0 0.0
  %875 = vmatpush1.msra.mxu0 0.0
  %876 = vmatprep.subr.mxu0 0.0
  %877 = vmatpush1.msra.mxu0 0.0
  %878 = vmatprep.subr.mxu0 0.0
  %879 = vmatpush1.msra.mxu0 0.0
  %880 = vmatprep.subr.mxu0 0.0
  %881 = vmatpush1.msra.mxu0 0.0
  %882 = vmatprep.subr.mxu0 0.0
  %883 = vmatpush1.msra.mxu0 0.0
  %884 = vmatprep.subr.mxu0 0.0
  %885 = vmatpush1.msra.mxu0 %v742
  %886 = vmatprep.subr.mxu0 0.0
  %887 = vmatpush2.msra.mxu0 0.0
  %888 = vmatprep.subr.mxu0 0.0
  %889 = vmatpush2.msra.mxu0 0.0
  %890 = vmatprep.subr.mxu0 0.0
  %891 = vmatpush2.msra.mxu0 0.0
  %892 = vmatprep.subr.mxu0 0.0
  %893 = vmatpush2.msra.mxu0 0.0
  %894 = vmatprep.subr.mxu0 0.0
  %895 = vmatpush2.msra.mxu0 0.0
  %896 = vmatprep.subr.mxu0 0.0
  %897 = vmatpush2.msra.mxu0 0.0
  %898 = vmatprep.subr.mxu0 0.0
  %899 = vmatpush2.msra.mxu0 0.0
  %900 = vmatprep.subr.mxu0 0.0
  %901 = vmatpush2.msra.mxu0 0.0
  %902 = vmatprep.subr.mxu0 0.0
  %903 = vmatpush2.msra.mxu0 0.0
  %904 = vmatprep.subr.mxu0 0.0
  %905 = vmatpush2.msra.mxu0 0.0
  %906 = vmatprep.subr.mxu0 0.0
  %907 = vmatpush2.msra.mxu0 0.0
  %908 = vmatprep.subr.mxu0 0.0
  %909 = vmatpush2.msra.mxu0 0.0
  %910 = vmatprep.subr.mxu0 0.0
  %911 = vmatpush2.msra.mxu0 0.0
  %912 = vmatprep.subr.mxu0 0.0
  %913 = vmatpush2.msra.mxu0 0.0
  %914 = vmatprep.subr.mxu0 0.0
  %915 = vmatpush2.msra.mxu0 0.0
  %916 = vmatprep.subr.mxu0 0.0
  %917 = vmatpush2.msra.mxu0 0.0
  %918 = vmatprep.mubr.f32.mxu0 0.0
  %919 = vmatmul.mubr.f32.gmra.mxu0 %v843
  %v920 = vpop.f32.mrf.mxu0
  %v921 = vadd.f32 %v824, %v920
  %v922 = vpop.f32.mrf.mxu0
  %923 = vmatprep.mubr.f32.mxu0 0.0
  %924 = vmatmul.mubr.f32.gmra.mxu0 %v846
  %v925 = vpop.f32.mrf.mxu0
  %v926 = vadd.f32 %v829, %v925
  %v927 = vpop.f32.mrf.mxu0
  %928 = vmatprep.mubr.f32.mxu0 0.0
  %929 = vmatmul.mubr.f32.gmra.mxu0 %v849
  %v930 = vpop.f32.mrf.mxu0
  %v931 = vadd.f32 %v834, %v930
  %v932 = vpop.f32.mrf.mxu0
  %933 = vmatprep.mubr.f32.mxu0 0.0
  %934 = vmatmul.mubr.f32.gmra.mxu0 %v852
  %v935 = vpop.f32.mrf.mxu0
  %v936 = vadd.f32 %v839, %v935
  %v937 = vpop.f32.mrf.mxu0
  %938 = vdwg.mxu0
  %s939 = scalar_lea.vmem %s6, 16
  %v940 = vld [vmem:[%s939] sm:$0xff]
  %v942 = vsel %vm400, %v738, 0
  %v945 = vsel %vm400, %v739, 0
  %v948 = vsel %vm400, %v740, 0
  %v951 = vsel %vm400, %v741, 0
  %953 = vmatprep.subr.mxu0 0.0
  %954 = vmatpush1.msra.mxu0 0.0
  %955 = vmatprep.subr.mxu0 0.0
  %956 = vmatpush1.msra.mxu0 0.0
  %957 = vmatprep.subr.mxu0 0.0
  %958 = vmatpush1.msra.mxu0 0.0
  %959 = vmatprep.subr.mxu0 0.0
  %960 = vmatpush1.msra.mxu0 0.0
  %961 = vmatprep.subr.mxu0 0.0
  %962 = vmatpush1.msra.mxu0 0.0
  %963 = vmatprep.subr.mxu0 0.0
  %964 = vmatpush1.msra.mxu0 0.0
  %965 = vmatprep.subr.mxu0 0.0
  %966 = vmatpush1.msra.mxu0 0.0
  %967 = vmatprep.subr.mxu0 0.0
  %968 = vmatpush1.msra.mxu0 0.0
  %969 = vmatprep.subr.mxu0 0.0
  %970 = vmatpush1.msra.mxu0 0.0
  %971 = vmatprep.subr.mxu0 0.0
  %972 = vmatpush1.msra.mxu0 0.0
  %973 = vmatprep.subr.mxu0 0.0
  %974 = vmatpush1.msra.mxu0 0.0
  %975 = vmatprep.subr.mxu0 0.0
  %976 = vmatpush1.msra.mxu0 0.0
  %977 = vmatprep.subr.mxu0 0.0
  %978 = vmatpush1.msra.mxu0 0.0
  %979 = vmatprep.subr.mxu0 0.0
  %980 = vmatpush1.msra.mxu0 0.0
  %981 = vmatprep.subr.mxu0 0.0
  %982 = vmatpush1.msra.mxu0 0.0
  %983 = vmatprep.subr.mxu0 0.0
  %984 = vmatpush1.msra.mxu0 %v940
  %985 = vmatprep.subr.mxu0 0.0
  %986 = vmatpush2.msra.mxu0 0.0
  %987 = vmatprep.subr.mxu0 0.0
  %988 = vmatpush2.msra.mxu0 0.0
  %989 = vmatprep.subr.mxu0 0.0
  %990 = vmatpush2.msra.mxu0 0.0
  %991 = vmatprep.subr.mxu0 0.0
  %992 = vmatpush2.msra.mxu0 0.0
  %993 = vmatprep.subr.mxu0 0.0
  %994 = vmatpush2.msra.mxu0 0.0
  %995 = vmatprep.subr.mxu0 0.0
  %996 = vmatpush2.msra.mxu0 0.0
  %997 = vmatprep.subr.mxu0 0.0
  %998 = vmatpush2.msra.mxu0 0.0
  %999 = vmatprep.subr.mxu0 0.0
  %1000 = vmatpush2.msra.mxu0 0.0
  %1001 = vmatprep.subr.mxu0 0.0
  %1002 = vmatpush2.msra.mxu0 0.0
  %1003 = vmatprep.subr.mxu0 0.0
  %1004 = vmatpush2.msra.mxu0 0.0
  %1005 = vmatprep.subr.mxu0 0.0
  %1006 = vmatpush2.msra.mxu0 0.0
  %1007 = vmatprep.subr.mxu0 0.0
  %1008 = vmatpush2.msra.mxu0 0.0
  %1009 = vmatprep.subr.mxu0 0.0
  %1010 = vmatpush2.msra.mxu0 0.0
  %1011 = vmatprep.subr.mxu0 0.0
  %1012 = vmatpush2.msra.mxu0 0.0
  %1013 = vmatprep.subr.mxu0 0.0
  %1014 = vmatpush2.msra.mxu0 0.0
  %1015 = vmatprep.subr.mxu0 0.0
  %1016 = vmatpush2.msra.mxu0 0.0
  %1017 = vmatprep.mubr.f32.mxu0 0.0
  %1018 = vmatmul.mubr.f32.gmra.mxu0 %v942
  %v1019 = vpop.f32.mrf.mxu0
  %v1020 = vadd.f32 0.0, %v1019
  %v1021 = vpop.f32.mrf.mxu0
  %1022 = vmatprep.mubr.f32.mxu0 0.0
  %1023 = vmatmul.mubr.f32.gmra.mxu0 %v945
  %v1024 = vpop.f32.mrf.mxu0
  %v1025 = vadd.f32 0.0, %v1024
  %v1026 = vpop.f32.mrf.mxu0
  %1027 = vmatprep.mubr.f32.mxu0 0.0
  %1028 = vmatmul.mubr.f32.gmra.mxu0 %v948
  %v1029 = vpop.f32.mrf.mxu0
  %v1030 = vadd.f32 0.0, %v1029
  %v1031 = vpop.f32.mrf.mxu0
  %1032 = vmatprep.mubr.f32.mxu0 0.0
  %1033 = vmatmul.mubr.f32.gmra.mxu0 %v951
  %v1034 = vpop.f32.mrf.mxu0
  %v1035 = vadd.f32 0.0, %v1034
  %v1036 = vpop.f32.mrf.mxu0
  %1037 = vdwg.mxu0
  %v1038 = vadd.f32 %v921, %v1020
  %v1039 = vadd.f32 %v926, %v1025
  %v1040 = vadd.f32 %v931, %v1030
  %v1041 = vadd.f32 %v936, %v1035
  %s1042 = scalar_lea.vmem %s5, 10
  %v1043 = vld [vmem:[%s1042] sm:$0x1]
  %v1045 = vlaneseq
  %v1046 = vshrl.u32 %v1045, 7
  %v1047 = vsub.s32 0, %v1046
  %v1048 = vrot.slane %v1043, %v1047
  %v1050 = vadd.f32 %v1038, %v1048
  %v1051 = vadd.f32 %v1039, %v1048
  %v1052 = vadd.f32 %v1040, %v1048
  %v1053 = vadd.f32 %v1041, %v1048
  %s1054 = scalar_lea.vmem %s5, 11
  %v1055 = vld [vmem:[%s1054] sm:$0x1]
  %s1056 = scalar_lea.vmem %s5, 12
  %v1057 = vld [vmem:[%s1056] sm:$0x1]
  %v1058 = vsel %vm400, %v1050, 0.0
  %v1059 = vsel %vm400, %v1051, 0.0
  %v1060 = vadd.f32 %v1058, %v1059
  %v1061 = vsel %vm400, %v1052, 0.0
  %v1062 = vadd.f32 %v1060, %v1061
  %v1063 = vsel %vm400, %v1053, 0.0
  %v1064 = vadd.f32 %v1062, %v1063
  %v1065 = vrot.slane %v1064, 4
  %v1066 = vadd.f32 %v1064, %v1065
  %v1067 = vrot.slane %v1066, 2
  %v1068 = vadd.f32 %v1066, %v1067
  %v1069 = vrot.slane %v1068, 1
  %v1070 = vadd.f32 %v1068, %v1069
  %v1071 = vmul.f32 %v1070, 0.03125
  %v1072 = vmul.f32 %v1050, %v1050
  %v1073 = vmul.f32 %v1051, %v1051
  %v1074 = vmul.f32 %v1052, %v1052
  %v1075 = vmul.f32 %v1053, %v1053
  %v1076 = vsel %vm400, %v1072, 0.0
  %v1077 = vsel %vm400, %v1073, 0.0
  %v1078 = vadd.f32 %v1076, %v1077
  %v1079 = vsel %vm400, %v1074, 0.0
  %v1080 = vadd.f32 %v1078, %v1079
  %v1081 = vsel %vm400, %v1075, 0.0
  %v1082 = vadd.f32 %v1080, %v1081
  %v1083 = vrot.slane %v1082, 4
  %v1084 = vadd.f32 %v1082, %v1083
  %v1085 = vrot.slane %v1084, 2
  %v1086 = vadd.f32 %v1084, %v1085
  %v1087 = vrot.slane %v1086, 1
  %v1088 = vadd.f32 %v1086, %v1087
  %v1089 = vmul.f32 %v1088, 0.03125
  %v1090 = vmul.f32 %v1071, %v1071
  %v1091 = vsub.f32 %v1089, %v1090
  %v1092 = vmax.f32 %v1091, 0.0
  %v1093 = vsub.f32 %v1050, %v1071
  %v1094 = vsub.f32 %v1051, %v1071
  %v1095 = vsub.f32 %v1052, %v1071
  %v1096 = vsub.f32 %v1053, %v1071
  %v1097 = vadd.f32 %v1092, 1e-05
  %v1098 = vrsqrt.pop %v1097
  %v1099 = vmul.f32 %v1093, %v1098
  %v1100 = vmul.f32 %v1094, %v1098
  %v1101 = vmul.f32 %v1095, %v1098
  %v1102 = vmul.f32 %v1096, %v1098
  %v1104 = vlaneseq
  %v1105 = vshrl.u32 %v1104, 7
  %v1106 = vsub.s32 0, %v1105
  %v1107 = vrot.slane %v1055, %v1106
  %v1109 = vmul.f32 %v1099, %v1107
  %v1110 = vmul.f32 %v1100, %v1107
  %v1111 = vmul.f32 %v1101, %v1107
  %v1112 = vmul.f32 %v1102, %v1107
  %v1114 = vlaneseq
  %v1115 = vshrl.u32 %v1114, 7
  %v1116 = vsub.s32 0, %v1115
  %v1117 = vrot.slane %v1057, %v1116
  %v1119 = vadd.f32 %v1109, %v1117
  %v1120 = vadd.f32 %v1110, %v1117
  %v1121 = vadd.f32 %v1111, %v1117
  %v1122 = vadd.f32 %v1112, %v1117
  %vm1123 = vcmp.gt.f32.partialorder %v1119, 20.0
  %vm1124 = vcmp.gt.f32.partialorder %v1120, 20.0
  %vm1125 = vcmp.gt.f32.partialorder %v1121, 20.0
  %vm1126 = vcmp.gt.f32.partialorder %v1122, 20.0
  %v1127 = vmin.f32 %v1119, 20.0
  %v1128 = vmin.f32 %v1120, 20.0
  %v1129 = vmin.f32 %v1121, 20.0
  %v1130 = vmin.f32 %v1122, 20.0
  %v1131 = vmul.f32 %v1127, 1.442695
  %v1132 = vpow.pop %v1131
  %v1133 = vmul.f32 %v1128, 1.442695
  %v1134 = vpow.pop %v1133
  %v1135 = vmul.f32 %v1129, 1.442695
  %v1136 = vpow.pop %v1135
  %v1137 = vmul.f32 %v1130, 1.442695
  %v1138 = vpow.pop %v1137
  %v1139 = vadd.f32 %v1132, 1.0
  %v1140 = vlog2.pop %v1139
  %v1141 = vmul.f32 %v1140, 0.6931472
  %v1142 = vmul.f32 -0.5, %v1132
  %v1143 = vadd.f32 %v1142, 1.0
  %v1144 = vmul.f32 %v1143, %v1132
  %v1145 = vand.u32 2147483647, %v1132
  %vm1146 = vcmp.lt.f32.partialorder %v1145, 0.0004427343
  %v1147 = vsel %vm1146, %v1144, %v1141
  %v1148 = vadd.f32 %v1134, 1.0
  %v1149 = vlog2.pop %v1148
  %v1150 = vmul.f32 %v1149, 0.6931472
  %v1151 = vmul.f32 -0.5, %v1134
  %v1152 = vadd.f32 %v1151, 1.0
  %v1153 = vmul.f32 %v1152, %v1134
  %v1154 = vand.u32 2147483647, %v1134
  %vm1155 = vcmp.lt.f32.partialorder %v1154, 0.0004427343
  %v1156 = vsel %vm1155, %v1153, %v1150
  %v1157 = vadd.f32 %v1136, 1.0
  %v1158 = vlog2.pop %v1157
  %v1159 = vmul.f32 %v1158, 0.6931472
  %v1160 = vmul.f32 -0.5, %v1136
  %v1161 = vadd.f32 %v1160, 1.0
  %v1162 = vmul.f32 %v1161, %v1136
  %v1163 = vand.u32 2147483647, %v1136
  %vm1164 = vcmp.lt.f32.partialorder %v1163, 0.0004427343
  %v1165 = vsel %vm1164, %v1162, %v1159
  %v1166 = vadd.f32 %v1138, 1.0
  %v1167 = vlog2.pop %v1166
  %v1168 = vmul.f32 %v1167, 0.6931472
  %v1169 = vmul.f32 -0.5, %v1138
  %v1170 = vadd.f32 %v1169, 1.0
  %v1171 = vmul.f32 %v1170, %v1138
  %v1172 = vand.u32 2147483647, %v1138
  %vm1173 = vcmp.lt.f32.partialorder %v1172, 0.0004427343
  %v1174 = vsel %vm1173, %v1171, %v1168
  %v1175 = vsel %vm1123, %v1119, %v1147
  %v1176 = vsel %vm1124, %v1120, %v1156
  %v1177 = vsel %vm1125, %v1121, %v1165
  %v1178 = vsel %vm1126, %v1122, %v1174
  %v1179 = vadd.f32 %v28, %v1175
  %v1180 = vadd.f32 %v29, %v1176
  %v1181 = vadd.f32 %v30, %v1177
  %v1182 = vadd.f32 %v31, %v1178
  %s1183 = scalar_lea.vmem %s5, 13
  %v1184 = vld [vmem:[%s1183] sm:$0x1]
  %s1185 = scalar_lea.vmem %s5, 14
  %v1186 = vld [vmem:[%s1185] sm:$0x1]
  %v1187 = vsel %vm400, %v1179, 0.0
  %v1188 = vsel %vm400, %v1180, 0.0
  %v1189 = vadd.f32 %v1187, %v1188
  %v1190 = vsel %vm400, %v1181, 0.0
  %v1191 = vadd.f32 %v1189, %v1190
  %v1192 = vsel %vm400, %v1182, 0.0
  %v1193 = vadd.f32 %v1191, %v1192
  %v1194 = vrot.slane %v1193, 4
  %v1195 = vadd.f32 %v1193, %v1194
  %v1196 = vrot.slane %v1195, 2
  %v1197 = vadd.f32 %v1195, %v1196
  %v1198 = vrot.slane %v1197, 1
  %v1199 = vadd.f32 %v1197, %v1198
  %v1200 = vmul.f32 %v1199, 0.03125
  %v1201 = vmul.f32 %v1179, %v1179
  %v1202 = vmul.f32 %v1180, %v1180
  %v1203 = vmul.f32 %v1181, %v1181
  %v1204 = vmul.f32 %v1182, %v1182
  %v1205 = vsel %vm400, %v1201, 0.0
  %v1206 = vsel %vm400, %v1202, 0.0
  %v1207 = vadd.f32 %v1205, %v1206
  %v1208 = vsel %vm400, %v1203, 0.0
  %v1209 = vadd.f32 %v1207, %v1208
  %v1210 = vsel %vm400, %v1204, 0.0
  %v1211 = vadd.f32 %v1209, %v1210
  %v1212 = vrot.slane %v1211, 4
  %v1213 = vadd.f32 %v1211, %v1212
  %v1214 = vrot.slane %v1213, 2
  %v1215 = vadd.f32 %v1213, %v1214
  %v1216 = vrot.slane %v1215, 1
  %v1217 = vadd.f32 %v1215, %v1216
  %v1218 = vmul.f32 %v1217, 0.03125
  %v1219 = vmul.f32 %v1200, %v1200
  %v1220 = vsub.f32 %v1218, %v1219
  %v1221 = vmax.f32 %v1220, 0.0
  %v1222 = vsub.f32 %v1179, %v1200
  %v1223 = vsub.f32 %v1180, %v1200
  %v1224 = vsub.f32 %v1181, %v1200
  %v1225 = vsub.f32 %v1182, %v1200
  %v1226 = vadd.f32 %v1221, 1e-05
  %v1227 = vrsqrt.pop %v1226
  %v1228 = vmul.f32 %v1222, %v1227
  %v1229 = vmul.f32 %v1223, %v1227
  %v1230 = vmul.f32 %v1224, %v1227
  %v1231 = vmul.f32 %v1225, %v1227
  %v1233 = vlaneseq
  %v1234 = vshrl.u32 %v1233, 7
  %v1235 = vsub.s32 0, %v1234
  %v1236 = vrot.slane %v1184, %v1235
  %v1238 = vmul.f32 %v1228, %v1236
  %v1239 = vmul.f32 %v1229, %v1236
  %v1240 = vmul.f32 %v1230, %v1236
  %v1241 = vmul.f32 %v1231, %v1236
  %v1243 = vlaneseq
  %v1244 = vshrl.u32 %v1243, 7
  %v1245 = vsub.s32 0, %v1244
  %v1246 = vrot.slane %v1186, %v1245
  %v1248 = vadd.f32 %v1238, %v1246
  %v1249 = vadd.f32 %v1239, %v1246
  %v1250 = vadd.f32 %v1240, %v1246
  %v1251 = vadd.f32 %v1241, %v1246
  %v1253 = vsel %vm104, %v200, 0
  %v1256 = vsel %vm104, %v201, 0
  %1258 = vmatprep.subr.mxu0 0.0
  %1259 = vmatpush1.msra.mxu0 0.0
  %1260 = vmatprep.subr.mxu0 0.0
  %1261 = vmatpush1.msra.mxu0 0.0
  %1262 = vmatprep.subr.mxu0 0.0
  %1263 = vmatpush1.msra.mxu0 0.0
  %1264 = vmatprep.subr.mxu0 0.0
  %1265 = vmatpush1.msra.mxu0 0.0
  %1266 = vmatprep.subr.mxu0 0.0
  %1267 = vmatpush1.msra.mxu0 0.0
  %1268 = vmatprep.subr.mxu0 0.0
  %1269 = vmatpush1.msra.mxu0 0.0
  %1270 = vmatprep.subr.mxu0 0.0
  %1271 = vmatpush1.msra.mxu0 0.0
  %1272 = vmatprep.subr.mxu0 0.0
  %1273 = vmatpush1.msra.mxu0 0.0
  %1274 = vmatprep.subr.mxu0 0.0
  %1275 = vmatpush1.msra.mxu0 0.0
  %1276 = vmatprep.subr.mxu0 0.0
  %1277 = vmatpush1.msra.mxu0 0.0
  %1278 = vmatprep.subr.mxu0 0.0
  %1279 = vmatpush1.msra.mxu0 0.0
  %1280 = vmatprep.subr.mxu0 0.0
  %1281 = vmatpush1.msra.mxu0 0.0
  %1282 = vmatprep.subr.mxu0 0.0
  %1283 = vmatpush1.msra.mxu0 %v1251
  %1284 = vmatprep.subr.mxu0 0.0
  %1285 = vmatpush1.msra.mxu0 %v1250
  %1286 = vmatprep.subr.mxu0 0.0
  %1287 = vmatpush1.msra.mxu0 %v1249
  %1288 = vmatprep.subr.mxu0 0.0
  %1289 = vmatpush1.msra.mxu0 %v1248
  %1290 = vmatprep.subr.mxu0 0.0
  %1291 = vmatpush2.msra.mxu0 0.0
  %1292 = vmatprep.subr.mxu0 0.0
  %1293 = vmatpush2.msra.mxu0 0.0
  %1294 = vmatprep.subr.mxu0 0.0
  %1295 = vmatpush2.msra.mxu0 0.0
  %1296 = vmatprep.subr.mxu0 0.0
  %1297 = vmatpush2.msra.mxu0 0.0
  %1298 = vmatprep.subr.mxu0 0.0
  %1299 = vmatpush2.msra.mxu0 0.0
  %1300 = vmatprep.subr.mxu0 0.0
  %1301 = vmatpush2.msra.mxu0 0.0
  %1302 = vmatprep.subr.mxu0 0.0
  %1303 = vmatpush2.msra.mxu0 0.0
  %1304 = vmatprep.subr.mxu0 0.0
  %1305 = vmatpush2.msra.mxu0 0.0
  %1306 = vmatprep.subr.mxu0 0.0
  %1307 = vmatpush2.msra.mxu0 0.0
  %1308 = vmatprep.subr.mxu0 0.0
  %1309 = vmatpush2.msra.mxu0 0.0
  %1310 = vmatprep.subr.mxu0 0.0
  %1311 = vmatpush2.msra.mxu0 0.0
  %1312 = vmatprep.subr.mxu0 0.0
  %1313 = vmatpush2.msra.mxu0 0.0
  %1314 = vmatprep.subr.mxu0 0.0
  %1315 = vmatpush2.msra.mxu0 0.0
  %1316 = vmatprep.subr.mxu0 0.0
  %1317 = vmatpush2.msra.mxu0 0.0
  %1318 = vmatprep.subr.mxu0 0.0
  %1319 = vmatpush2.msra.mxu0 0.0
  %1320 = vmatprep.subr.mxu0 0.0
  %1321 = vmatpush2.msra.mxu0 0.0
  %1322 = vmatprep.mubr.f32.mxu0 0.0
  %1323 = vmatmul.mubr.f32.gmra.mxu0 %v1253
  %v1324 = vpop.f32.mrf.mxu0
  %v1325 = vadd.f32 0.0, %v1324
  %v1326 = vpop.f32.mrf.mxu0
  %1327 = vmatprep.mubr.f32.mxu0 0.0
  %1328 = vmatmul.mubr.f32.gmra.mxu0 %v1256
  %v1329 = vpop.f32.mrf.mxu0
  %v1330 = vadd.f32 0.0, %v1329
  %v1331 = vpop.f32.mrf.mxu0
  %1332 = vdwg.mxu0
  %s1333 = scalar_lea.vmem %s5, 15
  %v1334 = vld [vmem:[%s1333] sm:$0x1]
  %s1335 = scalar_lea.vmem %s5, 16
  %v1336 = vld [vmem:[%s1335] sm:$0x1]
  %v1337 = vsel %vm400, %v1325, 0.0
  %v1338 = vsel %vm400, %v1330, 0.0
  %v1339 = vadd.f32 %v1337, %v1338
  %v1340 = vrot.slane %v1339, 4
  %v1341 = vadd.f32 %v1339, %v1340
  %v1342 = vrot.slane %v1341, 2
  %v1343 = vadd.f32 %v1341, %v1342
  %v1344 = vrot.slane %v1343, 1
  %v1345 = vadd.f32 %v1343, %v1344
  %v1346 = vmul.f32 %v1345, 0.0625
  %v1347 = vmul.f32 %v1325, %v1325
  %v1348 = vmul.f32 %v1330, %v1330
  %v1349 = vsel %vm400, %v1347, 0.0
  %v1350 = vsel %vm400, %v1348, 0.0
  %v1351 = vadd.f32 %v1349, %v1350
  %v1352 = vrot.slane %v1351, 4
  %v1353 = vadd.f32 %v1351, %v1352
  %v1354 = vrot.slane %v1353, 2
  %v1355 = vadd.f32 %v1353, %v1354
  %v1356 = vrot.slane %v1355, 1
  %v1357 = vadd.f32 %v1355, %v1356
  %v1358 = vmul.f32 %v1357, 0.0625
  %v1359 = vmul.f32 %v1346, %v1346
  %v1360 = vsub.f32 %v1358, %v1359
  %v1361 = vmax.f32 %v1360, 0.0
  %v1362 = vsub.f32 %v1325, %v1346
  %v1363 = vsub.f32 %v1330, %v1346
  %v1364 = vadd.f32 %v1361, 1e-05
  %v1365 = vrsqrt.pop %v1364
  %v1366 = vmul.f32 %v1362, %v1365
  %v1367 = vmul.f32 %v1363, %v1365
  %v1369 = vlaneseq
  %v1370 = vshrl.u32 %v1369, 7
  %v1371 = vsub.s32 0, %v1370
  %v1372 = vrot.slane %v1334, %v1371
  %v1374 = vmul.f32 %v1366, %v1372
  %v1375 = vmul.f32 %v1367, %v1372
  %v1377 = vlaneseq
  %v1378 = vshrl.u32 %v1377, 7
  %v1379 = vsub.s32 0, %v1378
  %v1380 = vrot.slane %v1336, %v1379
  %v1382 = vadd.f32 %v1374, %v1380
  %v1383 = vadd.f32 %v1375, %v1380
  %s1384 = scalar_lea.vmem %s5, 17
  %v1385 = vld [vmem:[%s1384] sm:$0x1]
  %s1386 = scalar_lea.vmem %s5, 18
  %v1387 = vld [vmem:[%s1386] sm:$0x1]
  %v1388 = vsel %vm400, %v26, 0.0
  %v1389 = vsel %vm400, %v27, 0.0
  %v1390 = vadd.f32 %v1388, %v1389
  %v1391 = vrot.slane %v1390, 4
  %v1392 = vadd.f32 %v1390, %v1391
  %v1393 = vrot.slane %v1392, 2
  %v1394 = vadd.f32 %v1392, %v1393
  %v1395 = vrot.slane %v1394, 1
  %v1396 = vadd.f32 %v1394, %v1395
  %v1397 = vmul.f32 %v1396, 0.0625
  %v1398 = vmul.f32 %v26, %v26
  %v1399 = vmul.f32 %v27, %v27
  %v1400 = vsel %vm400, %v1398, 0.0
  %v1401 = vsel %vm400, %v1399, 0.0
  %v1402 = vadd.f32 %v1400, %v1401
  %v1403 = vrot.slane %v1402, 4
  %v1404 = vadd.f32 %v1402, %v1403
  %v1405 = vrot.slane %v1404, 2
  %v1406 = vadd.f32 %v1404, %v1405
  %v1407 = vrot.slane %v1406, 1
  %v1408 = vadd.f32 %v1406, %v1407
  %v1409 = vmul.f32 %v1408, 0.0625
  %v1410 = vmul.f32 %v1397, %v1397
  %v1411 = vsub.f32 %v1409, %v1410
  %v1412 = vmax.f32 %v1411, 0.0
  %v1413 = vsub.f32 %v26, %v1397
  %v1414 = vsub.f32 %v27, %v1397
  %v1415 = vadd.f32 %v1412, 1e-05
  %v1416 = vrsqrt.pop %v1415
  %v1417 = vmul.f32 %v1413, %v1416
  %v1418 = vmul.f32 %v1414, %v1416
  %v1420 = vlaneseq
  %v1421 = vshrl.u32 %v1420, 7
  %v1422 = vsub.s32 0, %v1421
  %v1423 = vrot.slane %v1385, %v1422
  %v1425 = vmul.f32 %v1417, %v1423
  %v1426 = vmul.f32 %v1418, %v1423
  %v1428 = vlaneseq
  %v1429 = vshrl.u32 %v1428, 7
  %v1430 = vsub.s32 0, %v1429
  %v1431 = vrot.slane %v1387, %v1430
  %v1433 = vadd.f32 %v1425, %v1431
  %v1434 = vadd.f32 %v1426, %v1431
  %s1435 = scalar_lea.vmem %s5, 19
  %v1436 = vld [vmem:[%s1435] sm:$0x1]
  %s1437 = scalar_lea.vmem %s5, 20
  %v1438 = vld [vmem:[%s1437] sm:$0x1]
  %v1439 = vsel %vm400, %v1382, 0.0
  %v1440 = vsel %vm400, %v1383, 0.0
  %v1441 = vadd.f32 %v1439, %v1440
  %v1442 = vrot.slane %v1441, 4
  %v1443 = vadd.f32 %v1441, %v1442
  %v1444 = vrot.slane %v1443, 2
  %v1445 = vadd.f32 %v1443, %v1444
  %v1446 = vrot.slane %v1445, 1
  %v1447 = vadd.f32 %v1445, %v1446
  %v1448 = vmul.f32 %v1447, 0.0625
  %v1449 = vmul.f32 %v1382, %v1382
  %v1450 = vmul.f32 %v1383, %v1383
  %v1451 = vsel %vm400, %v1449, 0.0
  %v1452 = vsel %vm400, %v1450, 0.0
  %v1453 = vadd.f32 %v1451, %v1452
  %v1454 = vrot.slane %v1453, 4
  %v1455 = vadd.f32 %v1453, %v1454
  %v1456 = vrot.slane %v1455, 2
  %v1457 = vadd.f32 %v1455, %v1456
  %v1458 = vrot.slane %v1457, 1
  %v1459 = vadd.f32 %v1457, %v1458
  %v1460 = vmul.f32 %v1459, 0.0625
  %v1461 = vmul.f32 %v1448, %v1448
  %v1462 = vsub.f32 %v1460, %v1461
  %v1463 = vmax.f32 %v1462, 0.0
  %v1464 = vsub.f32 %v1382, %v1448
  %v1465 = vsub.f32 %v1383, %v1448
  %v1466 = vadd.f32 %v1463, 1e-05
  %v1467 = vrsqrt.pop %v1466
  %v1468 = vmul.f32 %v1464, %v1467
  %v1469 = vmul.f32 %v1465, %v1467
  %v1471 = vlaneseq
  %v1472 = vshrl.u32 %v1471, 7
  %v1473 = vsub.s32 0, %v1472
  %v1474 = vrot.slane %v1436, %v1473
  %v1476 = vmul.f32 %v1468, %v1474
  %v1477 = vmul.f32 %v1469, %v1474
  %v1479 = vlaneseq
  %v1480 = vshrl.u32 %v1479, 7
  %v1481 = vsub.s32 0, %v1480
  %v1482 = vrot.slane %v1438, %v1481
  %v1484 = vadd.f32 %v1476, %v1482
  %v1485 = vadd.f32 %v1477, %v1482
  %s1486 = scalar_lea.vmem %s6, 24
  %v1487 = vld [vmem:[%s1486] sm:$0xff]
  %s1488 = scalar_lea.vmem %s6, 32
  %v1489 = vld [vmem:[%s1488] sm:$0xff]
  %v1491 = vsel %vm400, %v1484, 0
  %v1494 = vsel %vm400, %v1485, 0
  %1496 = vmatprep.subr.mxu0 0.0
  %1497 = vmatpush1.msra.mxu0 0.0
  %1498 = vmatprep.subr.mxu0 0.0
  %1499 = vmatpush1.msra.mxu0 0.0
  %1500 = vmatprep.subr.mxu0 0.0
  %1501 = vmatpush1.msra.mxu0 0.0
  %1502 = vmatprep.subr.mxu0 0.0
  %1503 = vmatpush1.msra.mxu0 0.0
  %1504 = vmatprep.subr.mxu0 0.0
  %1505 = vmatpush1.msra.mxu0 0.0
  %1506 = vmatprep.subr.mxu0 0.0
  %1507 = vmatpush1.msra.mxu0 0.0
  %1508 = vmatprep.subr.mxu0 0.0
  %1509 = vmatpush1.msra.mxu0 0.0
  %1510 = vmatprep.subr.mxu0 0.0
  %1511 = vmatpush1.msra.mxu0 0.0
  %1512 = vmatprep.subr.mxu0 0.0
  %1513 = vmatpush1.msra.mxu0 0.0
  %1514 = vmatprep.subr.mxu0 0.0
  %1515 = vmatpush1.msra.mxu0 0.0
  %1516 = vmatprep.subr.mxu0 0.0
  %1517 = vmatpush1.msra.mxu0 0.0
  %1518 = vmatprep.subr.mxu0 0.0
  %1519 = vmatpush1.msra.mxu0 0.0
  %1520 = vmatprep.subr.mxu0 0.0
  %1521 = vmatpush1.msra.mxu0 0.0
  %1522 = vmatprep.subr.mxu0 0.0
  %1523 = vmatpush1.msra.mxu0 0.0
  %1524 = vmatprep.subr.mxu0 0.0
  %1525 = vmatpush1.msra.mxu0 0.0
  %1526 = vmatprep.subr.mxu0 0.0
  %1527 = vmatpush1.msra.mxu0 %v1489
  %1528 = vmatprep.subr.mxu0 0.0
  %1529 = vmatpush2.msra.mxu0 0.0
  %1530 = vmatprep.subr.mxu0 0.0
  %1531 = vmatpush2.msra.mxu0 0.0
  %1532 = vmatprep.subr.mxu0 0.0
  %1533 = vmatpush2.msra.mxu0 0.0
  %1534 = vmatprep.subr.mxu0 0.0
  %1535 = vmatpush2.msra.mxu0 0.0
  %1536 = vmatprep.subr.mxu0 0.0
  %1537 = vmatpush2.msra.mxu0 0.0
  %1538 = vmatprep.subr.mxu0 0.0
  %1539 = vmatpush2.msra.mxu0 0.0
  %1540 = vmatprep.subr.mxu0 0.0
  %1541 = vmatpush2.msra.mxu0 0.0
  %1542 = vmatprep.subr.mxu0 0.0
  %1543 = vmatpush2.msra.mxu0 0.0
  %1544 = vmatprep.subr.mxu0 0.0
  %1545 = vmatpush2.msra.mxu0 0.0
  %1546 = vmatprep.subr.mxu0 0.0
  %1547 = vmatpush2.msra.mxu0 0.0
  %1548 = vmatprep.subr.mxu0 0.0
  %1549 = vmatpush2.msra.mxu0 0.0
  %1550 = vmatprep.subr.mxu0 0.0
  %1551 = vmatpush2.msra.mxu0 0.0
  %1552 = vmatprep.subr.mxu0 0.0
  %1553 = vmatpush2.msra.mxu0 0.0
  %1554 = vmatprep.subr.mxu0 0.0
  %1555 = vmatpush2.msra.mxu0 0.0
  %1556 = vmatprep.subr.mxu0 0.0
  %1557 = vmatpush2.msra.mxu0 0.0
  %1558 = vmatprep.subr.mxu0 0.0
  %1559 = vmatpush2.msra.mxu0 0.0
  %1560 = vmatprep.mubr.f32.mxu0 0.0
  %1561 = vmatmul.mubr.f32.gmra.mxu0 %v1491
  %v1562 = vpop.f32.mrf.mxu0
  %v1563 = vadd.f32 0.0, %v1562
  %v1564 = vpop.f32.mrf.mxu0
  %1565 = vmatprep.mubr.f32.mxu0 0.0
  %1566 = vmatmul.mubr.f32.gmra.mxu0 %v1494
  %v1567 = vpop.f32.mrf.mxu0
  %v1568 = vadd.f32 0.0, %v1567
  %v1569 = vpop.f32.mrf.mxu0
  %1570 = vdwg.mxu0
  %v1572 = vsel %vm400, %v1433, 0
  %v1575 = vsel %vm400, %v1434, 0
  %1577 = vmatprep.subr.mxu0 0.0
  %1578 = vmatpush1.msra.mxu0 0.0
  %1579 = vmatprep.subr.mxu0 0.0
  %1580 = vmatpush1.msra.mxu0 0.0
  %1581 = vmatprep.subr.mxu0 0.0
  %1582 = vmatpush1.msra.mxu0 0.0
  %1583 = vmatprep.subr.mxu0 0.0
  %1584 = vmatpush1.msra.mxu0 0.0
  %1585 = vmatprep.subr.mxu0 0.0
  %1586 = vmatpush1.msra.mxu0 0.0
  %1587 = vmatprep.subr.mxu0 0.0
  %1588 = vmatpush1.msra.mxu0 0.0
  %1589 = vmatprep.subr.mxu0 0.0
  %1590 = vmatpush1.msra.mxu0 0.0
  %1591 = vmatprep.subr.mxu0 0.0
  %1592 = vmatpush1.msra.mxu0 0.0
  %1593 = vmatprep.subr.mxu0 0.0
  %1594 = vmatpush1.msra.mxu0 0.0
  %1595 = vmatprep.subr.mxu0 0.0
  %1596 = vmatpush1.msra.mxu0 0.0
  %1597 = vmatprep.subr.mxu0 0.0
  %1598 = vmatpush1.msra.mxu0 0.0
  %1599 = vmatprep.subr.mxu0 0.0
  %1600 = vmatpush1.msra.mxu0 0.0
  %1601 = vmatprep.subr.mxu0 0.0
  %1602 = vmatpush1.msra.mxu0 0.0
  %1603 = vmatprep.subr.mxu0 0.0
  %1604 = vmatpush1.msra.mxu0 0.0
  %1605 = vmatprep.subr.mxu0 0.0
  %1606 = vmatpush1.msra.mxu0 0.0
  %1607 = vmatprep.subr.mxu0 0.0
  %1608 = vmatpush1.msra.mxu0 %v1487
  %1609 = vmatprep.subr.mxu0 0.0
  %1610 = vmatpush2.msra.mxu0 0.0
  %1611 = vmatprep.subr.mxu0 0.0
  %1612 = vmatpush2.msra.mxu0 0.0
  %1613 = vmatprep.subr.mxu0 0.0
  %1614 = vmatpush2.msra.mxu0 0.0
  %1615 = vmatprep.subr.mxu0 0.0
  %1616 = vmatpush2.msra.mxu0 0.0
  %1617 = vmatprep.subr.mxu0 0.0
  %1618 = vmatpush2.msra.mxu0 0.0
  %1619 = vmatprep.subr.mxu0 0.0
  %1620 = vmatpush2.msra.mxu0 0.0
  %1621 = vmatprep.subr.mxu0 0.0
  %1622 = vmatpush2.msra.mxu0 0.0
  %1623 = vmatprep.subr.mxu0 0.0
  %1624 = vmatpush2.msra.mxu0 0.0
  %1625 = vmatprep.subr.mxu0 0.0
  %1626 = vmatpush2.msra.mxu0 0.0
  %1627 = vmatprep.subr.mxu0 0.0
  %1628 = vmatpush2.msra.mxu0 0.0
  %1629 = vmatprep.subr.mxu0 0.0
  %1630 = vmatpush2.msra.mxu0 0.0
  %1631 = vmatprep.subr.mxu0 0.0
  %1632 = vmatpush2.msra.mxu0 0.0
  %1633 = vmatprep.subr.mxu0 0.0
  %1634 = vmatpush2.msra.mxu0 0.0
  %1635 = vmatprep.subr.mxu0 0.0
  %1636 = vmatpush2.msra.mxu0 0.0
  %1637 = vmatprep.subr.mxu0 0.0
  %1638 = vmatpush2.msra.mxu0 0.0
  %1639 = vmatprep.subr.mxu0 0.0
  %1640 = vmatpush2.msra.mxu0 0.0
  %1641 = vmatprep.mubr.f32.mxu0 0.0
  %1642 = vmatmul.mubr.f32.gmra.mxu0 %v1572
  %v1643 = vpop.f32.mrf.mxu0
  %v1644 = vadd.f32 %v1563, %v1643
  %v1645 = vpop.f32.mrf.mxu0
  %1646 = vmatprep.mubr.f32.mxu0 0.0
  %1647 = vmatmul.mubr.f32.gmra.mxu0 %v1575
  %v1648 = vpop.f32.mrf.mxu0
  %v1649 = vadd.f32 %v1568, %v1648
  %v1650 = vpop.f32.mrf.mxu0
  %1651 = vdwg.mxu0
  %s1652 = scalar_lea.vmem %s5, 21
  %v1653 = vld [vmem:[%s1652] sm:$0x1]
  %v1655 = vlaneseq
  %v1656 = vshrl.u32 %v1655, 7
  %v1657 = vsub.s32 0, %v1656
  %v1658 = vrot.slane %v1653, %v1657
  %v1660 = vadd.f32 %v1644, %v1658
  %v1661 = vadd.f32 %v1649, %v1658
  %s1662 = scalar_lea.vmem %s5, 22
  %v1663 = vld [vmem:[%s1662] sm:$0x1]
  %s1664 = scalar_lea.vmem %s5, 23
  %v1665 = vld [vmem:[%s1664] sm:$0x1]
  %v1666 = vsel %vm400, %v1660, 0.0
  %v1667 = vsel %vm400, %v1661, 0.0
  %v1668 = vadd.f32 %v1666, %v1667
  %v1669 = vrot.slane %v1668, 4
  %v1670 = vadd.f32 %v1668, %v1669
  %v1671 = vrot.slane %v1670, 2
  %v1672 = vadd.f32 %v1670, %v1671
  %v1673 = vrot.slane %v1672, 1
  %v1674 = vadd.f32 %v1672, %v1673
  %v1675 = vmul.f32 %v1674, 0.0625
  %v1676 = vmul.f32 %v1660, %v1660
  %v1677 = vmul.f32 %v1661, %v1661
  %v1678 = vsel %vm400, %v1676, 0.0
  %v1679 = vsel %vm400, %v1677, 0.0
  %v1680 = vadd.f32 %v1678, %v1679
  %v1681 = vrot.slane %v1680, 4
  %v1682 = vadd.f32 %v1680, %v1681
  %v1683 = vrot.slane %v1682, 2
  %v1684 = vadd.f32 %v1682, %v1683
  %v1685 = vrot.slane %v1684, 1
  %v1686 = vadd.f32 %v1684, %v1685
  %v1687 = vmul.f32 %v1686, 0.0625
  %v1688 = vmul.f32 %v1675, %v1675
  %v1689 = vsub.f32 %v1687, %v1688
  %v1690 = vmax.f32 %v1689, 0.0
  %v1691 = vsub.f32 %v1660, %v1675
  %v1692 = vsub.f32 %v1661, %v1675
  %v1693 = vadd.f32 %v1690, 1e-05
  %v1694 = vrsqrt.pop %v1693
  %v1695 = vmul.f32 %v1691, %v1694
  %v1696 = vmul.f32 %v1692, %v1694
  %v1698 = vlaneseq
  %v1699 = vshrl.u32 %v1698, 7
  %v1700 = vsub.s32 0, %v1699
  %v1701 = vrot.slane %v1663, %v1700
  %v1703 = vmul.f32 %v1695, %v1701
  %v1704 = vmul.f32 %v1696, %v1701
  %v1706 = vlaneseq
  %v1707 = vshrl.u32 %v1706, 7
  %v1708 = vsub.s32 0, %v1707
  %v1709 = vrot.slane %v1665, %v1708
  %v1711 = vadd.f32 %v1703, %v1709
  %v1712 = vadd.f32 %v1704, %v1709
  %vm1713 = vcmp.gt.f32.partialorder %v1711, 20.0
  %vm1714 = vcmp.gt.f32.partialorder %v1712, 20.0
  %v1715 = vmin.f32 %v1711, 20.0
  %v1716 = vmin.f32 %v1712, 20.0
  %v1717 = vmul.f32 %v1715, 1.442695
  %v1718 = vpow.pop %v1717
  %v1719 = vmul.f32 %v1716, 1.442695
  %v1720 = vpow.pop %v1719
  %v1721 = vadd.f32 %v1718, 1.0
  %v1722 = vlog2.pop %v1721
  %v1723 = vmul.f32 %v1722, 0.6931472
  %v1724 = vmul.f32 -0.5, %v1718
  %v1725 = vadd.f32 %v1724, 1.0
  %v1726 = vmul.f32 %v1725, %v1718
  %v1727 = vand.u32 2147483647, %v1718
  %vm1728 = vcmp.lt.f32.partialorder %v1727, 0.0004427343
  %v1729 = vsel %vm1728, %v1726, %v1723
  %v1730 = vadd.f32 %v1720, 1.0
  %v1731 = vlog2.pop %v1730
  %v1732 = vmul.f32 %v1731, 0.6931472
  %v1733 = vmul.f32 -0.5, %v1720
  %v1734 = vadd.f32 %v1733, 1.0
  %v1735 = vmul.f32 %v1734, %v1720
  %v1736 = vand.u32 2147483647, %v1720
  %vm1737 = vcmp.lt.f32.partialorder %v1736, 0.0004427343
  %v1738 = vsel %vm1737, %v1735, %v1732
  %v1739 = vsel %vm1713, %v1711, %v1729
  %v1740 = vsel %vm1714, %v1712, %v1738
  %v1741 = vadd.f32 %v26, %v1739
  %v1742 = vadd.f32 %v27, %v1740
  %s1743 = scalar_lea.vmem %s5, 24
  %v1744 = vld [vmem:[%s1743] sm:$0x1]
  %s1745 = scalar_lea.vmem %s5, 25
  %v1746 = vld [vmem:[%s1745] sm:$0x1]
  %v1747 = vsel %vm400, %v1741, 0.0
  %v1748 = vsel %vm400, %v1742, 0.0
  %v1749 = vadd.f32 %v1747, %v1748
  %v1750 = vrot.slane %v1749, 4
  %v1751 = vadd.f32 %v1749, %v1750
  %v1752 = vrot.slane %v1751, 2
  %v1753 = vadd.f32 %v1751, %v1752
  %v1754 = vrot.slane %v1753, 1
  %v1755 = vadd.f32 %v1753, %v1754
  %v1756 = vmul.f32 %v1755, 0.0625
  %v1757 = vmul.f32 %v1741, %v1741
  %v1758 = vmul.f32 %v1742, %v1742
  %v1759 = vsel %vm400, %v1757, 0.0
  %v1760 = vsel %vm400, %v1758, 0.0
  %v1761 = vadd.f32 %v1759, %v1760
  %v1762 = vrot.slane %v1761, 4
  %v1763 = vadd.f32 %v1761, %v1762
  %v1764 = vrot.slane %v1763, 2
  %v1765 = vadd.f32 %v1763, %v1764
  %v1766 = vrot.slane %v1765, 1
  %v1767 = vadd.f32 %v1765, %v1766
  %v1768 = vmul.f32 %v1767, 0.0625
  %v1769 = vmul.f32 %v1756, %v1756
  %v1770 = vsub.f32 %v1768, %v1769
  %v1771 = vmax.f32 %v1770, 0.0
  %v1772 = vsub.f32 %v1741, %v1756
  %v1773 = vsub.f32 %v1742, %v1756
  %v1774 = vadd.f32 %v1771, 1e-05
  %v1775 = vrsqrt.pop %v1774
  %v1776 = vmul.f32 %v1772, %v1775
  %v1777 = vmul.f32 %v1773, %v1775
  %v1779 = vlaneseq
  %v1780 = vshrl.u32 %v1779, 7
  %v1781 = vsub.s32 0, %v1780
  %v1782 = vrot.slane %v1744, %v1781
  %v1784 = vmul.f32 %v1776, %v1782
  %v1785 = vmul.f32 %v1777, %v1782
  %v1787 = vlaneseq
  %v1788 = vshrl.u32 %v1787, 7
  %v1789 = vsub.s32 0, %v1788
  %v1790 = vrot.slane %v1746, %v1789
  %v1792 = vadd.f32 %v1784, %v1790
  %v1793 = vadd.f32 %v1785, %v1790
  %1794 = vmatprep.subr.mxu0 0.0
  %1795 = vmatpush1.msra.mxu0 0.0
  %1796 = vmatprep.subr.mxu0 0.0
  %1797 = vmatpush1.msra.mxu0 0.0
  %1798 = vmatprep.subr.mxu0 0.0
  %1799 = vmatpush1.msra.mxu0 0.0
  %1800 = vmatprep.subr.mxu0 0.0
  %1801 = vmatpush1.msra.mxu0 0.0
  %1802 = vmatprep.subr.mxu0 0.0
  %1803 = vmatpush1.msra.mxu0 0.0
  %1804 = vmatprep.subr.mxu0 0.0
  %1805 = vmatpush1.msra.mxu0 0.0
  %1806 = vmatprep.subr.mxu0 0.0
  %1807 = vmatpush1.msra.mxu0 0.0
  %1808 = vmatprep.subr.mxu0 0.0
  %1809 = vmatpush1.msra.mxu0 0.0
  %1810 = vmatprep.subr.mxu0 0.0
  %1811 = vmatpush1.msra.mxu0 0.0
  %1812 = vmatprep.subr.mxu0 0.0
  %1813 = vmatpush1.msra.mxu0 0.0
  %1814 = vmatprep.subr.mxu0 0.0
  %1815 = vmatpush1.msra.mxu0 0.0
  %1816 = vmatprep.subr.mxu0 0.0
  %1817 = vmatpush1.msra.mxu0 0.0
  %1818 = vmatprep.subr.mxu0 0.0
  %1819 = vmatpush1.msra.mxu0 0.0
  %1820 = vmatprep.subr.mxu0 0.0
  %1821 = vmatpush1.msra.mxu0 0.0
  %1822 = vmatprep.subr.mxu0 0.0
  %1823 = vmatpush1.msra.mxu0 %v1793
  %1824 = vmatprep.subr.mxu0 0.0
  %1825 = vmatpush1.msra.mxu0 %v1792
  %1826 = vmatprep.subr.mxu0 0.0
  %1827 = vmatpush2.msra.mxu0 0.0
  %1828 = vmatprep.subr.mxu0 0.0
  %1829 = vmatpush2.msra.mxu0 0.0
  %1830 = vmatprep.subr.mxu0 0.0
  %1831 = vmatpush2.msra.mxu0 0.0
  %1832 = vmatprep.subr.mxu0 0.0
  %1833 = vmatpush2.msra.mxu0 0.0
  %1834 = vmatprep.subr.mxu0 0.0
  %1835 = vmatpush2.msra.mxu0 0.0
  %1836 = vmatprep.subr.mxu0 0.0
  %1837 = vmatpush2.msra.mxu0 0.0
  %1838 = vmatprep.subr.mxu0 0.0
  %1839 = vmatpush2.msra.mxu0 0.0
  %1840 = vmatprep.subr.mxu0 0.0
  %1841 = vmatpush2.msra.mxu0 0.0
  %1842 = vmatprep.subr.mxu0 0.0
  %1843 = vmatpush2.msra.mxu0 0.0
  %1844 = vmatprep.subr.mxu0 0.0
  %1845 = vmatpush2.msra.mxu0 0.0
  %1846 = vmatprep.subr.mxu0 0.0
  %1847 = vmatpush2.msra.mxu0 0.0
  %1848 = vmatprep.subr.mxu0 0.0
  %1849 = vmatpush2.msra.mxu0 0.0
  %1850 = vmatprep.subr.mxu0 0.0
  %1851 = vmatpush2.msra.mxu0 0.0
  %1852 = vmatprep.subr.mxu0 0.0
  %1853 = vmatpush2.msra.mxu0 0.0
  %1854 = vmatprep.subr.mxu0 0.0
  %1855 = vmatpush2.msra.mxu0 0.0
  %1856 = vmatprep.subr.mxu0 0.0
  %1857 = vmatpush2.msra.mxu0 0.0
  %1858 = vmatprep.mubr.f32.mxu0 0.0
  %1859 = vmatmul.mubr.f32.gmra.mxu0 %v204
  %v1860 = vpop.f32.mrf.mxu0
  %v1861 = vadd.f32 0.0, %v1860
  %v1862 = vpop.f32.mrf.mxu0
  %1863 = vmatprep.mubr.f32.mxu0 0.0
  %1864 = vmatmul.mubr.f32.gmra.mxu0 %v207
  %v1865 = vpop.f32.mrf.mxu0
  %v1866 = vadd.f32 0.0, %v1865
  %v1867 = vpop.f32.mrf.mxu0
  %1868 = vmatprep.mubr.f32.mxu0 0.0
  %1869 = vmatmul.mubr.f32.gmra.mxu0 %v210
  %v1870 = vpop.f32.mrf.mxu0
  %v1871 = vadd.f32 0.0, %v1870
  %v1872 = vpop.f32.mrf.mxu0
  %1873 = vmatprep.mubr.f32.mxu0 0.0
  %1874 = vmatmul.mubr.f32.gmra.mxu0 %v213
  %v1875 = vpop.f32.mrf.mxu0
  %v1876 = vadd.f32 0.0, %v1875
  %v1877 = vpop.f32.mrf.mxu0
  %1878 = vdwg.mxu0
  %1879 = vmatprep.subr.mxu0 0.0
  %1880 = vmatpush1.msra.mxu0 0.0
  %1881 = vmatprep.subr.mxu0 0.0
  %1882 = vmatpush1.msra.mxu0 0.0
  %1883 = vmatprep.subr.mxu0 0.0
  %1884 = vmatpush1.msra.mxu0 0.0
  %1885 = vmatprep.subr.mxu0 0.0
  %1886 = vmatpush1.msra.mxu0 0.0
  %1887 = vmatprep.subr.mxu0 0.0
  %1888 = vmatpush1.msra.mxu0 0.0
  %1889 = vmatprep.subr.mxu0 0.0
  %1890 = vmatpush1.msra.mxu0 0.0
  %1891 = vmatprep.subr.mxu0 0.0
  %1892 = vmatpush1.msra.mxu0 0.0
  %1893 = vmatprep.subr.mxu0 0.0
  %1894 = vmatpush1.msra.mxu0 0.0
  %1895 = vmatprep.subr.mxu0 0.0
  %1896 = vmatpush1.msra.mxu0 0.0
  %1897 = vmatprep.subr.mxu0 0.0
  %1898 = vmatpush1.msra.mxu0 0.0
  %1899 = vmatprep.subr.mxu0 0.0
  %1900 = vmatpush1.msra.mxu0 0.0
  %1901 = vmatprep.subr.mxu0 0.0
  %1902 = vmatpush1.msra.mxu0 0.0
  %1903 = vmatprep.subr.mxu0 0.0
  %1904 = vmatpush1.msra.mxu0 0.0
  %1905 = vmatprep.subr.mxu0 0.0
  %1906 = vmatpush1.msra.mxu0 0.0
  %1907 = vmatprep.subr.mxu0 0.0
  %1908 = vmatpush1.msra.mxu0 %v1793
  %1909 = vmatprep.subr.mxu0 0.0
  %1910 = vmatpush1.msra.mxu0 %v1792
  %1911 = vmatprep.subr.mxu0 0.0
  %1912 = vmatpush2.msra.mxu0 0.0
  %1913 = vmatprep.subr.mxu0 0.0
  %1914 = vmatpush2.msra.mxu0 0.0
  %1915 = vmatprep.subr.mxu0 0.0
  %1916 = vmatpush2.msra.mxu0 0.0
  %1917 = vmatprep.subr.mxu0 0.0
  %1918 = vmatpush2.msra.mxu0 0.0
  %1919 = vmatprep.subr.mxu0 0.0
  %1920 = vmatpush2.msra.mxu0 0.0
  %1921 = vmatprep.subr.mxu0 0.0
  %1922 = vmatpush2.msra.mxu0 0.0
  %1923 = vmatprep.subr.mxu0 0.0
  %1924 = vmatpush2.msra.mxu0 0.0
  %1925 = vmatprep.subr.mxu0 0.0
  %1926 = vmatpush2.msra.mxu0 0.0
  %1927 = vmatprep.subr.mxu0 0.0
  %1928 = vmatpush2.msra.mxu0 0.0
  %1929 = vmatprep.subr.mxu0 0.0
  %1930 = vmatpush2.msra.mxu0 0.0
  %1931 = vmatprep.subr.mxu0 0.0
  %1932 = vmatpush2.msra.mxu0 0.0
  %1933 = vmatprep.subr.mxu0 0.0
  %1934 = vmatpush2.msra.mxu0 0.0
  %1935 = vmatprep.subr.mxu0 0.0
  %1936 = vmatpush2.msra.mxu0 0.0
  %1937 = vmatprep.subr.mxu0 0.0
  %1938 = vmatpush2.msra.mxu0 0.0
  %1939 = vmatprep.subr.mxu0 0.0
  %1940 = vmatpush2.msra.mxu0 0.0
  %1941 = vmatprep.subr.mxu0 0.0
  %1942 = vmatpush2.msra.mxu0 0.0
  %1943 = vmatprep.mubr.f32.mxu0 0.0
  %1944 = vmatmul.mubr.f32.gmra.mxu0 %v301
  %v1945 = vpop.f32.mrf.mxu0
  %v1946 = vadd.f32 0.0, %v1945
  %v1947 = vpop.f32.mrf.mxu0
  %1948 = vmatprep.mubr.f32.mxu0 0.0
  %1949 = vmatmul.mubr.f32.gmra.mxu0 %v304
  %v1950 = vpop.f32.mrf.mxu0
  %v1951 = vadd.f32 0.0, %v1950
  %v1952 = vpop.f32.mrf.mxu0
  %1953 = vmatprep.mubr.f32.mxu0 0.0
  %1954 = vmatmul.mubr.f32.gmra.mxu0 %v307
  %v1955 = vpop.f32.mrf.mxu0
  %v1956 = vadd.f32 0.0, %v1955
  %v1957 = vpop.f32.mrf.mxu0
  %1958 = vmatprep.mubr.f32.mxu0 0.0
  %1959 = vmatmul.mubr.f32.gmra.mxu0 %v310
  %v1960 = vpop.f32.mrf.mxu0
  %v1961 = vadd.f32 0.0, %v1960
  %v1962 = vpop.f32.mrf.mxu0
  %1963 = vdwg.mxu0
  %s1964 = scalar_lea.vmem %s5, 26
  %v1965 = vld [vmem:[%s1964] sm:$0x1]
  %s1966 = scalar_lea.vmem %s5, 27
  %v1967 = vld [vmem:[%s1966] sm:$0x1]
  %v1968 = vsel %vm400, %v1861, 0.0
  %v1969 = vsel %vm400, %v1866, 0.0
  %v1970 = vadd.f32 %v1968, %v1969
  %v1971 = vsel %vm400, %v1871, 0.0
  %v1972 = vadd.f32 %v1970, %v1971
  %v1973 = vsel %vm400, %v1876, 0.0
  %v1974 = vadd.f32 %v1972, %v1973
  %v1975 = vrot.slane %v1974, 4
  %v1976 = vadd.f32 %v1974, %v1975
  %v1977 = vrot.slane %v1976, 2
  %v1978 = vadd.f32 %v1976, %v1977
  %v1979 = vrot.slane %v1978, 1
  %v1980 = vadd.f32 %v1978, %v1979
  %v1981 = vmul.f32 %v1980, 0.03125
  %v1982 = vmul.f32 %v1861, %v1861
  %v1983 = vmul.f32 %v1866, %v1866
  %v1984 = vmul.f32 %v1871, %v1871
  %v1985 = vmul.f32 %v1876, %v1876
  %v1986 = vsel %vm400, %v1982, 0.0
  %v1987 = vsel %vm400, %v1983, 0.0
  %v1988 = vadd.f32 %v1986, %v1987
  %v1989 = vsel %vm400, %v1984, 0.0
  %v1990 = vadd.f32 %v1988, %v1989
  %v1991 = vsel %vm400, %v1985, 0.0
  %v1992 = vadd.f32 %v1990, %v1991
  %v1993 = vrot.slane %v1992, 4
  %v1994 = vadd.f32 %v1992, %v1993
  %v1995 = vrot.slane %v1994, 2
  %v1996 = vadd.f32 %v1994, %v1995
  %v1997 = vrot.slane %v1996, 1
  %v1998 = vadd.f32 %v1996, %v1997
  %v1999 = vmul.f32 %v1998, 0.03125
  %v2000 = vmul.f32 %v1981, %v1981
  %v2001 = vsub.f32 %v1999, %v2000
  %v2002 = vmax.f32 %v2001, 0.0
  %v2003 = vsub.f32 %v1861, %v1981
  %v2004 = vsub.f32 %v1866, %v1981
  %v2005 = vsub.f32 %v1871, %v1981
  %v2006 = vsub.f32 %v1876, %v1981
  %v2007 = vadd.f32 %v2002, 1e-05
  %v2008 = vrsqrt.pop %v2007
  %v2009 = vmul.f32 %v2003, %v2008
  %v2010 = vmul.f32 %v2004, %v2008
  %v2011 = vmul.f32 %v2005, %v2008
  %v2012 = vmul.f32 %v2006, %v2008
  %v2014 = vlaneseq
  %v2015 = vshrl.u32 %v2014, 7
  %v2016 = vsub.s32 0, %v2015
  %v2017 = vrot.slane %v1965, %v2016
  %v2019 = vmul.f32 %v2009, %v2017
  %v2020 = vmul.f32 %v2010, %v2017
  %v2021 = vmul.f32 %v2011, %v2017
  %v2022 = vmul.f32 %v2012, %v2017
  %v2024 = vlaneseq
  %v2025 = vshrl.u32 %v2024, 7
  %v2026 = vsub.s32 0, %v2025
  %v2027 = vrot.slane %v1967, %v2026
  %v2029 = vadd.f32 %v2019, %v2027
  %v2030 = vadd.f32 %v2020, %v2027
  %v2031 = vadd.f32 %v2021, %v2027
  %v2032 = vadd.f32 %v2022, %v2027
  %s2033 = scalar_lea.vmem %s5, 28
  %v2034 = vld [vmem:[%s2033] sm:$0x1]
  %s2035 = scalar_lea.vmem %s5, 29
  %v2036 = vld [vmem:[%s2035] sm:$0x1]
  %v2037 = vsel %vm400, %v1946, 0.0
  %v2038 = vsel %vm400, %v1951, 0.0
  %v2039 = vadd.f32 %v2037, %v2038
  %v2040 = vsel %vm400, %v1956, 0.0
  %v2041 = vadd.f32 %v2039, %v2040
  %v2042 = vsel %vm400, %v1961, 0.0
  %v2043 = vadd.f32 %v2041, %v2042
  %v2044 = vrot.slane %v2043, 4
  %v2045 = vadd.f32 %v2043, %v2044
  %v2046 = vrot.slane %v2045, 2
  %v2047 = vadd.f32 %v2045, %v2046
  %v2048 = vrot.slane %v2047, 1
  %v2049 = vadd.f32 %v2047, %v2048
  %v2050 = vmul.f32 %v2049, 0.03125
  %v2051 = vmul.f32 %v1946, %v1946
  %v2052 = vmul.f32 %v1951, %v1951
  %v2053 = vmul.f32 %v1956, %v1956
  %v2054 = vmul.f32 %v1961, %v1961
  %v2055 = vsel %vm400, %v2051, 0.0
  %v2056 = vsel %vm400, %v2052, 0.0
  %v2057 = vadd.f32 %v2055, %v2056
  %v2058 = vsel %vm400, %v2053, 0.0
  %v2059 = vadd.f32 %v2057, %v2058
  %v2060 = vsel %vm400, %v2054, 0.0
  %v2061 = vadd.f32 %v2059, %v2060
  %v2062 = vrot.slane %v2061, 4
  %v2063 = vadd.f32 %v2061, %v2062
  %v2064 = vrot.slane %v2063, 2
  %v2065 = vadd.f32 %v2063, %v2064
  %v2066 = vrot.slane %v2065, 1
  %v2067 = vadd.f32 %v2065, %v2066
  %v2068 = vmul.f32 %v2067, 0.03125
  %v2069 = vmul.f32 %v2050, %v2050
  %v2070 = vsub.f32 %v2068, %v2069
  %v2071 = vmax.f32 %v2070, 0.0
  %v2072 = vsub.f32 %v1946, %v2050
  %v2073 = vsub.f32 %v1951, %v2050
  %v2074 = vsub.f32 %v1956, %v2050
  %v2075 = vsub.f32 %v1961, %v2050
  %v2076 = vadd.f32 %v2071, 1e-05
  %v2077 = vrsqrt.pop %v2076
  %v2078 = vmul.f32 %v2072, %v2077
  %v2079 = vmul.f32 %v2073, %v2077
  %v2080 = vmul.f32 %v2074, %v2077
  %v2081 = vmul.f32 %v2075, %v2077
  %v2083 = vlaneseq
  %v2084 = vshrl.u32 %v2083, 7
  %v2085 = vsub.s32 0, %v2084
  %v2086 = vrot.slane %v2034, %v2085
  %v2088 = vmul.f32 %v2078, %v2086
  %v2089 = vmul.f32 %v2079, %v2086
  %v2090 = vmul.f32 %v2080, %v2086
  %v2091 = vmul.f32 %v2081, %v2086
  %v2093 = vlaneseq
  %v2094 = vshrl.u32 %v2093, 7
  %v2095 = vsub.s32 0, %v2094
  %v2096 = vrot.slane %v2036, %v2095
  %v2098 = vadd.f32 %v2088, %v2096
  %v2099 = vadd.f32 %v2089, %v2096
  %v2100 = vadd.f32 %v2090, %v2096
  %v2101 = vadd.f32 %v2091, %v2096
  %s2102 = scalar_lea.vmem %s5, 30
  %v2103 = vld [vmem:[%s2102] sm:$0x1]
  %s2104 = scalar_lea.vmem %s5, 31
  %v2105 = vld [vmem:[%s2104] sm:$0x1]
  %v2106 = vsel %vm400, %v2029, 0.0
  %v2107 = vsel %vm400, %v2030, 0.0
  %v2108 = vadd.f32 %v2106, %v2107
  %v2109 = vsel %vm400, %v2031, 0.0
  %v2110 = vadd.f32 %v2108, %v2109
  %v2111 = vsel %vm400, %v2032, 0.0
  %v2112 = vadd.f32 %v2110, %v2111
  %v2113 = vrot.slane %v2112, 4
  %v2114 = vadd.f32 %v2112, %v2113
  %v2115 = vrot.slane %v2114, 2
  %v2116 = vadd.f32 %v2114, %v2115
  %v2117 = vrot.slane %v2116, 1
  %v2118 = vadd.f32 %v2116, %v2117
  %v2119 = vmul.f32 %v2118, 0.03125
  %v2120 = vmul.f32 %v2029, %v2029
  %v2121 = vmul.f32 %v2030, %v2030
  %v2122 = vmul.f32 %v2031, %v2031
  %v2123 = vmul.f32 %v2032, %v2032
  %v2124 = vsel %vm400, %v2120, 0.0
  %v2125 = vsel %vm400, %v2121, 0.0
  %v2126 = vadd.f32 %v2124, %v2125
  %v2127 = vsel %vm400, %v2122, 0.0
  %v2128 = vadd.f32 %v2126, %v2127
  %v2129 = vsel %vm400, %v2123, 0.0
  %v2130 = vadd.f32 %v2128, %v2129
  %v2131 = vrot.slane %v2130, 4
  %v2132 = vadd.f32 %v2130, %v2131
  %v2133 = vrot.slane %v2132, 2
  %v2134 = vadd.f32 %v2132, %v2133
  %v2135 = vrot.slane %v2134, 1
  %v2136 = vadd.f32 %v2134, %v2135
  %v2137 = vmul.f32 %v2136, 0.03125
  %v2138 = vmul.f32 %v2119, %v2119
  %v2139 = vsub.f32 %v2137, %v2138
  %v2140 = vmax.f32 %v2139, 0.0
  %v2141 = vsub.f32 %v2029, %v2119
  %v2142 = vsub.f32 %v2030, %v2119
  %v2143 = vsub.f32 %v2031, %v2119
  %v2144 = vsub.f32 %v2032, %v2119
  %v2145 = vadd.f32 %v2140, 1e-05
  %v2146 = vrsqrt.pop %v2145
  %v2147 = vmul.f32 %v2141, %v2146
  %v2148 = vmul.f32 %v2142, %v2146
  %v2149 = vmul.f32 %v2143, %v2146
  %v2150 = vmul.f32 %v2144, %v2146
  %v2152 = vlaneseq
  %v2153 = vshrl.u32 %v2152, 7
  %v2154 = vsub.s32 0, %v2153
  %v2155 = vrot.slane %v2103, %v2154
  %v2157 = vmul.f32 %v2147, %v2155
  %v2158 = vmul.f32 %v2148, %v2155
  %v2159 = vmul.f32 %v2149, %v2155
  %v2160 = vmul.f32 %v2150, %v2155
  %v2162 = vlaneseq
  %v2163 = vshrl.u32 %v2162, 7
  %v2164 = vsub.s32 0, %v2163
  %v2165 = vrot.slane %v2105, %v2164
  %v2167 = vadd.f32 %v2157, %v2165
  %v2168 = vadd.f32 %v2158, %v2165
  %v2169 = vadd.f32 %v2159, %v2165
  %v2170 = vadd.f32 %v2160, %v2165
  %s2171 = scalar_lea.vmem %s5, 32
  %v2172 = vld [vmem:[%s2171] sm:$0x1]
  %s2173 = scalar_lea.vmem %s5, 33
  %v2174 = vld [vmem:[%s2173] sm:$0x1]
  %v2175 = vsel %vm400, %v2098, 0.0
  %v2176 = vsel %vm400, %v2099, 0.0
  %v2177 = vadd.f32 %v2175, %v2176
  %v2178 = vsel %vm400, %v2100, 0.0
  %v2179 = vadd.f32 %v2177, %v2178
  %v2180 = vsel %vm400, %v2101, 0.0
  %v2181 = vadd.f32 %v2179, %v2180
  %v2182 = vrot.slane %v2181, 4
  %v2183 = vadd.f32 %v2181, %v2182
  %v2184 = vrot.slane %v2183, 2
  %v2185 = vadd.f32 %v2183, %v2184
  %v2186 = vrot.slane %v2185, 1
  %v2187 = vadd.f32 %v2185, %v2186
  %v2188 = vmul.f32 %v2187, 0.03125
  %v2189 = vmul.f32 %v2098, %v2098
  %v2190 = vmul.f32 %v2099, %v2099
  %v2191 = vmul.f32 %v2100, %v2100
  %v2192 = vmul.f32 %v2101, %v2101
  %v2193 = vsel %vm400, %v2189, 0.0
  %v2194 = vsel %vm400, %v2190, 0.0
  %v2195 = vadd.f32 %v2193, %v2194
  %v2196 = vsel %vm400, %v2191, 0.0
  %v2197 = vadd.f32 %v2195, %v2196
  %v2198 = vsel %vm400, %v2192, 0.0
  %v2199 = vadd.f32 %v2197, %v2198
  %v2200 = vrot.slane %v2199, 4
  %v2201 = vadd.f32 %v2199, %v2200
  %v2202 = vrot.slane %v2201, 2
  %v2203 = vadd.f32 %v2201, %v2202
  %v2204 = vrot.slane %v2203, 1
  %v2205 = vadd.f32 %v2203, %v2204
  %v2206 = vmul.f32 %v2205, 0.03125
  %v2207 = vmul.f32 %v2188, %v2188
  %v2208 = vsub.f32 %v2206, %v2207
  %v2209 = vmax.f32 %v2208, 0.0
  %v2210 = vsub.f32 %v2098, %v2188
  %v2211 = vsub.f32 %v2099, %v2188
  %v2212 = vsub.f32 %v2100, %v2188
  %v2213 = vsub.f32 %v2101, %v2188
  %v2214 = vadd.f32 %v2209, 1e-05
  %v2215 = vrsqrt.pop %v2214
  %v2216 = vmul.f32 %v2210, %v2215
  %v2217 = vmul.f32 %v2211, %v2215
  %v2218 = vmul.f32 %v2212, %v2215
  %v2219 = vmul.f32 %v2213, %v2215
  %v2221 = vlaneseq
  %v2222 = vshrl.u32 %v2221, 7
  %v2223 = vsub.s32 0, %v2222
  %v2224 = vrot.slane %v2172, %v2223
  %v2226 = vmul.f32 %v2216, %v2224
  %v2227 = vmul.f32 %v2217, %v2224
  %v2228 = vmul.f32 %v2218, %v2224
  %v2229 = vmul.f32 %v2219, %v2224
  %v2231 = vlaneseq
  %v2232 = vshrl.u32 %v2231, 7
  %v2233 = vsub.s32 0, %v2232
  %v2234 = vrot.slane %v2174, %v2233
  %v2236 = vadd.f32 %v2226, %v2234
  %v2237 = vadd.f32 %v2227, %v2234
  %v2238 = vadd.f32 %v2228, %v2234
  %v2239 = vadd.f32 %v2229, %v2234
  %s2240 = scalar_lea.vmem %s5, 34
  %v2241 = vld [vmem:[%s2240] sm:$0x1]
  %s2242 = scalar_lea.vmem %s5, 35
  %v2243 = vld [vmem:[%s2242] sm:$0x1]
  %v2244 = vsel %vm400, %v1248, 0.0
  %v2245 = vsel %vm400, %v1249, 0.0
  %v2246 = vadd.f32 %v2244, %v2245
  %v2247 = vsel %vm400, %v1250, 0.0
  %v2248 = vadd.f32 %v2246, %v2247
  %v2249 = vsel %vm400, %v1251, 0.0
  %v2250 = vadd.f32 %v2248, %v2249
  %v2251 = vrot.slane %v2250, 4
  %v2252 = vadd.f32 %v2250, %v2251
  %v2253 = vrot.slane %v2252, 2
  %v2254 = vadd.f32 %v2252, %v2253
  %v2255 = vrot.slane %v2254, 1
  %v2256 = vadd.f32 %v2254, %v2255
  %v2257 = vmul.f32 %v2256, 0.03125
  %v2258 = vmul.f32 %v1248, %v1248
  %v2259 = vmul.f32 %v1249, %v1249
  %v2260 = vmul.f32 %v1250, %v1250
  %v2261 = vmul.f32 %v1251, %v1251
  %v2262 = vsel %vm400, %v2258, 0.0
  %v2263 = vsel %vm400, %v2259, 0.0
  %v2264 = vadd.f32 %v2262, %v2263
  %v2265 = vsel %vm400, %v2260, 0.0
  %v2266 = vadd.f32 %v2264, %v2265
  %v2267 = vsel %vm400, %v2261, 0.0
  %v2268 = vadd.f32 %v2266, %v2267
  %v2269 = vrot.slane %v2268, 4
  %v2270 = vadd.f32 %v2268, %v2269
  %v2271 = vrot.slane %v2270, 2
  %v2272 = vadd.f32 %v2270, %v2271
  %v2273 = vrot.slane %v2272, 1
  %v2274 = vadd.f32 %v2272, %v2273
  %v2275 = vmul.f32 %v2274, 0.03125
  %v2276 = vmul.f32 %v2257, %v2257
  %v2277 = vsub.f32 %v2275, %v2276
  %v2278 = vmax.f32 %v2277, 0.0
  %v2279 = vsub.f32 %v1248, %v2257
  %v2280 = vsub.f32 %v1249, %v2257
  %v2281 = vsub.f32 %v1250, %v2257
  %v2282 = vsub.f32 %v1251, %v2257
  %v2283 = vadd.f32 %v2278, 1e-05
  %v2284 = vrsqrt.pop %v2283
  %v2285 = vmul.f32 %v2279, %v2284
  %v2286 = vmul.f32 %v2280, %v2284
  %v2287 = vmul.f32 %v2281, %v2284
  %v2288 = vmul.f32 %v2282, %v2284
  %v2290 = vlaneseq
  %v2291 = vshrl.u32 %v2290, 7
  %v2292 = vsub.s32 0, %v2291
  %v2293 = vrot.slane %v2241, %v2292
  %v2295 = vmul.f32 %v2285, %v2293
  %v2296 = vmul.f32 %v2286, %v2293
  %v2297 = vmul.f32 %v2287, %v2293
  %v2298 = vmul.f32 %v2288, %v2293
  %v2300 = vlaneseq
  %v2301 = vshrl.u32 %v2300, 7
  %v2302 = vsub.s32 0, %v2301
  %v2303 = vrot.slane %v2243, %v2302
  %v2305 = vadd.f32 %v2295, %v2303
  %v2306 = vadd.f32 %v2296, %v2303
  %v2307 = vadd.f32 %v2297, %v2303
  %v2308 = vadd.f32 %v2298, %v2303
  %s2309 = scalar_lea.vmem %s6, 40
  %v2310 = vld [vmem:[%s2309] sm:$0xff]
  %s2311 = scalar_lea.vmem %s6, 48
  %v2312 = vld [vmem:[%s2311] sm:$0xff]
  %v2314 = vsel %vm400, %v2236, 0
  %v2317 = vsel %vm400, %v2237, 0
  %v2320 = vsel %vm400, %v2238, 0
  %v2323 = vsel %vm400, %v2239, 0
  %2325 = vmatprep.subr.mxu0 0.0
  %2326 = vmatpush1.msra.mxu0 0.0
  %2327 = vmatprep.subr.mxu0 0.0
  %2328 = vmatpush1.msra.mxu0 0.0
  %2329 = vmatprep.subr.mxu0 0.0
  %2330 = vmatpush1.msra.mxu0 0.0
  %2331 = vmatprep.subr.mxu0 0.0
  %2332 = vmatpush1.msra.mxu0 0.0
  %2333 = vmatprep.subr.mxu0 0.0
  %2334 = vmatpush1.msra.mxu0 0.0
  %2335 = vmatprep.subr.mxu0 0.0
  %2336 = vmatpush1.msra.mxu0 0.0
  %2337 = vmatprep.subr.mxu0 0.0
  %2338 = vmatpush1.msra.mxu0 0.0
  %2339 = vmatprep.subr.mxu0 0.0
  %2340 = vmatpush1.msra.mxu0 0.0
  %2341 = vmatprep.subr.mxu0 0.0
  %2342 = vmatpush1.msra.mxu0 0.0
  %2343 = vmatprep.subr.mxu0 0.0
  %2344 = vmatpush1.msra.mxu0 0.0
  %2345 = vmatprep.subr.mxu0 0.0
  %2346 = vmatpush1.msra.mxu0 0.0
  %2347 = vmatprep.subr.mxu0 0.0
  %2348 = vmatpush1.msra.mxu0 0.0
  %2349 = vmatprep.subr.mxu0 0.0
  %2350 = vmatpush1.msra.mxu0 0.0
  %2351 = vmatprep.subr.mxu0 0.0
  %2352 = vmatpush1.msra.mxu0 0.0
  %2353 = vmatprep.subr.mxu0 0.0
  %2354 = vmatpush1.msra.mxu0 0.0
  %2355 = vmatprep.subr.mxu0 0.0
  %2356 = vmatpush1.msra.mxu0 %v2312
  %2357 = vmatprep.subr.mxu0 0.0
  %2358 = vmatpush2.msra.mxu0 0.0
  %2359 = vmatprep.subr.mxu0 0.0
  %2360 = vmatpush2.msra.mxu0 0.0
  %2361 = vmatprep.subr.mxu0 0.0
  %2362 = vmatpush2.msra.mxu0 0.0
  %2363 = vmatprep.subr.mxu0 0.0
  %2364 = vmatpush2.msra.mxu0 0.0
  %2365 = vmatprep.subr.mxu0 0.0
  %2366 = vmatpush2.msra.mxu0 0.0
  %2367 = vmatprep.subr.mxu0 0.0
  %2368 = vmatpush2.msra.mxu0 0.0
  %2369 = vmatprep.subr.mxu0 0.0
  %2370 = vmatpush2.msra.mxu0 0.0
  %2371 = vmatprep.subr.mxu0 0.0
  %2372 = vmatpush2.msra.mxu0 0.0
  %2373 = vmatprep.subr.mxu0 0.0
  %2374 = vmatpush2.msra.mxu0 0.0
  %2375 = vmatprep.subr.mxu0 0.0
  %2376 = vmatpush2.msra.mxu0 0.0
  %2377 = vmatprep.subr.mxu0 0.0
  %2378 = vmatpush2.msra.mxu0 0.0
  %2379 = vmatprep.subr.mxu0 0.0
  %2380 = vmatpush2.msra.mxu0 0.0
  %2381 = vmatprep.subr.mxu0 0.0
  %2382 = vmatpush2.msra.mxu0 0.0
  %2383 = vmatprep.subr.mxu0 0.0
  %2384 = vmatpush2.msra.mxu0 0.0
  %2385 = vmatprep.subr.mxu0 0.0
  %2386 = vmatpush2.msra.mxu0 0.0
  %2387 = vmatprep.subr.mxu0 0.0
  %2388 = vmatpush2.msra.mxu0 0.0
  %2389 = vmatprep.mubr.f32.mxu0 0.0
  %2390 = vmatmul.mubr.f32.gmra.mxu0 %v2314
  %v2391 = vpop.f32.mrf.mxu0
  %v2392 = vadd.f32 0.0, %v2391
  %v2393 = vpop.f32.mrf.mxu0
  %2394 = vmatprep.mubr.f32.mxu0 0.0
  %2395 = vmatmul.mubr.f32.gmra.mxu0 %v2317
  %v2396 = vpop.f32.mrf.mxu0
  %v2397 = vadd.f32 0.0, %v2396
  %v2398 = vpop.f32.mrf.mxu0
  %2399 = vmatprep.mubr.f32.mxu0 0.0
  %2400 = vmatmul.mubr.f32.gmra.mxu0 %v2320
  %v2401 = vpop.f32.mrf.mxu0
  %v2402 = vadd.f32 0.0, %v2401
  %v2403 = vpop.f32.mrf.mxu0
  %2404 = vmatprep.mubr.f32.mxu0 0.0
  %2405 = vmatmul.mubr.f32.gmra.mxu0 %v2323
  %v2406 = vpop.f32.mrf.mxu0
  %v2407 = vadd.f32 0.0, %v2406
  %v2408 = vpop.f32.mrf.mxu0
  %2409 = vdwg.mxu0
  %v2411 = vsel %vm400, %v2167, 0
  %v2414 = vsel %vm400, %v2168, 0
  %v2417 = vsel %vm400, %v2169, 0
  %v2420 = vsel %vm400, %v2170, 0
  %2422 = vmatprep.subr.mxu0 0.0
  %2423 = vmatpush1.msra.mxu0 0.0
  %2424 = vmatprep.subr.mxu0 0.0
  %2425 = vmatpush1.msra.mxu0 0.0
  %2426 = vmatprep.subr.mxu0 0.0
  %2427 = vmatpush1.msra.mxu0 0.0
  %2428 = vmatprep.subr.mxu0 0.0
  %2429 = vmatpush1.msra.mxu0 0.0
  %2430 = vmatprep.subr.mxu0 0.0
  %2431 = vmatpush1.msra.mxu0 0.0
  %2432 = vmatprep.subr.mxu0 0.0
  %2433 = vmatpush1.msra.mxu0 0.0
  %2434 = vmatprep.subr.mxu0 0.0
  %2435 = vmatpush1.msra.mxu0 0.0
  %2436 = vmatprep.subr.mxu0 0.0
  %2437 = vmatpush1.msra.mxu0 0.0
  %2438 = vmatprep.subr.mxu0 0.0
  %2439 = vmatpush1.msra.mxu0 0.0
  %2440 = vmatprep.subr.mxu0 0.0
  %2441 = vmatpush1.msra.mxu0 0.0
  %2442 = vmatprep.subr.mxu0 0.0
  %2443 = vmatpush1.msra.mxu0 0.0
  %2444 = vmatprep.subr.mxu0 0.0
  %2445 = vmatpush1.msra.mxu0 0.0
  %2446 = vmatprep.subr.mxu0 0.0
  %2447 = vmatpush1.msra.mxu0 0.0
  %2448 = vmatprep.subr.mxu0 0.0
  %2449 = vmatpush1.msra.mxu0 0.0
  %2450 = vmatprep.subr.mxu0 0.0
  %2451 = vmatpush1.msra.mxu0 0.0
  %2452 = vmatprep.subr.mxu0 0.0
  %2453 = vmatpush1.msra.mxu0 %v2310
  %2454 = vmatprep.subr.mxu0 0.0
  %2455 = vmatpush2.msra.mxu0 0.0
  %2456 = vmatprep.subr.mxu0 0.0
  %2457 = vmatpush2.msra.mxu0 0.0
  %2458 = vmatprep.subr.mxu0 0.0
  %2459 = vmatpush2.msra.mxu0 0.0
  %2460 = vmatprep.subr.mxu0 0.0
  %2461 = vmatpush2.msra.mxu0 0.0
  %2462 = vmatprep.subr.mxu0 0.0
  %2463 = vmatpush2.msra.mxu0 0.0
  %2464 = vmatprep.subr.mxu0 0.0
  %2465 = vmatpush2.msra.mxu0 0.0
  %2466 = vmatprep.subr.mxu0 0.0
  %2467 = vmatpush2.msra.mxu0 0.0
  %2468 = vmatprep.subr.mxu0 0.0
  %2469 = vmatpush2.msra.mxu0 0.0
  %2470 = vmatprep.subr.mxu0 0.0
  %2471 = vmatpush2.msra.mxu0 0.0
  %2472 = vmatprep.subr.mxu0 0.0
  %2473 = vmatpush2.msra.mxu0 0.0
  %2474 = vmatprep.subr.mxu0 0.0
  %2475 = vmatpush2.msra.mxu0 0.0
  %2476 = vmatprep.subr.mxu0 0.0
  %2477 = vmatpush2.msra.mxu0 0.0
  %2478 = vmatprep.subr.mxu0 0.0
  %2479 = vmatpush2.msra.mxu0 0.0
  %2480 = vmatprep.subr.mxu0 0.0
  %2481 = vmatpush2.msra.mxu0 0.0
  %2482 = vmatprep.subr.mxu0 0.0
  %2483 = vmatpush2.msra.mxu0 0.0
  %2484 = vmatprep.subr.mxu0 0.0
  %2485 = vmatpush2.msra.mxu0 0.0
  %2486 = vmatprep.mubr.f32.mxu0 0.0
  %2487 = vmatmul.mubr.f32.gmra.mxu0 %v2411
  %v2488 = vpop.f32.mrf.mxu0
  %v2489 = vadd.f32 %v2392, %v2488
  %v2490 = vpop.f32.mrf.mxu0
  %2491 = vmatprep.mubr.f32.mxu0 0.0
  %2492 = vmatmul.mubr.f32.gmra.mxu0 %v2414
  %v2493 = vpop.f32.mrf.mxu0
  %v2494 = vadd.f32 %v2397, %v2493
  %v2495 = vpop.f32.mrf.mxu0
  %2496 = vmatprep.mubr.f32.mxu0 0.0
  %2497 = vmatmul.mubr.f32.gmra.mxu0 %v2417
  %v2498 = vpop.f32.mrf.mxu0
  %v2499 = vadd.f32 %v2402, %v2498
  %v2500 = vpop.f32.mrf.mxu0
  %2501 = vmatprep.mubr.f32.mxu0 0.0
  %2502 = vmatmul.mubr.f32.gmra.mxu0 %v2420
  %v2503 = vpop.f32.mrf.mxu0
  %v2504 = vadd.f32 %v2407, %v2503
  %v2505 = vpop.f32.mrf.mxu0
  %2506 = vdwg.mxu0
  %s2507 = scalar_lea.vmem %s6, 56
  %v2508 = vld [vmem:[%s2507] sm:$0xff]
  %v2510 = vsel %vm400, %v2305, 0
  %v2513 = vsel %vm400, %v2306, 0
  %v2516 = vsel %vm400, %v2307, 0
  %v2519 = vsel %vm400, %v2308, 0
  %2521 = vmatprep.subr.mxu0 0.0
  %2522 = vmatpush1.msra.mxu0 0.0
  %2523 = vmatprep.subr.mxu0 0.0
  %2524 = vmatpush1.msra.mxu0 0.0
  %2525 = vmatprep.subr.mxu0 0.0
  %2526 = vmatpush1.msra.mxu0 0.0
  %2527 = vmatprep.subr.mxu0 0.0
  %2528 = vmatpush1.msra.mxu0 0.0
  %2529 = vmatprep.subr.mxu0 0.0
  %2530 = vmatpush1.msra.mxu0 0.0
  %2531 = vmatprep.subr.mxu0 0.0
  %2532 = vmatpush1.msra.mxu0 0.0
  %2533 = vmatprep.subr.mxu0 0.0
  %2534 = vmatpush1.msra.mxu0 0.0
  %2535 = vmatprep.subr.mxu0 0.0
  %2536 = vmatpush1.msra.mxu0 0.0
  %2537 = vmatprep.subr.mxu0 0.0
  %2538 = vmatpush1.msra.mxu0 0.0
  %2539 = vmatprep.subr.mxu0 0.0
  %2540 = vmatpush1.msra.mxu0 0.0
  %2541 = vmatprep.subr.mxu0 0.0
  %2542 = vmatpush1.msra.mxu0 0.0
  %2543 = vmatprep.subr.mxu0 0.0
  %2544 = vmatpush1.msra.mxu0 0.0
  %2545 = vmatprep.subr.mxu0 0.0
  %2546 = vmatpush1.msra.mxu0 0.0
  %2547 = vmatprep.subr.mxu0 0.0
  %2548 = vmatpush1.msra.mxu0 0.0
  %2549 = vmatprep.subr.mxu0 0.0
  %2550 = vmatpush1.msra.mxu0 0.0
  %2551 = vmatprep.subr.mxu0 0.0
  %2552 = vmatpush1.msra.mxu0 %v2508
  %2553 = vmatprep.subr.mxu0 0.0
  %2554 = vmatpush2.msra.mxu0 0.0
  %2555 = vmatprep.subr.mxu0 0.0
  %2556 = vmatpush2.msra.mxu0 0.0
  %2557 = vmatprep.subr.mxu0 0.0
  %2558 = vmatpush2.msra.mxu0 0.0
  %2559 = vmatprep.subr.mxu0 0.0
  %2560 = vmatpush2.msra.mxu0 0.0
  %2561 = vmatprep.subr.mxu0 0.0
  %2562 = vmatpush2.msra.mxu0 0.0
  %2563 = vmatprep.subr.mxu0 0.0
  %2564 = vmatpush2.msra.mxu0 0.0
  %2565 = vmatprep.subr.mxu0 0.0
  %2566 = vmatpush2.msra.mxu0 0.0
  %2567 = vmatprep.subr.mxu0 0.0
  %2568 = vmatpush2.msra.mxu0 0.0
  %2569 = vmatprep.subr.mxu0 0.0
  %2570 = vmatpush2.msra.mxu0 0.0
  %2571 = vmatprep.subr.mxu0 0.0
  %2572 = vmatpush2.msra.mxu0 0.0
  %2573 = vmatprep.subr.mxu0 0.0
  %2574 = vmatpush2.msra.mxu0 0.0
  %2575 = vmatprep.subr.mxu0 0.0
  %2576 = vmatpush2.msra.mxu0 0.0
  %2577 = vmatprep.subr.mxu0 0.0
  %2578 = vmatpush2.msra.mxu0 0.0
  %2579 = vmatprep.subr.mxu0 0.0
  %2580 = vmatpush2.msra.mxu0 0.0
  %2581 = vmatprep.subr.mxu0 0.0
  %2582 = vmatpush2.msra.mxu0 0.0
  %2583 = vmatprep.subr.mxu0 0.0
  %2584 = vmatpush2.msra.mxu0 0.0
  %2585 = vmatprep.mubr.f32.mxu0 0.0
  %2586 = vmatmul.mubr.f32.gmra.mxu0 %v2510
  %v2587 = vpop.f32.mrf.mxu0
  %v2588 = vadd.f32 0.0, %v2587
  %v2589 = vpop.f32.mrf.mxu0
  %2590 = vmatprep.mubr.f32.mxu0 0.0
  %2591 = vmatmul.mubr.f32.gmra.mxu0 %v2513
  %v2592 = vpop.f32.mrf.mxu0
  %v2593 = vadd.f32 0.0, %v2592
  %v2594 = vpop.f32.mrf.mxu0
  %2595 = vmatprep.mubr.f32.mxu0 0.0
  %2596 = vmatmul.mubr.f32.gmra.mxu0 %v2516
  %v2597 = vpop.f32.mrf.mxu0
  %v2598 = vadd.f32 0.0, %v2597
  %v2599 = vpop.f32.mrf.mxu0
  %2600 = vmatprep.mubr.f32.mxu0 0.0
  %2601 = vmatmul.mubr.f32.gmra.mxu0 %v2519
  %v2602 = vpop.f32.mrf.mxu0
  %v2603 = vadd.f32 0.0, %v2602
  %v2604 = vpop.f32.mrf.mxu0
  %2605 = vdwg.mxu0
  %v2606 = vadd.f32 %v2489, %v2588
  %v2607 = vadd.f32 %v2494, %v2593
  %v2608 = vadd.f32 %v2499, %v2598
  %v2609 = vadd.f32 %v2504, %v2603
  %s2610 = scalar_lea.vmem %s5, 36
  %v2611 = vld [vmem:[%s2610] sm:$0x1]
  %v2613 = vlaneseq
  %v2614 = vshrl.u32 %v2613, 7
  %v2615 = vsub.s32 0, %v2614
  %v2616 = vrot.slane %v2611, %v2615
  %v2618 = vadd.f32 %v2606, %v2616
  %v2619 = vadd.f32 %v2607, %v2616
  %v2620 = vadd.f32 %v2608, %v2616
  %v2621 = vadd.f32 %v2609, %v2616
  %s2622 = scalar_lea.vmem %s5, 37
  %v2623 = vld [vmem:[%s2622] sm:$0x1]
  %s2624 = scalar_lea.vmem %s5, 38
  %v2625 = vld [vmem:[%s2624] sm:$0x1]
  %v2626 = vsel %vm400, %v2618, 0.0
  %v2627 = vsel %vm400, %v2619, 0.0
  %v2628 = vadd.f32 %v2626, %v2627
  %v2629 = vsel %vm400, %v2620, 0.0
  %v2630 = vadd.f32 %v2628, %v2629
  %v2631 = vsel %vm400, %v2621, 0.0
  %v2632 = vadd.f32 %v2630, %v2631
  %v2633 = vrot.slane %v2632, 4
  %v2634 = vadd.f32 %v2632, %v2633
  %v2635 = vrot.slane %v2634, 2
  %v2636 = vadd.f32 %v2634, %v2635
  %v2637 = vrot.slane %v2636, 1
  %v2638 = vadd.f32 %v2636, %v2637
  %v2639 = vmul.f32 %v2638, 0.03125
  %v2640 = vmul.f32 %v2618, %v2618
  %v2641 = vmul.f32 %v2619, %v2619
  %v2642 = vmul.f32 %v2620, %v2620
  %v2643 = vmul.f32 %v2621, %v2621
  %v2644 = vsel %vm400, %v2640, 0.0
  %v2645 = vsel %vm400, %v2641, 0.0
  %v2646 = vadd.f32 %v2644, %v2645
  %v2647 = vsel %vm400, %v2642, 0.0
  %v2648 = vadd.f32 %v2646, %v2647
  %v2649 = vsel %vm400, %v2643, 0.0
  %v2650 = vadd.f32 %v2648, %v2649
  %v2651 = vrot.slane %v2650, 4
  %v2652 = vadd.f32 %v2650, %v2651
  %v2653 = vrot.slane %v2652, 2
  %v2654 = vadd.f32 %v2652, %v2653
  %v2655 = vrot.slane %v2654, 1
  %v2656 = vadd.f32 %v2654, %v2655
  %v2657 = vmul.f32 %v2656, 0.03125
  %v2658 = vmul.f32 %v2639, %v2639
  %v2659 = vsub.f32 %v2657, %v2658
  %v2660 = vmax.f32 %v2659, 0.0
  %v2661 = vsub.f32 %v2618, %v2639
  %v2662 = vsub.f32 %v2619, %v2639
  %v2663 = vsub.f32 %v2620, %v2639
  %v2664 = vsub.f32 %v2621, %v2639
  %v2665 = vadd.f32 %v2660, 1e-05
  %v2666 = vrsqrt.pop %v2665
  %v2667 = vmul.f32 %v2661, %v2666
  %v2668 = vmul.f32 %v2662, %v2666
  %v2669 = vmul.f32 %v2663, %v2666
  %v2670 = vmul.f32 %v2664, %v2666
  %v2672 = vlaneseq
  %v2673 = vshrl.u32 %v2672, 7
  %v2674 = vsub.s32 0, %v2673
  %v2675 = vrot.slane %v2623, %v2674
  %v2677 = vmul.f32 %v2667, %v2675
  %v2678 = vmul.f32 %v2668, %v2675
  %v2679 = vmul.f32 %v2669, %v2675
  %v2680 = vmul.f32 %v2670, %v2675
  %v2682 = vlaneseq
  %v2683 = vshrl.u32 %v2682, 7
  %v2684 = vsub.s32 0, %v2683
  %v2685 = vrot.slane %v2625, %v2684
  %v2687 = vadd.f32 %v2677, %v2685
  %v2688 = vadd.f32 %v2678, %v2685
  %v2689 = vadd.f32 %v2679, %v2685
  %v2690 = vadd.f32 %v2680, %v2685
  %vm2691 = vcmp.gt.f32.partialorder %v2687, 20.0
  %vm2692 = vcmp.gt.f32.partialorder %v2688, 20.0
  %vm2693 = vcmp.gt.f32.partialorder %v2689, 20.0
  %vm2694 = vcmp.gt.f32.partialorder %v2690, 20.0
  %v2695 = vmin.f32 %v2687, 20.0
  %v2696 = vmin.f32 %v2688, 20.0
  %v2697 = vmin.f32 %v2689, 20.0
  %v2698 = vmin.f32 %v2690, 20.0
  %v2699 = vmul.f32 %v2695, 1.442695
  %v2700 = vpow.pop %v2699
  %v2701 = vmul.f32 %v2696, 1.442695
  %v2702 = vpow.pop %v2701
  %v2703 = vmul.f32 %v2697, 1.442695
  %v2704 = vpow.pop %v2703
  %v2705 = vmul.f32 %v2698, 1.442695
  %v2706 = vpow.pop %v2705
  %v2707 = vadd.f32 %v2700, 1.0
  %v2708 = vlog2.pop %v2707
  %v2709 = vmul.f32 %v2708, 0.6931472
  %v2710 = vmul.f32 -0.5, %v2700
  %v2711 = vadd.f32 %v2710, 1.0
  %v2712 = vmul.f32 %v2711, %v2700
  %v2713 = vand.u32 2147483647, %v2700
  %vm2714 = vcmp.lt.f32.partialorder %v2713, 0.0004427343
  %v2715 = vsel %vm2714, %v2712, %v2709
  %v2716 = vadd.f32 %v2702, 1.0
  %v2717 = vlog2.pop %v2716
  %v2718 = vmul.f32 %v2717, 0.6931472
  %v2719 = vmul.f32 -0.5, %v2702
  %v2720 = vadd.f32 %v2719, 1.0
  %v2721 = vmul.f32 %v2720, %v2702
  %v2722 = vand.u32 2147483647, %v2702
  %vm2723 = vcmp.lt.f32.partialorder %v2722, 0.0004427343
  %v2724 = vsel %vm2723, %v2721, %v2718
  %v2725 = vadd.f32 %v2704, 1.0
  %v2726 = vlog2.pop %v2725
  %v2727 = vmul.f32 %v2726, 0.6931472
  %v2728 = vmul.f32 -0.5, %v2704
  %v2729 = vadd.f32 %v2728, 1.0
  %v2730 = vmul.f32 %v2729, %v2704
  %v2731 = vand.u32 2147483647, %v2704
  %vm2732 = vcmp.lt.f32.partialorder %v2731, 0.0004427343
  %v2733 = vsel %vm2732, %v2730, %v2727
  %v2734 = vadd.f32 %v2706, 1.0
  %v2735 = vlog2.pop %v2734
  %v2736 = vmul.f32 %v2735, 0.6931472
  %v2737 = vmul.f32 -0.5, %v2706
  %v2738 = vadd.f32 %v2737, 1.0
  %v2739 = vmul.f32 %v2738, %v2706
  %v2740 = vand.u32 2147483647, %v2706
  %vm2741 = vcmp.lt.f32.partialorder %v2740, 0.0004427343
  %v2742 = vsel %vm2741, %v2739, %v2736
  %v2743 = vsel %vm2691, %v2687, %v2715
  %v2744 = vsel %vm2692, %v2688, %v2724
  %v2745 = vsel %vm2693, %v2689, %v2733
  %v2746 = vsel %vm2694, %v2690, %v2742
  %v2747 = vadd.f32 %v1248, %v2743
  %v2748 = vadd.f32 %v1249, %v2744
  %v2749 = vadd.f32 %v1250, %v2745
  %v2750 = vadd.f32 %v1251, %v2746
  %s2751 = scalar_lea.vmem %s5, 39
  %v2752 = vld [vmem:[%s2751] sm:$0x1]
  %s2753 = scalar_lea.vmem %s5, 40
  %v2754 = vld [vmem:[%s2753] sm:$0x1]
  %v2755 = vsel %vm400, %v2747, 0.0
  %v2756 = vsel %vm400, %v2748, 0.0
  %v2757 = vadd.f32 %v2755, %v2756
  %v2758 = vsel %vm400, %v2749, 0.0
  %v2759 = vadd.f32 %v2757, %v2758
  %v2760 = vsel %vm400, %v2750, 0.0
  %v2761 = vadd.f32 %v2759, %v2760
  %v2762 = vrot.slane %v2761, 4
  %v2763 = vadd.f32 %v2761, %v2762
  %v2764 = vrot.slane %v2763, 2
  %v2765 = vadd.f32 %v2763, %v2764
  %v2766 = vrot.slane %v2765, 1
  %v2767 = vadd.f32 %v2765, %v2766
  %v2768 = vmul.f32 %v2767, 0.03125
  %v2769 = vmul.f32 %v2747, %v2747
  %v2770 = vmul.f32 %v2748, %v2748
  %v2771 = vmul.f32 %v2749, %v2749
  %v2772 = vmul.f32 %v2750, %v2750
  %v2773 = vsel %vm400, %v2769, 0.0
  %v2774 = vsel %vm400, %v2770, 0.0
  %v2775 = vadd.f32 %v2773, %v2774
  %v2776 = vsel %vm400, %v2771, 0.0
  %v2777 = vadd.f32 %v2775, %v2776
  %v2778 = vsel %vm400, %v2772, 0.0
  %v2779 = vadd.f32 %v2777, %v2778
  %v2780 = vrot.slane %v2779, 4
  %v2781 = vadd.f32 %v2779, %v2780
  %v2782 = vrot.slane %v2781, 2
  %v2783 = vadd.f32 %v2781, %v2782
  %v2784 = vrot.slane %v2783, 1
  %v2785 = vadd.f32 %v2783, %v2784
  %v2786 = vmul.f32 %v2785, 0.03125
  %v2787 = vmul.f32 %v2768, %v2768
  %v2788 = vsub.f32 %v2786, %v2787
  %v2789 = vmax.f32 %v2788, 0.0
  %v2790 = vsub.f32 %v2747, %v2768
  %v2791 = vsub.f32 %v2748, %v2768
  %v2792 = vsub.f32 %v2749, %v2768
  %v2793 = vsub.f32 %v2750, %v2768
  %v2794 = vadd.f32 %v2789, 1e-05
  %v2795 = vrsqrt.pop %v2794
  %v2796 = vmul.f32 %v2790, %v2795
  %v2797 = vmul.f32 %v2791, %v2795
  %v2798 = vmul.f32 %v2792, %v2795
  %v2799 = vmul.f32 %v2793, %v2795
  %v2801 = vlaneseq
  %v2802 = vshrl.u32 %v2801, 7
  %v2803 = vsub.s32 0, %v2802
  %v2804 = vrot.slane %v2752, %v2803
  %v2806 = vmul.f32 %v2796, %v2804
  %v2807 = vmul.f32 %v2797, %v2804
  %v2808 = vmul.f32 %v2798, %v2804
  %v2809 = vmul.f32 %v2799, %v2804
  %v2811 = vlaneseq
  %v2812 = vshrl.u32 %v2811, 7
  %v2813 = vsub.s32 0, %v2812
  %v2814 = vrot.slane %v2754, %v2813
  %v2816 = vadd.f32 %v2806, %v2814
  %v2817 = vadd.f32 %v2807, %v2814
  %v2818 = vadd.f32 %v2808, %v2814
  %v2819 = vadd.f32 %v2809, %v2814
  %2820 = vmatprep.subr.mxu0 0.0
  %2821 = vmatpush1.msra.mxu0 0.0
  %2822 = vmatprep.subr.mxu0 0.0
  %2823 = vmatpush1.msra.mxu0 0.0
  %2824 = vmatprep.subr.mxu0 0.0
  %2825 = vmatpush1.msra.mxu0 0.0
  %2826 = vmatprep.subr.mxu0 0.0
  %2827 = vmatpush1.msra.mxu0 0.0
  %2828 = vmatprep.subr.mxu0 0.0
  %2829 = vmatpush1.msra.mxu0 0.0
  %2830 = vmatprep.subr.mxu0 0.0
  %2831 = vmatpush1.msra.mxu0 0.0
  %2832 = vmatprep.subr.mxu0 0.0
  %2833 = vmatpush1.msra.mxu0 0.0
  %2834 = vmatprep.subr.mxu0 0.0
  %2835 = vmatpush1.msra.mxu0 0.0
  %2836 = vmatprep.subr.mxu0 0.0
  %2837 = vmatpush1.msra.mxu0 0.0
  %2838 = vmatprep.subr.mxu0 0.0
  %2839 = vmatpush1.msra.mxu0 0.0
  %2840 = vmatprep.subr.mxu0 0.0
  %2841 = vmatpush1.msra.mxu0 0.0
  %2842 = vmatprep.subr.mxu0 0.0
  %2843 = vmatpush1.msra.mxu0 0.0
  %2844 = vmatprep.subr.mxu0 0.0
  %2845 = vmatpush1.msra.mxu0 %v2819
  %2846 = vmatprep.subr.mxu0 0.0
  %2847 = vmatpush1.msra.mxu0 %v2818
  %2848 = vmatprep.subr.mxu0 0.0
  %2849 = vmatpush1.msra.mxu0 %v2817
  %2850 = vmatprep.subr.mxu0 0.0
  %2851 = vmatpush1.msra.mxu0 %v2816
  %2852 = vmatprep.subr.mxu0 0.0
  %2853 = vmatpush2.msra.mxu0 0.0
  %2854 = vmatprep.subr.mxu0 0.0
  %2855 = vmatpush2.msra.mxu0 0.0
  %2856 = vmatprep.subr.mxu0 0.0
  %2857 = vmatpush2.msra.mxu0 0.0
  %2858 = vmatprep.subr.mxu0 0.0
  %2859 = vmatpush2.msra.mxu0 0.0
  %2860 = vmatprep.subr.mxu0 0.0
  %2861 = vmatpush2.msra.mxu0 0.0
  %2862 = vmatprep.subr.mxu0 0.0
  %2863 = vmatpush2.msra.mxu0 0.0
  %2864 = vmatprep.subr.mxu0 0.0
  %2865 = vmatpush2.msra.mxu0 0.0
  %2866 = vmatprep.subr.mxu0 0.0
  %2867 = vmatpush2.msra.mxu0 0.0
  %2868 = vmatprep.subr.mxu0 0.0
  %2869 = vmatpush2.msra.mxu0 0.0
  %2870 = vmatprep.subr.mxu0 0.0
  %2871 = vmatpush2.msra.mxu0 0.0
  %2872 = vmatprep.subr.mxu0 0.0
  %2873 = vmatpush2.msra.mxu0 0.0
  %2874 = vmatprep.subr.mxu0 0.0
  %2875 = vmatpush2.msra.mxu0 0.0
  %2876 = vmatprep.subr.mxu0 0.0
  %2877 = vmatpush2.msra.mxu0 0.0
  %2878 = vmatprep.subr.mxu0 0.0
  %2879 = vmatpush2.msra.mxu0 0.0
  %2880 = vmatprep.subr.mxu0 0.0
  %2881 = vmatpush2.msra.mxu0 0.0
  %2882 = vmatprep.subr.mxu0 0.0
  %2883 = vmatpush2.msra.mxu0 0.0
  %2884 = vmatprep.mubr.f32.mxu0 0.0
  %2885 = vmatmul.mubr.f32.gmra.mxu0 %v1253
  %v2886 = vpop.f32.mrf.mxu0
  %v2887 = vadd.f32 0.0, %v2886
  %v2888 = vpop.f32.mrf.mxu0
  %2889 = vmatprep.mubr.f32.mxu0 0.0
  %2890 = vmatmul.mubr.f32.gmra.mxu0 %v1256
  %v2891 = vpop.f32.mrf.mxu0
  %v2892 = vadd.f32 0.0, %v2891
  %v2893 = vpop.f32.mrf.mxu0
  %2894 = vdwg.mxu0
  %s2895 = scalar_lea.vmem %s5, 41
  %v2896 = vld [vmem:[%s2895] sm:$0x1]
  %s2897 = scalar_lea.vmem %s5, 42
  %v2898 = vld [vmem:[%s2897] sm:$0x1]
  %v2899 = vsel %vm400, %v2887, 0.0
  %v2900 = vsel %vm400, %v2892, 0.0
  %v2901 = vadd.f32 %v2899, %v2900
  %v2902 = vrot.slane %v2901, 4
  %v2903 = vadd.f32 %v2901, %v2902
  %v2904 = vrot.slane %v2903, 2
  %v2905 = vadd.f32 %v2903, %v2904
  %v2906 = vrot.slane %v2905, 1
  %v2907 = vadd.f32 %v2905, %v2906
  %v2908 = vmul.f32 %v2907, 0.0625
  %v2909 = vmul.f32 %v2887, %v2887
  %v2910 = vmul.f32 %v2892, %v2892
  %v2911 = vsel %vm400, %v2909, 0.0
  %v2912 = vsel %vm400, %v2910, 0.0
  %v2913 = vadd.f32 %v2911, %v2912
  %v2914 = vrot.slane %v2913, 4
  %v2915 = vadd.f32 %v2913, %v2914
  %v2916 = vrot.slane %v2915, 2
  %v2917 = vadd.f32 %v2915, %v2916
  %v2918 = vrot.slane %v2917, 1
  %v2919 = vadd.f32 %v2917, %v2918
  %v2920 = vmul.f32 %v2919, 0.0625
  %v2921 = vmul.f32 %v2908, %v2908
  %v2922 = vsub.f32 %v2920, %v2921
  %v2923 = vmax.f32 %v2922, 0.0
  %v2924 = vsub.f32 %v2887, %v2908
  %v2925 = vsub.f32 %v2892, %v2908
  %v2926 = vadd.f32 %v2923, 1e-05
  %v2927 = vrsqrt.pop %v2926
  %v2928 = vmul.f32 %v2924, %v2927
  %v2929 = vmul.f32 %v2925, %v2927
  %v2931 = vlaneseq
  %v2932 = vshrl.u32 %v2931, 7
  %v2933 = vsub.s32 0, %v2932
  %v2934 = vrot.slane %v2896, %v2933
  %v2936 = vmul.f32 %v2928, %v2934
  %v2937 = vmul.f32 %v2929, %v2934
  %v2939 = vlaneseq
  %v2940 = vshrl.u32 %v2939, 7
  %v2941 = vsub.s32 0, %v2940
  %v2942 = vrot.slane %v2898, %v2941
  %v2944 = vadd.f32 %v2936, %v2942
  %v2945 = vadd.f32 %v2937, %v2942
  %s2946 = scalar_lea.vmem %s5, 43
  %v2947 = vld [vmem:[%s2946] sm:$0x1]
  %s2948 = scalar_lea.vmem %s5, 44
  %v2949 = vld [vmem:[%s2948] sm:$0x1]
  %v2950 = vsel %vm400, %v1792, 0.0
  %v2951 = vsel %vm400, %v1793, 0.0
  %v2952 = vadd.f32 %v2950, %v2951
  %v2953 = vrot.slane %v2952, 4
  %v2954 = vadd.f32 %v2952, %v2953
  %v2955 = vrot.slane %v2954, 2
  %v2956 = vadd.f32 %v2954, %v2955
  %v2957 = vrot.slane %v2956, 1
  %v2958 = vadd.f32 %v2956, %v2957
  %v2959 = vmul.f32 %v2958, 0.0625
  %v2960 = vmul.f32 %v1792, %v1792
  %v2961 = vmul.f32 %v1793, %v1793
  %v2962 = vsel %vm400, %v2960, 0.0
  %v2963 = vsel %vm400, %v2961, 0.0
  %v2964 = vadd.f32 %v2962, %v2963
  %v2965 = vrot.slane %v2964, 4
  %v2966 = vadd.f32 %v2964, %v2965
  %v2967 = vrot.slane %v2966, 2
  %v2968 = vadd.f32 %v2966, %v2967
  %v2969 = vrot.slane %v2968, 1
  %v2970 = vadd.f32 %v2968, %v2969
  %v2971 = vmul.f32 %v2970, 0.0625
  %v2972 = vmul.f32 %v2959, %v2959
  %v2973 = vsub.f32 %v2971, %v2972
  %v2974 = vmax.f32 %v2973, 0.0
  %v2975 = vsub.f32 %v1792, %v2959
  %v2976 = vsub.f32 %v1793, %v2959
  %v2977 = vadd.f32 %v2974, 1e-05
  %v2978 = vrsqrt.pop %v2977
  %v2979 = vmul.f32 %v2975, %v2978
  %v2980 = vmul.f32 %v2976, %v2978
  %v2982 = vlaneseq
  %v2983 = vshrl.u32 %v2982, 7
  %v2984 = vsub.s32 0, %v2983
  %v2985 = vrot.slane %v2947, %v2984
  %v2987 = vmul.f32 %v2979, %v2985
  %v2988 = vmul.f32 %v2980, %v2985
  %v2990 = vlaneseq
  %v2991 = vshrl.u32 %v2990, 7
  %v2992 = vsub.s32 0, %v2991
  %v2993 = vrot.slane %v2949, %v2992
  %v2995 = vadd.f32 %v2987, %v2993
  %v2996 = vadd.f32 %v2988, %v2993
  %s2997 = scalar_lea.vmem %s5, 45
  %v2998 = vld [vmem:[%s2997] sm:$0x1]
  %s2999 = scalar_lea.vmem %s5, 46
  %v3000 = vld [vmem:[%s2999] sm:$0x1]
  %v3001 = vsel %vm400, %v2944, 0.0
  %v3002 = vsel %vm400, %v2945, 0.0
  %v3003 = vadd.f32 %v3001, %v3002
  %v3004 = vrot.slane %v3003, 4
  %v3005 = vadd.f32 %v3003, %v3004
  %v3006 = vrot.slane %v3005, 2
  %v3007 = vadd.f32 %v3005, %v3006
  %v3008 = vrot.slane %v3007, 1
  %v3009 = vadd.f32 %v3007, %v3008
  %v3010 = vmul.f32 %v3009, 0.0625
  %v3011 = vmul.f32 %v2944, %v2944
  %v3012 = vmul.f32 %v2945, %v2945
  %v3013 = vsel %vm400, %v3011, 0.0
  %v3014 = vsel %vm400, %v3012, 0.0
  %v3015 = vadd.f32 %v3013, %v3014
  %v3016 = vrot.slane %v3015, 4
  %v3017 = vadd.f32 %v3015, %v3016
  %v3018 = vrot.slane %v3017, 2
  %v3019 = vadd.f32 %v3017, %v3018
  %v3020 = vrot.slane %v3019, 1
  %v3021 = vadd.f32 %v3019, %v3020
  %v3022 = vmul.f32 %v3021, 0.0625
  %v3023 = vmul.f32 %v3010, %v3010
  %v3024 = vsub.f32 %v3022, %v3023
  %v3025 = vmax.f32 %v3024, 0.0
  %v3026 = vsub.f32 %v2944, %v3010
  %v3027 = vsub.f32 %v2945, %v3010
  %v3028 = vadd.f32 %v3025, 1e-05
  %v3029 = vrsqrt.pop %v3028
  %v3030 = vmul.f32 %v3026, %v3029
  %v3031 = vmul.f32 %v3027, %v3029
  %v3033 = vlaneseq
  %v3034 = vshrl.u32 %v3033, 7
  %v3035 = vsub.s32 0, %v3034
  %v3036 = vrot.slane %v2998, %v3035
  %v3038 = vmul.f32 %v3030, %v3036
  %v3039 = vmul.f32 %v3031, %v3036
  %v3041 = vlaneseq
  %v3042 = vshrl.u32 %v3041, 7
  %v3043 = vsub.s32 0, %v3042
  %v3044 = vrot.slane %v3000, %v3043
  %v3046 = vadd.f32 %v3038, %v3044
  %v3047 = vadd.f32 %v3039, %v3044
  %s3048 = scalar_lea.vmem %s6, 64
  %v3049 = vld [vmem:[%s3048] sm:$0xff]
  %s3050 = scalar_lea.vmem %s6, 72
  %v3051 = vld [vmem:[%s3050] sm:$0xff]
  %v3053 = vsel %vm400, %v3046, 0
  %v3056 = vsel %vm400, %v3047, 0
  %3058 = vmatprep.subr.mxu0 0.0
  %3059 = vmatpush1.msra.mxu0 0.0
  %3060 = vmatprep.subr.mxu0 0.0
  %3061 = vmatpush1.msra.mxu0 0.0
  %3062 = vmatprep.subr.mxu0 0.0
  %3063 = vmatpush1.msra.mxu0 0.0
  %3064 = vmatprep.subr.mxu0 0.0
  %3065 = vmatpush1.msra.mxu0 0.0
  %3066 = vmatprep.subr.mxu0 0.0
  %3067 = vmatpush1.msra.mxu0 0.0
  %3068 = vmatprep.subr.mxu0 0.0
  %3069 = vmatpush1.msra.mxu0 0.0
  %3070 = vmatprep.subr.mxu0 0.0
  %3071 = vmatpush1.msra.mxu0 0.0
  %3072 = vmatprep.subr.mxu0 0.0
  %3073 = vmatpush1.msra.mxu0 0.0
  %3074 = vmatprep.subr.mxu0 0.0
  %3075 = vmatpush1.msra.mxu0 0.0
  %3076 = vmatprep.subr.mxu0 0.0
  %3077 = vmatpush1.msra.mxu0 0.0
  %3078 = vmatprep.subr.mxu0 0.0
  %3079 = vmatpush1.msra.mxu0 0.0
  %3080 = vmatprep.subr.mxu0 0.0
  %3081 = vmatpush1.msra.mxu0 0.0
  %3082 = vmatprep.subr.mxu0 0.0
  %3083 = vmatpush1.msra.mxu0 0.0
  %3084 = vmatprep.subr.mxu0 0.0
  %3085 = vmatpush1.msra.mxu0 0.0
  %3086 = vmatprep.subr.mxu0 0.0
  %3087 = vmatpush1.msra.mxu0 0.0
  %3088 = vmatprep.subr.mxu0 0.0
  %3089 = vmatpush1.msra.mxu0 %v3051
  %3090 = vmatprep.subr.mxu0 0.0
  %3091 = vmatpush2.msra.mxu0 0.0
  %3092 = vmatprep.subr.mxu0 0.0
  %3093 = vmatpush2.msra.mxu0 0.0
  %3094 = vmatprep.subr.mxu0 0.0
  %3095 = vmatpush2.msra.mxu0 0.0
  %3096 = vmatprep.subr.mxu0 0.0
  %3097 = vmatpush2.msra.mxu0 0.0
  %3098 = vmatprep.subr.mxu0 0.0
  %3099 = vmatpush2.msra.mxu0 0.0
  %3100 = vmatprep.subr.mxu0 0.0
  %3101 = vmatpush2.msra.mxu0 0.0
  %3102 = vmatprep.subr.mxu0 0.0
  %3103 = vmatpush2.msra.mxu0 0.0
  %3104 = vmatprep.subr.mxu0 0.0
  %3105 = vmatpush2.msra.mxu0 0.0
  %3106 = vmatprep.subr.mxu0 0.0
  %3107 = vmatpush2.msra.mxu0 0.0
  %3108 = vmatprep.subr.mxu0 0.0
  %3109 = vmatpush2.msra.mxu0 0.0
  %3110 = vmatprep.subr.mxu0 0.0
  %3111 = vmatpush2.msra.mxu0 0.0
  %3112 = vmatprep.subr.mxu0 0.0
  %3113 = vmatpush2.msra.mxu0 0.0
  %3114 = vmatprep.subr.mxu0 0.0
  %3115 = vmatpush2.msra.mxu0 0.0
  %3116 = vmatprep.subr.mxu0 0.0
  %3117 = vmatpush2.msra.mxu0 0.0
  %3118 = vmatprep.subr.mxu0 0.0
  %3119 = vmatpush2.msra.mxu0 0.0
  %3120 = vmatprep.subr.mxu0 0.0
  %3121 = vmatpush2.msra.mxu0 0.0
  %3122 = vmatprep.mubr.f32.mxu0 0.0
  %3123 = vmatmul.mubr.f32.gmra.mxu0 %v3053
  %v3124 = vpop.f32.mrf.mxu0
  %v3125 = vadd.f32 0.0, %v3124
  %v3126 = vpop.f32.mrf.mxu0
  %3127 = vmatprep.mubr.f32.mxu0 0.0
  %3128 = vmatmul.mubr.f32.gmra.mxu0 %v3056
  %v3129 = vpop.f32.mrf.mxu0
  %v3130 = vadd.f32 0.0, %v3129
  %v3131 = vpop.f32.mrf.mxu0
  %3132 = vdwg.mxu0
  %v3134 = vsel %vm400, %v2995, 0
  %v3137 = vsel %vm400, %v2996, 0
  %3139 = vmatprep.subr.mxu0 0.0
  %3140 = vmatpush1.msra.mxu0 0.0
  %3141 = vmatprep.subr.mxu0 0.0
  %3142 = vmatpush1.msra.mxu0 0.0
  %3143 = vmatprep.subr.mxu0 0.0
  %3144 = vmatpush1.msra.mxu0 0.0
  %3145 = vmatprep.subr.mxu0 0.0
  %3146 = vmatpush1.msra.mxu0 0.0
  %3147 = vmatprep.subr.mxu0 0.0
  %3148 = vmatpush1.msra.mxu0 0.0
  %3149 = vmatprep.subr.mxu0 0.0
  %3150 = vmatpush1.msra.mxu0 0.0
  %3151 = vmatprep.subr.mxu0 0.0
  %3152 = vmatpush1.msra.mxu0 0.0
  %3153 = vmatprep.subr.mxu0 0.0
  %3154 = vmatpush1.msra.mxu0 0.0
  %3155 = vmatprep.subr.mxu0 0.0
  %3156 = vmatpush1.msra.mxu0 0.0
  %3157 = vmatprep.subr.mxu0 0.0
  %3158 = vmatpush1.msra.mxu0 0.0
  %3159 = vmatprep.subr.mxu0 0.0
  %3160 = vmatpush1.msra.mxu0 0.0
  %3161 = vmatprep.subr.mxu0 0.0
  %3162 = vmatpush1.msra.mxu0 0.0
  %3163 = vmatprep.subr.mxu0 0.0
  %3164 = vmatpush1.msra.mxu0 0.0
  %3165 = vmatprep.subr.mxu0 0.0
  %3166 = vmatpush1.msra.mxu0 0.0
  %3167 = vmatprep.subr.mxu0 0.0
  %3168 = vmatpush1.msra.mxu0 0.0
  %3169 = vmatprep.subr.mxu0 0.0
  %3170 = vmatpush1.msra.mxu0 %v3049
  %3171 = vmatprep.subr.mxu0 0.0
  %3172 = vmatpush2.msra.mxu0 0.0
  %3173 = vmatprep.subr.mxu0 0.0
  %3174 = vmatpush2.msra.mxu0 0.0
  %3175 = vmatprep.subr.mxu0 0.0
  %3176 = vmatpush2.msra.mxu0 0.0
  %3177 = vmatprep.subr.mxu0 0.0
  %3178 = vmatpush2.msra.mxu0 0.0
  %3179 = vmatprep.subr.mxu0 0.0
  %3180 = vmatpush2.msra.mxu0 0.0
  %3181 = vmatprep.subr.mxu0 0.0
  %3182 = vmatpush2.msra.mxu0 0.0
  %3183 = vmatprep.subr.mxu0 0.0
  %3184 = vmatpush2.msra.mxu0 0.0
  %3185 = vmatprep.subr.mxu0 0.0
  %3186 = vmatpush2.msra.mxu0 0.0
  %3187 = vmatprep.subr.mxu0 0.0
  %3188 = vmatpush2.msra.mxu0 0.0
  %3189 = vmatprep.subr.mxu0 0.0
  %3190 = vmatpush2.msra.mxu0 0.0
  %3191 = vmatprep.subr.mxu0 0.0
  %3192 = vmatpush2.msra.mxu0 0.0
  %3193 = vmatprep.subr.mxu0 0.0
  %3194 = vmatpush2.msra.mxu0 0.0
  %3195 = vmatprep.subr.mxu0 0.0
  %3196 = vmatpush2.msra.mxu0 0.0
  %3197 = vmatprep.subr.mxu0 0.0
  %3198 = vmatpush2.msra.mxu0 0.0
  %3199 = vmatprep.subr.mxu0 0.0
  %3200 = vmatpush2.msra.mxu0 0.0
  %3201 = vmatprep.subr.mxu0 0.0
  %3202 = vmatpush2.msra.mxu0 0.0
  %3203 = vmatprep.mubr.f32.mxu0 0.0
  %3204 = vmatmul.mubr.f32.gmra.mxu0 %v3134
  %v3205 = vpop.f32.mrf.mxu0
  %v3206 = vadd.f32 %v3125, %v3205
  %v3207 = vpop.f32.mrf.mxu0
  %3208 = vmatprep.mubr.f32.mxu0 0.0
  %3209 = vmatmul.mubr.f32.gmra.mxu0 %v3137
  %v3210 = vpop.f32.mrf.mxu0
  %v3211 = vadd.f32 %v3130, %v3210
  %v3212 = vpop.f32.mrf.mxu0
  %3213 = vdwg.mxu0
  %s3214 = scalar_lea.vmem %s5, 47
  %v3215 = vld [vmem:[%s3214] sm:$0x1]
  %v3217 = vlaneseq
  %v3218 = vshrl.u32 %v3217, 7
  %v3219 = vsub.s32 0, %v3218
  %v3220 = vrot.slane %v3215, %v3219
  %v3222 = vadd.f32 %v3206, %v3220
  %v3223 = vadd.f32 %v3211, %v3220
  %s3224 = scalar_lea.vmem %s5, 48
  %v3225 = vld [vmem:[%s3224] sm:$0x1]
  %s3226 = scalar_lea.vmem %s5, 49
  %v3227 = vld [vmem:[%s3226] sm:$0x1]
  %v3228 = vsel %vm400, %v3222, 0.0
  %v3229 = vsel %vm400, %v3223, 0.0
  %v3230 = vadd.f32 %v3228, %v3229
  %v3231 = vrot.slane %v3230, 4
  %v3232 = vadd.f32 %v3230, %v3231
  %v3233 = vrot.slane %v3232, 2
  %v3234 = vadd.f32 %v3232, %v3233
  %v3235 = vrot.slane %v3234, 1
  %v3236 = vadd.f32 %v3234, %v3235
  %v3237 = vmul.f32 %v3236, 0.0625
  %v3238 = vmul.f32 %v3222, %v3222
  %v3239 = vmul.f32 %v3223, %v3223
  %v3240 = vsel %vm400, %v3238, 0.0
  %v3241 = vsel %vm400, %v3239, 0.0
  %v3242 = vadd.f32 %v3240, %v3241
  %v3243 = vrot.slane %v3242, 4
  %v3244 = vadd.f32 %v3242, %v3243
  %v3245 = vrot.slane %v3244, 2
  %v3246 = vadd.f32 %v3244, %v3245
  %v3247 = vrot.slane %v3246, 1
  %v3248 = vadd.f32 %v3246, %v3247
  %v3249 = vmul.f32 %v3248, 0.0625
  %v3250 = vmul.f32 %v3237, %v3237
  %v3251 = vsub.f32 %v3249, %v3250
  %v3252 = vmax.f32 %v3251, 0.0
  %v3253 = vsub.f32 %v3222, %v3237
  %v3254 = vsub.f32 %v3223, %v3237
  %v3255 = vadd.f32 %v3252, 1e-05
  %v3256 = vrsqrt.pop %v3255
  %v3257 = vmul.f32 %v3253, %v3256
  %v3258 = vmul.f32 %v3254, %v3256
  %v3260 = vlaneseq
  %v3261 = vshrl.u32 %v3260, 7
  %v3262 = vsub.s32 0, %v3261
  %v3263 = vrot.slane %v3225, %v3262
  %v3265 = vmul.f32 %v3257, %v3263
  %v3266 = vmul.f32 %v3258, %v3263
  %v3268 = vlaneseq
  %v3269 = vshrl.u32 %v3268, 7
  %v3270 = vsub.s32 0, %v3269
  %v3271 = vrot.slane %v3227, %v3270
  %v3273 = vadd.f32 %v3265, %v3271
  %v3274 = vadd.f32 %v3266, %v3271
  %vm3275 = vcmp.gt.f32.partialorder %v3273, 20.0
  %vm3276 = vcmp.gt.f32.partialorder %v3274, 20.0
  %v3277 = vmin.f32 %v3273, 20.0
  %v3278 = vmin.f32 %v3274, 20.0
  %v3279 = vmul.f32 %v3277, 1.442695
  %v3280 = vpow.pop %v3279
  %v3281 = vmul.f32 %v3278, 1.442695
  %v3282 = vpow.pop %v3281
  %v3283 = vadd.f32 %v3280, 1.0
  %v3284 = vlog2.pop %v3283
  %v3285 = vmul.f32 %v3284, 0.6931472
  %v3286 = vmul.f32 -0.5, %v3280
  %v3287 = vadd.f32 %v3286, 1.0
  %v3288 = vmul.f32 %v3287, %v3280
  %v3289 = vand.u32 2147483647, %v3280
  %vm3290 = vcmp.lt.f32.partialorder %v3289, 0.0004427343
  %v3291 = vsel %vm3290, %v3288, %v3285
  %v3292 = vadd.f32 %v3282, 1.0
  %v3293 = vlog2.pop %v3292
  %v3294 = vmul.f32 %v3293, 0.6931472
  %v3295 = vmul.f32 -0.5, %v3282
  %v3296 = vadd.f32 %v3295, 1.0
  %v3297 = vmul.f32 %v3296, %v3282
  %v3298 = vand.u32 2147483647, %v3282
  %vm3299 = vcmp.lt.f32.partialorder %v3298, 0.0004427343
  %v3300 = vsel %vm3299, %v3297, %v3294
  %v3301 = vsel %vm3275, %v3273, %v3291
  %v3302 = vsel %vm3276, %v3274, %v3300
  %v3303 = vadd.f32 %v1792, %v3301
  %v3304 = vadd.f32 %v1793, %v3302
  %s3305 = scalar_lea.vmem %s5, 50
  %v3306 = vld [vmem:[%s3305] sm:$0x1]
  %s3307 = scalar_lea.vmem %s5, 51
  %v3308 = vld [vmem:[%s3307] sm:$0x1]
  %v3309 = vsel %vm400, %v3303, 0.0
  %v3310 = vsel %vm400, %v3304, 0.0
  %v3311 = vadd.f32 %v3309, %v3310
  %v3312 = vrot.slane %v3311, 4
  %v3313 = vadd.f32 %v3311, %v3312
  %v3314 = vrot.slane %v3313, 2
  %v3315 = vadd.f32 %v3313, %v3314
  %v3316 = vrot.slane %v3315, 1
  %v3317 = vadd.f32 %v3315, %v3316
  %v3318 = vmul.f32 %v3317, 0.0625
  %v3319 = vmul.f32 %v3303, %v3303
  %v3320 = vmul.f32 %v3304, %v3304
  %v3321 = vsel %vm400, %v3319, 0.0
  %v3322 = vsel %vm400, %v3320, 0.0
  %v3323 = vadd.f32 %v3321, %v3322
  %v3324 = vrot.slane %v3323, 4
  %v3325 = vadd.f32 %v3323, %v3324
  %v3326 = vrot.slane %v3325, 2
  %v3327 = vadd.f32 %v3325, %v3326
  %v3328 = vrot.slane %v3327, 1
  %v3329 = vadd.f32 %v3327, %v3328
  %v3330 = vmul.f32 %v3329, 0.0625
  %v3331 = vmul.f32 %v3318, %v3318
  %v3332 = vsub.f32 %v3330, %v3331
  %v3333 = vmax.f32 %v3332, 0.0
  %v3334 = vsub.f32 %v3303, %v3318
  %v3335 = vsub.f32 %v3304, %v3318
  %v3336 = vadd.f32 %v3333, 1e-05
  %v3337 = vrsqrt.pop %v3336
  %v3338 = vmul.f32 %v3334, %v3337
  %v3339 = vmul.f32 %v3335, %v3337
  %v3341 = vlaneseq
  %v3342 = vshrl.u32 %v3341, 7
  %v3343 = vsub.s32 0, %v3342
  %v3344 = vrot.slane %v3306, %v3343
  %v3346 = vmul.f32 %v3338, %v3344
  %v3347 = vmul.f32 %v3339, %v3344
  %v3349 = vlaneseq
  %v3350 = vshrl.u32 %v3349, 7
  %v3351 = vsub.s32 0, %v3350
  %v3352 = vrot.slane %v3308, %v3351
  %v3354 = vadd.f32 %v3346, %v3352
  %v3355 = vadd.f32 %v3347, %v3352
  %3356 = vmatprep.subr.mxu0 0.0
  %3357 = vmatpush1.msra.mxu0 0.0
  %3358 = vmatprep.subr.mxu0 0.0
  %3359 = vmatpush1.msra.mxu0 0.0
  %3360 = vmatprep.subr.mxu0 0.0
  %3361 = vmatpush1.msra.mxu0 0.0
  %3362 = vmatprep.subr.mxu0 0.0
  %3363 = vmatpush1.msra.mxu0 0.0
  %3364 = vmatprep.subr.mxu0 0.0
  %3365 = vmatpush1.msra.mxu0 0.0
  %3366 = vmatprep.subr.mxu0 0.0
  %3367 = vmatpush1.msra.mxu0 0.0
  %3368 = vmatprep.subr.mxu0 0.0
  %3369 = vmatpush1.msra.mxu0 0.0
  %3370 = vmatprep.subr.mxu0 0.0
  %3371 = vmatpush1.msra.mxu0 0.0
  %3372 = vmatprep.subr.mxu0 0.0
  %3373 = vmatpush1.msra.mxu0 0.0
  %3374 = vmatprep.subr.mxu0 0.0
  %3375 = vmatpush1.msra.mxu0 0.0
  %3376 = vmatprep.subr.mxu0 0.0
  %3377 = vmatpush1.msra.mxu0 0.0
  %3378 = vmatprep.subr.mxu0 0.0
  %3379 = vmatpush1.msra.mxu0 0.0
  %3380 = vmatprep.subr.mxu0 0.0
  %3381 = vmatpush1.msra.mxu0 0.0
  %3382 = vmatprep.subr.mxu0 0.0
  %3383 = vmatpush1.msra.mxu0 0.0
  %3384 = vmatprep.subr.mxu0 0.0
  %3385 = vmatpush1.msra.mxu0 %v3355
  %3386 = vmatprep.subr.mxu0 0.0
  %3387 = vmatpush1.msra.mxu0 %v3354
  %3388 = vmatprep.subr.mxu0 0.0
  %3389 = vmatpush2.msra.mxu0 0.0
  %3390 = vmatprep.subr.mxu0 0.0
  %3391 = vmatpush2.msra.mxu0 0.0
  %3392 = vmatprep.subr.mxu0 0.0
  %3393 = vmatpush2.msra.mxu0 0.0
  %3394 = vmatprep.subr.mxu0 0.0
  %3395 = vmatpush2.msra.mxu0 0.0
  %3396 = vmatprep.subr.mxu0 0.0
  %3397 = vmatpush2.msra.mxu0 0.0
  %3398 = vmatprep.subr.mxu0 0.0
  %3399 = vmatpush2.msra.mxu0 0.0
  %3400 = vmatprep.subr.mxu0 0.0
  %3401 = vmatpush2.msra.mxu0 0.0
  %3402 = vmatprep.subr.mxu0 0.0
  %3403 = vmatpush2.msra.mxu0 0.0
  %3404 = vmatprep.subr.mxu0 0.0
  %3405 = vmatpush2.msra.mxu0 0.0
  %3406 = vmatprep.subr.mxu0 0.0
  %3407 = vmatpush2.msra.mxu0 0.0
  %3408 = vmatprep.subr.mxu0 0.0
  %3409 = vmatpush2.msra.mxu0 0.0
  %3410 = vmatprep.subr.mxu0 0.0
  %3411 = vmatpush2.msra.mxu0 0.0
  %3412 = vmatprep.subr.mxu0 0.0
  %3413 = vmatpush2.msra.mxu0 0.0
  %3414 = vmatprep.subr.mxu0 0.0
  %3415 = vmatpush2.msra.mxu0 0.0
  %3416 = vmatprep.subr.mxu0 0.0
  %3417 = vmatpush2.msra.mxu0 0.0
  %3418 = vmatprep.subr.mxu0 0.0
  %3419 = vmatpush2.msra.mxu0 0.0
  %3420 = vmatprep.mubr.f32.mxu0 0.0
  %3421 = vmatmul.mubr.f32.gmra.mxu0 %v204
  %v3422 = vpop.f32.mrf.mxu0
  %v3423 = vadd.f32 0.0, %v3422
  %v3424 = vpop.f32.mrf.mxu0
  %3425 = vmatprep.mubr.f32.mxu0 0.0
  %3426 = vmatmul.mubr.f32.gmra.mxu0 %v207
  %v3427 = vpop.f32.mrf.mxu0
  %v3428 = vadd.f32 0.0, %v3427
  %v3429 = vpop.f32.mrf.mxu0
  %3430 = vmatprep.mubr.f32.mxu0 0.0
  %3431 = vmatmul.mubr.f32.gmra.mxu0 %v210
  %v3432 = vpop.f32.mrf.mxu0
  %v3433 = vadd.f32 0.0, %v3432
  %v3434 = vpop.f32.mrf.mxu0
  %3435 = vmatprep.mubr.f32.mxu0 0.0
  %3436 = vmatmul.mubr.f32.gmra.mxu0 %v213
  %v3437 = vpop.f32.mrf.mxu0
  %v3438 = vadd.f32 0.0, %v3437
  %v3439 = vpop.f32.mrf.mxu0
  %3440 = vdwg.mxu0
  %3441 = vmatprep.subr.mxu0 0.0
  %3442 = vmatpush1.msra.mxu0 0.0
  %3443 = vmatprep.subr.mxu0 0.0
  %3444 = vmatpush1.msra.mxu0 0.0
  %3445 = vmatprep.subr.mxu0 0.0
  %3446 = vmatpush1.msra.mxu0 0.0
  %3447 = vmatprep.subr.mxu0 0.0
  %3448 = vmatpush1.msra.mxu0 0.0
  %3449 = vmatprep.subr.mxu0 0.0
  %3450 = vmatpush1.msra.mxu0 0.0
  %3451 = vmatprep.subr.mxu0 0.0
  %3452 = vmatpush1.msra.mxu0 0.0
  %3453 = vmatprep.subr.mxu0 0.0
  %3454 = vmatpush1.msra.mxu0 0.0
  %3455 = vmatprep.subr.mxu0 0.0
  %3456 = vmatpush1.msra.mxu0 0.0
  %3457 = vmatprep.subr.mxu0 0.0
  %3458 = vmatpush1.msra.mxu0 0.0
  %3459 = vmatprep.subr.mxu0 0.0
  %3460 = vmatpush1.msra.mxu0 0.0
  %3461 = vmatprep.subr.mxu0 0.0
  %3462 = vmatpush1.msra.mxu0 0.0
  %3463 = vmatprep.subr.mxu0 0.0
  %3464 = vmatpush1.msra.mxu0 0.0
  %3465 = vmatprep.subr.mxu0 0.0
  %3466 = vmatpush1.msra.mxu0 0.0
  %3467 = vmatprep.subr.mxu0 0.0
  %3468 = vmatpush1.msra.mxu0 0.0
  %3469 = vmatprep.subr.mxu0 0.0
  %3470 = vmatpush1.msra.mxu0 %v3355
  %3471 = vmatprep.subr.mxu0 0.0
  %3472 = vmatpush1.msra.mxu0 %v3354
  %3473 = vmatprep.subr.mxu0 0.0
  %3474 = vmatpush2.msra.mxu0 0.0
  %3475 = vmatprep.subr.mxu0 0.0
  %3476 = vmatpush2.msra.mxu0 0.0
  %3477 = vmatprep.subr.mxu0 0.0
  %3478 = vmatpush2.msra.mxu0 0.0
  %3479 = vmatprep.subr.mxu0 0.0
  %3480 = vmatpush2.msra.mxu0 0.0
  %3481 = vmatprep.subr.mxu0 0.0
  %3482 = vmatpush2.msra.mxu0 0.0
  %3483 = vmatprep.subr.mxu0 0.0
  %3484 = vmatpush2.msra.mxu0 0.0
  %3485 = vmatprep.subr.mxu0 0.0
  %3486 = vmatpush2.msra.mxu0 0.0
  %3487 = vmatprep.subr.mxu0 0.0
  %3488 = vmatpush2.msra.mxu0 0.0
  %3489 = vmatprep.subr.mxu0 0.0
  %3490 = vmatpush2.msra.mxu0 0.0
  %3491 = vmatprep.subr.mxu0 0.0
  %3492 = vmatpush2.msra.mxu0 0.0
  %3493 = vmatprep.subr.mxu0 0.0
  %3494 = vmatpush2.msra.mxu0 0.0
  %3495 = vmatprep.subr.mxu0 0.0
  %3496 = vmatpush2.msra.mxu0 0.0
  %3497 = vmatprep.subr.mxu0 0.0
  %3498 = vmatpush2.msra.mxu0 0.0
  %3499 = vmatprep.subr.mxu0 0.0
  %3500 = vmatpush2.msra.mxu0 0.0
  %3501 = vmatprep.subr.mxu0 0.0
  %3502 = vmatpush2.msra.mxu0 0.0
  %3503 = vmatprep.subr.mxu0 0.0
  %3504 = vmatpush2.msra.mxu0 0.0
  %3505 = vmatprep.mubr.f32.mxu0 0.0
  %3506 = vmatmul.mubr.f32.gmra.mxu0 %v301
  %v3507 = vpop.f32.mrf.mxu0
  %v3508 = vadd.f32 0.0, %v3507
  %v3509 = vpop.f32.mrf.mxu0
  %3510 = vmatprep.mubr.f32.mxu0 0.0
  %3511 = vmatmul.mubr.f32.gmra.mxu0 %v304
  %v3512 = vpop.f32.mrf.mxu0
  %v3513 = vadd.f32 0.0, %v3512
  %v3514 = vpop.f32.mrf.mxu0
  %3515 = vmatprep.mubr.f32.mxu0 0.0
  %3516 = vmatmul.mubr.f32.gmra.mxu0 %v307
  %v3517 = vpop.f32.mrf.mxu0
  %v3518 = vadd.f32 0.0, %v3517
  %v3519 = vpop.f32.mrf.mxu0
  %3520 = vmatprep.mubr.f32.mxu0 0.0
  %3521 = vmatmul.mubr.f32.gmra.mxu0 %v310
  %v3522 = vpop.f32.mrf.mxu0
  %v3523 = vadd.f32 0.0, %v3522
  %v3524 = vpop.f32.mrf.mxu0
  %3525 = vdwg.mxu0
  %s3526 = scalar_lea.vmem %s5, 52
  %v3527 = vld [vmem:[%s3526] sm:$0x1]
  %s3528 = scalar_lea.vmem %s5, 53
  %v3529 = vld [vmem:[%s3528] sm:$0x1]
  %v3530 = vsel %vm400, %v3423, 0.0
  %v3531 = vsel %vm400, %v3428, 0.0
  %v3532 = vadd.f32 %v3530, %v3531
  %v3533 = vsel %vm400, %v3433, 0.0
  %v3534 = vadd.f32 %v3532, %v3533
  %v3535 = vsel %vm400, %v3438, 0.0
  %v3536 = vadd.f32 %v3534, %v3535
  %v3537 = vrot.slane %v3536, 4
  %v3538 = vadd.f32 %v3536, %v3537
  %v3539 = vrot.slane %v3538, 2
  %v3540 = vadd.f32 %v3538, %v3539
  %v3541 = vrot.slane %v3540, 1
  %v3542 = vadd.f32 %v3540, %v3541
  %v3543 = vmul.f32 %v3542, 0.03125
  %v3544 = vmul.f32 %v3423, %v3423
  %v3545 = vmul.f32 %v3428, %v3428
  %v3546 = vmul.f32 %v3433, %v3433
  %v3547 = vmul.f32 %v3438, %v3438
  %v3548 = vsel %vm400, %v3544, 0.0
  %v3549 = vsel %vm400, %v3545, 0.0
  %v3550 = vadd.f32 %v3548, %v3549
  %v3551 = vsel %vm400, %v3546, 0.0
  %v3552 = vadd.f32 %v3550, %v3551
  %v3553 = vsel %vm400, %v3547, 0.0
  %v3554 = vadd.f32 %v3552, %v3553
  %v3555 = vrot.slane %v3554, 4
  %v3556 = vadd.f32 %v3554, %v3555
  %v3557 = vrot.slane %v3556, 2
  %v3558 = vadd.f32 %v3556, %v3557
  %v3559 = vrot.slane %v3558, 1
  %v3560 = vadd.f32 %v3558, %v3559
  %v3561 = vmul.f32 %v3560, 0.03125
  %v3562 = vmul.f32 %v3543, %v3543
  %v3563 = vsub.f32 %v3561, %v3562
  %v3564 = vmax.f32 %v3563, 0.0
  %v3565 = vsub.f32 %v3423, %v3543
  %v3566 = vsub.f32 %v3428, %v3543
  %v3567 = vsub.f32 %v3433, %v3543
  %v3568 = vsub.f32 %v3438, %v3543
  %v3569 = vadd.f32 %v3564, 1e-05
  %v3570 = vrsqrt.pop %v3569
  %v3571 = vmul.f32 %v3565, %v3570
  %v3572 = vmul.f32 %v3566, %v3570
  %v3573 = vmul.f32 %v3567, %v3570
  %v3574 = vmul.f32 %v3568, %v3570
  %v3576 = vlaneseq
  %v3577 = vshrl.u32 %v3576, 7
  %v3578 = vsub.s32 0, %v3577
  %v3579 = vrot.slane %v3527, %v3578
  %v3581 = vmul.f32 %v3571, %v3579
  %v3582 = vmul.f32 %v3572, %v3579
  %v3583 = vmul.f32 %v3573, %v3579
  %v3584 = vmul.f32 %v3574, %v3579
  %v3586 = vlaneseq
  %v3587 = vshrl.u32 %v3586, 7
  %v3588 = vsub.s32 0, %v3587
  %v3589 = vrot.slane %v3529, %v3588
  %v3591 = vadd.f32 %v3581, %v3589
  %v3592 = vadd.f32 %v3582, %v3589
  %v3593 = vadd.f32 %v3583, %v3589
  %v3594 = vadd.f32 %v3584, %v3589
  %s3595 = scalar_lea.vmem %s5, 54
  %v3596 = vld [vmem:[%s3595] sm:$0x1]
  %s3597 = scalar_lea.vmem %s5, 55
  %v3598 = vld [vmem:[%s3597] sm:$0x1]
  %v3599 = vsel %vm400, %v3508, 0.0
  %v3600 = vsel %vm400, %v3513, 0.0
  %v3601 = vadd.f32 %v3599, %v3600
  %v3602 = vsel %vm400, %v3518, 0.0
  %v3603 = vadd.f32 %v3601, %v3602
  %v3604 = vsel %vm400, %v3523, 0.0
  %v3605 = vadd.f32 %v3603, %v3604
  %v3606 = vrot.slane %v3605, 4
  %v3607 = vadd.f32 %v3605, %v3606
  %v3608 = vrot.slane %v3607, 2
  %v3609 = vadd.f32 %v3607, %v3608
  %v3610 = vrot.slane %v3609, 1
  %v3611 = vadd.f32 %v3609, %v3610
  %v3612 = vmul.f32 %v3611, 0.03125
  %v3613 = vmul.f32 %v3508, %v3508
  %v3614 = vmul.f32 %v3513, %v3513
  %v3615 = vmul.f32 %v3518, %v3518
  %v3616 = vmul.f32 %v3523, %v3523
  %v3617 = vsel %vm400, %v3613, 0.0
  %v3618 = vsel %vm400, %v3614, 0.0
  %v3619 = vadd.f32 %v3617, %v3618
  %v3620 = vsel %vm400, %v3615, 0.0
  %v3621 = vadd.f32 %v3619, %v3620
  %v3622 = vsel %vm400, %v3616, 0.0
  %v3623 = vadd.f32 %v3621, %v3622
  %v3624 = vrot.slane %v3623, 4
  %v3625 = vadd.f32 %v3623, %v3624
  %v3626 = vrot.slane %v3625, 2
  %v3627 = vadd.f32 %v3625, %v3626
  %v3628 = vrot.slane %v3627, 1
  %v3629 = vadd.f32 %v3627, %v3628
  %v3630 = vmul.f32 %v3629, 0.03125
  %v3631 = vmul.f32 %v3612, %v3612
  %v3632 = vsub.f32 %v3630, %v3631
  %v3633 = vmax.f32 %v3632, 0.0
  %v3634 = vsub.f32 %v3508, %v3612
  %v3635 = vsub.f32 %v3513, %v3612
  %v3636 = vsub.f32 %v3518, %v3612
  %v3637 = vsub.f32 %v3523, %v3612
  %v3638 = vadd.f32 %v3633, 1e-05
  %v3639 = vrsqrt.pop %v3638
  %v3640 = vmul.f32 %v3634, %v3639
  %v3641 = vmul.f32 %v3635, %v3639
  %v3642 = vmul.f32 %v3636, %v3639
  %v3643 = vmul.f32 %v3637, %v3639
  %v3645 = vlaneseq
  %v3646 = vshrl.u32 %v3645, 7
  %v3647 = vsub.s32 0, %v3646
  %v3648 = vrot.slane %v3596, %v3647
  %v3650 = vmul.f32 %v3640, %v3648
  %v3651 = vmul.f32 %v3641, %v3648
  %v3652 = vmul.f32 %v3642, %v3648
  %v3653 = vmul.f32 %v3643, %v3648
  %v3655 = vlaneseq
  %v3656 = vshrl.u32 %v3655, 7
  %v3657 = vsub.s32 0, %v3656
  %v3658 = vrot.slane %v3598, %v3657
  %v3660 = vadd.f32 %v3650, %v3658
  %v3661 = vadd.f32 %v3651, %v3658
  %v3662 = vadd.f32 %v3652, %v3658
  %v3663 = vadd.f32 %v3653, %v3658
  %s3664 = scalar_lea.vmem %s5, 56
  %v3665 = vld [vmem:[%s3664] sm:$0x1]
  %s3666 = scalar_lea.vmem %s5, 57
  %v3667 = vld [vmem:[%s3666] sm:$0x1]
  %v3668 = vsel %vm400, %v3591, 0.0
  %v3669 = vsel %vm400, %v3592, 0.0
  %v3670 = vadd.f32 %v3668, %v3669
  %v3671 = vsel %vm400, %v3593, 0.0
  %v3672 = vadd.f32 %v3670, %v3671
  %v3673 = vsel %vm400, %v3594, 0.0
  %v3674 = vadd.f32 %v3672, %v3673
  %v3675 = vrot.slane %v3674, 4
  %v3676 = vadd.f32 %v3674, %v3675
  %v3677 = vrot.slane %v3676, 2
  %v3678 = vadd.f32 %v3676, %v3677
  %v3679 = vrot.slane %v3678, 1
  %v3680 = vadd.f32 %v3678, %v3679
  %v3681 = vmul.f32 %v3680, 0.03125
  %v3682 = vmul.f32 %v3591, %v3591
  %v3683 = vmul.f32 %v3592, %v3592
  %v3684 = vmul.f32 %v3593, %v3593
  %v3685 = vmul.f32 %v3594, %v3594
  %v3686 = vsel %vm400, %v3682, 0.0
  %v3687 = vsel %vm400, %v3683, 0.0
  %v3688 = vadd.f32 %v3686, %v3687
  %v3689 = vsel %vm400, %v3684, 0.0
  %v3690 = vadd.f32 %v3688, %v3689
  %v3691 = vsel %vm400, %v3685, 0.0
  %v3692 = vadd.f32 %v3690, %v3691
  %v3693 = vrot.slane %v3692, 4
  %v3694 = vadd.f32 %v3692, %v3693
  %v3695 = vrot.slane %v3694, 2
  %v3696 = vadd.f32 %v3694, %v3695
  %v3697 = vrot.slane %v3696, 1
  %v3698 = vadd.f32 %v3696, %v3697
  %v3699 = vmul.f32 %v3698, 0.03125
  %v3700 = vmul.f32 %v3681, %v3681
  %v3701 = vsub.f32 %v3699, %v3700
  %v3702 = vmax.f32 %v3701, 0.0
  %v3703 = vsub.f32 %v3591, %v3681
  %v3704 = vsub.f32 %v3592, %v3681
  %v3705 = vsub.f32 %v3593, %v3681
  %v3706 = vsub.f32 %v3594, %v3681
  %v3707 = vadd.f32 %v3702, 1e-05
  %v3708 = vrsqrt.pop %v3707
  %v3709 = vmul.f32 %v3703, %v3708
  %v3710 = vmul.f32 %v3704, %v3708
  %v3711 = vmul.f32 %v3705, %v3708
  %v3712 = vmul.f32 %v3706, %v3708
  %v3714 = vlaneseq
  %v3715 = vshrl.u32 %v3714, 7
  %v3716 = vsub.s32 0, %v3715
  %v3717 = vrot.slane %v3665, %v3716
  %v3719 = vmul.f32 %v3709, %v3717
  %v3720 = vmul.f32 %v3710, %v3717
  %v3721 = vmul.f32 %v3711, %v3717
  %v3722 = vmul.f32 %v3712, %v3717
  %v3724 = vlaneseq
  %v3725 = vshrl.u32 %v3724, 7
  %v3726 = vsub.s32 0, %v3725
  %v3727 = vrot.slane %v3667, %v3726
  %v3729 = vadd.f32 %v3719, %v3727
  %v3730 = vadd.f32 %v3720, %v3727
  %v3731 = vadd.f32 %v3721, %v3727
  %v3732 = vadd.f32 %v3722, %v3727
  %s3733 = scalar_lea.vmem %s5, 58
  %v3734 = vld [vmem:[%s3733] sm:$0x1]
  %s3735 = scalar_lea.vmem %s5, 59
  %v3736 = vld [vmem:[%s3735] sm:$0x1]
  %v3737 = vsel %vm400, %v3660, 0.0
  %v3738 = vsel %vm400, %v3661, 0.0
  %v3739 = vadd.f32 %v3737, %v3738
  %v3740 = vsel %vm400, %v3662, 0.0
  %v3741 = vadd.f32 %v3739, %v3740
  %v3742 = vsel %vm400, %v3663, 0.0
  %v3743 = vadd.f32 %v3741, %v3742
  %v3744 = vrot.slane %v3743, 4
  %v3745 = vadd.f32 %v3743, %v3744
  %v3746 = vrot.slane %v3745, 2
  %v3747 = vadd.f32 %v3745, %v3746
  %v3748 = vrot.slane %v3747, 1
  %v3749 = vadd.f32 %v3747, %v3748
  %v3750 = vmul.f32 %v3749, 0.03125
  %v3751 = vmul.f32 %v3660, %v3660
  %v3752 = vmul.f32 %v3661, %v3661
  %v3753 = vmul.f32 %v3662, %v3662
  %v3754 = vmul.f32 %v3663, %v3663
  %v3755 = vsel %vm400, %v3751, 0.0
  %v3756 = vsel %vm400, %v3752, 0.0
  %v3757 = vadd.f32 %v3755, %v3756
  %v3758 = vsel %vm400, %v3753, 0.0
  %v3759 = vadd.f32 %v3757, %v3758
  %v3760 = vsel %vm400, %v3754, 0.0
  %v3761 = vadd.f32 %v3759, %v3760
  %v3762 = vrot.slane %v3761, 4
  %v3763 = vadd.f32 %v3761, %v3762
  %v3764 = vrot.slane %v3763, 2
  %v3765 = vadd.f32 %v3763, %v3764
  %v3766 = vrot.slane %v3765, 1
  %v3767 = vadd.f32 %v3765, %v3766
  %v3768 = vmul.f32 %v3767, 0.03125
  %v3769 = vmul.f32 %v3750, %v3750
  %v3770 = vsub.f32 %v3768, %v3769
  %v3771 = vmax.f32 %v3770, 0.0
  %v3772 = vsub.f32 %v3660, %v3750
  %v3773 = vsub.f32 %v3661, %v3750
  %v3774 = vsub.f32 %v3662, %v3750
  %v3775 = vsub.f32 %v3663, %v3750
  %v3776 = vadd.f32 %v3771, 1e-05
  %v3777 = vrsqrt.pop %v3776
  %v3778 = vmul.f32 %v3772, %v3777
  %v3779 = vmul.f32 %v3773, %v3777
  %v3780 = vmul.f32 %v3774, %v3777
  %v3781 = vmul.f32 %v3775, %v3777
  %v3783 = vlaneseq
  %v3784 = vshrl.u32 %v3783, 7
  %v3785 = vsub.s32 0, %v3784
  %v3786 = vrot.slane %v3734, %v3785
  %v3788 = vmul.f32 %v3778, %v3786
  %v3789 = vmul.f32 %v3779, %v3786
  %v3790 = vmul.f32 %v3780, %v3786
  %v3791 = vmul.f32 %v3781, %v3786
  %v3793 = vlaneseq
  %v3794 = vshrl.u32 %v3793, 7
  %v3795 = vsub.s32 0, %v3794
  %v3796 = vrot.slane %v3736, %v3795
  %v3798 = vadd.f32 %v3788, %v3796
  %v3799 = vadd.f32 %v3789, %v3796
  %v3800 = vadd.f32 %v3790, %v3796
  %v3801 = vadd.f32 %v3791, %v3796
  %s3802 = scalar_lea.vmem %s5, 60
  %v3803 = vld [vmem:[%s3802] sm:$0x1]
  %s3804 = scalar_lea.vmem %s5, 61
  %v3805 = vld [vmem:[%s3804] sm:$0x1]
  %v3806 = vsel %vm400, %v2816, 0.0
  %v3807 = vsel %vm400, %v2817, 0.0
  %v3808 = vadd.f32 %v3806, %v3807
  %v3809 = vsel %vm400, %v2818, 0.0
  %v3810 = vadd.f32 %v3808, %v3809
  %v3811 = vsel %vm400, %v2819, 0.0
  %v3812 = vadd.f32 %v3810, %v3811
  %v3813 = vrot.slane %v3812, 4
  %v3814 = vadd.f32 %v3812, %v3813
  %v3815 = vrot.slane %v3814, 2
  %v3816 = vadd.f32 %v3814, %v3815
  %v3817 = vrot.slane %v3816, 1
  %v3818 = vadd.f32 %v3816, %v3817
  %v3819 = vmul.f32 %v3818, 0.03125
  %v3820 = vmul.f32 %v2816, %v2816
  %v3821 = vmul.f32 %v2817, %v2817
  %v3822 = vmul.f32 %v2818, %v2818
  %v3823 = vmul.f32 %v2819, %v2819
  %v3824 = vsel %vm400, %v3820, 0.0
  %v3825 = vsel %vm400, %v3821, 0.0
  %v3826 = vadd.f32 %v3824, %v3825
  %v3827 = vsel %vm400, %v3822, 0.0
  %v3828 = vadd.f32 %v3826, %v3827
  %v3829 = vsel %vm400, %v3823, 0.0
  %v3830 = vadd.f32 %v3828, %v3829
  %v3831 = vrot.slane %v3830, 4
  %v3832 = vadd.f32 %v3830, %v3831
  %v3833 = vrot.slane %v3832, 2
  %v3834 = vadd.f32 %v3832, %v3833
  %v3835 = vrot.slane %v3834, 1
  %v3836 = vadd.f32 %v3834, %v3835
  %v3837 = vmul.f32 %v3836, 0.03125
  %v3838 = vmul.f32 %v3819, %v3819
  %v3839 = vsub.f32 %v3837, %v3838
  %v3840 = vmax.f32 %v3839, 0.0
  %v3841 = vsub.f32 %v2816, %v3819
  %v3842 = vsub.f32 %v2817, %v3819
  %v3843 = vsub.f32 %v2818, %v3819
  %v3844 = vsub.f32 %v2819, %v3819
  %v3845 = vadd.f32 %v3840, 1e-05
  %v3846 = vrsqrt.pop %v3845
  %v3847 = vmul.f32 %v3841, %v3846
  %v3848 = vmul.f32 %v3842, %v3846
  %v3849 = vmul.f32 %v3843, %v3846
  %v3850 = vmul.f32 %v3844, %v3846
  %v3852 = vlaneseq
  %v3853 = vshrl.u32 %v3852, 7
  %v3854 = vsub.s32 0, %v3853
  %v3855 = vrot.slane %v3803, %v3854
  %v3857 = vmul.f32 %v3847, %v3855
  %v3858 = vmul.f32 %v3848, %v3855
  %v3859 = vmul.f32 %v3849, %v3855
  %v3860 = vmul.f32 %v3850, %v3855
  %v3862 = vlaneseq
  %v3863 = vshrl.u32 %v3862, 7
  %v3864 = vsub.s32 0, %v3863
  %v3865 = vrot.slane %v3805, %v3864
  %v3867 = vadd.f32 %v3857, %v3865
  %v3868 = vadd.f32 %v3858, %v3865
  %v3869 = vadd.f32 %v3859, %v3865
  %v3870 = vadd.f32 %v3860, %v3865
  %s3871 = scalar_lea.vmem %s6, 80
  %v3872 = vld [vmem:[%s3871] sm:$0xff]
  %s3873 = scalar_lea.vmem %s6, 88
  %v3874 = vld [vmem:[%s3873] sm:$0xff]
  %v3876 = vsel %vm400, %v3798, 0
  %v3879 = vsel %vm400, %v3799, 0
  %v3882 = vsel %vm400, %v3800, 0
  %v3885 = vsel %vm400, %v3801, 0
  %3887 = vmatprep.subr.mxu0 0.0
  %3888 = vmatpush1.msra.mxu0 0.0
  %3889 = vmatprep.subr.mxu0 0.0
  %3890 = vmatpush1.msra.mxu0 0.0
  %3891 = vmatprep.subr.mxu0 0.0
  %3892 = vmatpush1.msra.mxu0 0.0
  %3893 = vmatprep.subr.mxu0 0.0
  %3894 = vmatpush1.msra.mxu0 0.0
  %3895 = vmatprep.subr.mxu0 0.0
  %3896 = vmatpush1.msra.mxu0 0.0
  %3897 = vmatprep.subr.mxu0 0.0
  %3898 = vmatpush1.msra.mxu0 0.0
  %3899 = vmatprep.subr.mxu0 0.0
  %3900 = vmatpush1.msra.mxu0 0.0
  %3901 = vmatprep.subr.mxu0 0.0
  %3902 = vmatpush1.msra.mxu0 0.0
  %3903 = vmatprep.subr.mxu0 0.0
  %3904 = vmatpush1.msra.mxu0 0.0
  %3905 = vmatprep.subr.mxu0 0.0
  %3906 = vmatpush1.msra.mxu0 0.0
  %3907 = vmatprep.subr.mxu0 0.0
  %3908 = vmatpush1.msra.mxu0 0.0
  %3909 = vmatprep.subr.mxu0 0.0
  %3910 = vmatpush1.msra.mxu0 0.0
  %3911 = vmatprep.subr.mxu0 0.0
  %3912 = vmatpush1.msra.mxu0 0.0
  %3913 = vmatprep.subr.mxu0 0.0
  %3914 = vmatpush1.msra.mxu0 0.0
  %3915 = vmatprep.subr.mxu0 0.0
  %3916 = vmatpush1.msra.mxu0 0.0
  %3917 = vmatprep.subr.mxu0 0.0
  %3918 = vmatpush1.msra.mxu0 %v3874
  %3919 = vmatprep.subr.mxu0 0.0
  %3920 = vmatpush2.msra.mxu0 0.0
  %3921 = vmatprep.subr.mxu0 0.0
  %3922 = vmatpush2.msra.mxu0 0.0
  %3923 = vmatprep.subr.mxu0 0.0
  %3924 = vmatpush2.msra.mxu0 0.0
  %3925 = vmatprep.subr.mxu0 0.0
  %3926 = vmatpush2.msra.mxu0 0.0
  %3927 = vmatprep.subr.mxu0 0.0
  %3928 = vmatpush2.msra.mxu0 0.0
  %3929 = vmatprep.subr.mxu0 0.0
  %3930 = vmatpush2.msra.mxu0 0.0
  %3931 = vmatprep.subr.mxu0 0.0
  %3932 = vmatpush2.msra.mxu0 0.0
  %3933 = vmatprep.subr.mxu0 0.0
  %3934 = vmatpush2.msra.mxu0 0.0
  %3935 = vmatprep.subr.mxu0 0.0
  %3936 = vmatpush2.msra.mxu0 0.0
  %3937 = vmatprep.subr.mxu0 0.0
  %3938 = vmatpush2.msra.mxu0 0.0
  %3939 = vmatprep.subr.mxu0 0.0
  %3940 = vmatpush2.msra.mxu0 0.0
  %3941 = vmatprep.subr.mxu0 0.0
  %3942 = vmatpush2.msra.mxu0 0.0
  %3943 = vmatprep.subr.mxu0 0.0
  %3944 = vmatpush2.msra.mxu0 0.0
  %3945 = vmatprep.subr.mxu0 0.0
  %3946 = vmatpush2.msra.mxu0 0.0
  %3947 = vmatprep.subr.mxu0 0.0
  %3948 = vmatpush2.msra.mxu0 0.0
  %3949 = vmatprep.subr.mxu0 0.0
  %3950 = vmatpush2.msra.mxu0 0.0
  %3951 = vmatprep.mubr.f32.mxu0 0.0
  %3952 = vmatmul.mubr.f32.gmra.mxu0 %v3876
  %v3953 = vpop.f32.mrf.mxu0
  %v3954 = vadd.f32 0.0, %v3953
  %v3955 = vpop.f32.mrf.mxu0
  %3956 = vmatprep.mubr.f32.mxu0 0.0
  %3957 = vmatmul.mubr.f32.gmra.mxu0 %v3879
  %v3958 = vpop.f32.mrf.mxu0
  %v3959 = vadd.f32 0.0, %v3958
  %v3960 = vpop.f32.mrf.mxu0
  %3961 = vmatprep.mubr.f32.mxu0 0.0
  %3962 = vmatmul.mubr.f32.gmra.mxu0 %v3882
  %v3963 = vpop.f32.mrf.mxu0
  %v3964 = vadd.f32 0.0, %v3963
  %v3965 = vpop.f32.mrf.mxu0
  %3966 = vmatprep.mubr.f32.mxu0 0.0
  %3967 = vmatmul.mubr.f32.gmra.mxu0 %v3885
  %v3968 = vpop.f32.mrf.mxu0
  %v3969 = vadd.f32 0.0, %v3968
  %v3970 = vpop.f32.mrf.mxu0
  %3971 = vdwg.mxu0
  %v3973 = vsel %vm400, %v3729, 0
  %v3976 = vsel %vm400, %v3730, 0
  %v3979 = vsel %vm400, %v3731, 0
  %v3982 = vsel %vm400, %v3732, 0
  %3984 = vmatprep.subr.mxu0 0.0
  %3985 = vmatpush1.msra.mxu0 0.0
  %3986 = vmatprep.subr.mxu0 0.0
  %3987 = vmatpush1.msra.mxu0 0.0
  %3988 = vmatprep.subr.mxu0 0.0
  %3989 = vmatpush1.msra.mxu0 0.0
  %3990 = vmatprep.subr.mxu0 0.0
  %3991 = vmatpush1.msra.mxu0 0.0
  %3992 = vmatprep.subr.mxu0 0.0
  %3993 = vmatpush1.msra.mxu0 0.0
  %3994 = vmatprep.subr.mxu0 0.0
  %3995 = vmatpush1.msra.mxu0 0.0
  %3996 = vmatprep.subr.mxu0 0.0
  %3997 = vmatpush1.msra.mxu0 0.0
  %3998 = vmatprep.subr.mxu0 0.0
  %3999 = vmatpush1.msra.mxu0 0.0
  %4000 = vmatprep.subr.mxu0 0.0
  %4001 = vmatpush1.msra.mxu0 0.0
  %4002 = vmatprep.subr.mxu0 0.0
  %4003 = vmatpush1.msra.mxu0 0.0
  %4004 = vmatprep.subr.mxu0 0.0
  %4005 = vmatpush1.msra.mxu0 0.0
  %4006 = vmatprep.subr.mxu0 0.0
  %4007 = vmatpush1.msra.mxu0 0.0
  %4008 = vmatprep.subr.mxu0 0.0
  %4009 = vmatpush1.msra.mxu0 0.0
  %4010 = vmatprep.subr.mxu0 0.0
  %4011 = vmatpush1.msra.mxu0 0.0
  %4012 = vmatprep.subr.mxu0 0.0
  %4013 = vmatpush1.msra.mxu0 0.0
  %4014 = vmatprep.subr.mxu0 0.0
  %4015 = vmatpush1.msra.mxu0 %v3872
  %4016 = vmatprep.subr.mxu0 0.0
  %4017 = vmatpush2.msra.mxu0 0.0
  %4018 = vmatprep.subr.mxu0 0.0
  %4019 = vmatpush2.msra.mxu0 0.0
  %4020 = vmatprep.subr.mxu0 0.0
  %4021 = vmatpush2.msra.mxu0 0.0
  %4022 = vmatprep.subr.mxu0 0.0
  %4023 = vmatpush2.msra.mxu0 0.0
  %4024 = vmatprep.subr.mxu0 0.0
  %4025 = vmatpush2.msra.mxu0 0.0
  %4026 = vmatprep.subr.mxu0 0.0
  %4027 = vmatpush2.msra.mxu0 0.0
  %4028 = vmatprep.subr.mxu0 0.0
  %4029 = vmatpush2.msra.mxu0 0.0
  %4030 = vmatprep.subr.mxu0 0.0
  %4031 = vmatpush2.msra.mxu0 0.0
  %4032 = vmatprep.subr.mxu0 0.0
  %4033 = vmatpush2.msra.mxu0 0.0
  %4034 = vmatprep.subr.mxu0 0.0
  %4035 = vmatpush2.msra.mxu0 0.0
  %4036 = vmatprep.subr.mxu0 0.0
  %4037 = vmatpush2.msra.mxu0 0.0
  %4038 = vmatprep.subr.mxu0 0.0
  %4039 = vmatpush2.msra.mxu0 0.0
  %4040 = vmatprep.subr.mxu0 0.0
  %4041 = vmatpush2.msra.mxu0 0.0
  %4042 = vmatprep.subr.mxu0 0.0
  %4043 = vmatpush2.msra.mxu0 0.0
  %4044 = vmatprep.subr.mxu0 0.0
  %4045 = vmatpush2.msra.mxu0 0.0
  %4046 = vmatprep.subr.mxu0 0.0
  %4047 = vmatpush2.msra.mxu0 0.0
  %4048 = vmatprep.mubr.f32.mxu0 0.0
  %4049 = vmatmul.mubr.f32.gmra.mxu0 %v3973
  %v4050 = vpop.f32.mrf.mxu0
  %v4051 = vadd.f32 %v3954, %v4050
  %v4052 = vpop.f32.mrf.mxu0
  %4053 = vmatprep.mubr.f32.mxu0 0.0
  %4054 = vmatmul.mubr.f32.gmra.mxu0 %v3976
  %v4055 = vpop.f32.mrf.mxu0
  %v4056 = vadd.f32 %v3959, %v4055
  %v4057 = vpop.f32.mrf.mxu0
  %4058 = vmatprep.mubr.f32.mxu0 0.0
  %4059 = vmatmul.mubr.f32.gmra.mxu0 %v3979
  %v4060 = vpop.f32.mrf.mxu0
  %v4061 = vadd.f32 %v3964, %v4060
  %v4062 = vpop.f32.mrf.mxu0
  %4063 = vmatprep.mubr.f32.mxu0 0.0
  %4064 = vmatmul.mubr.f32.gmra.mxu0 %v3982
  %v4065 = vpop.f32.mrf.mxu0
  %v4066 = vadd.f32 %v3969, %v4065
  %v4067 = vpop.f32.mrf.mxu0
  %4068 = vdwg.mxu0
  %s4069 = scalar_lea.vmem %s6, 96
  %v4070 = vld [vmem:[%s4069] sm:$0xff]
  %v4072 = vsel %vm400, %v3867, 0
  %v4075 = vsel %vm400, %v3868, 0
  %v4078 = vsel %vm400, %v3869, 0
  %v4081 = vsel %vm400, %v3870, 0
  %4083 = vmatprep.subr.mxu0 0.0
  %4084 = vmatpush1.msra.mxu0 0.0
  %4085 = vmatprep.subr.mxu0 0.0
  %4086 = vmatpush1.msra.mxu0 0.0
  %4087 = vmatprep.subr.mxu0 0.0
  %4088 = vmatpush1.msra.mxu0 0.0
  %4089 = vmatprep.subr.mxu0 0.0
  %4090 = vmatpush1.msra.mxu0 0.0
  %4091 = vmatprep.subr.mxu0 0.0
  %4092 = vmatpush1.msra.mxu0 0.0
  %4093 = vmatprep.subr.mxu0 0.0
  %4094 = vmatpush1.msra.mxu0 0.0
  %4095 = vmatprep.subr.mxu0 0.0
  %4096 = vmatpush1.msra.mxu0 0.0
  %4097 = vmatprep.subr.mxu0 0.0
  %4098 = vmatpush1.msra.mxu0 0.0
  %4099 = vmatprep.subr.mxu0 0.0
  %4100 = vmatpush1.msra.mxu0 0.0
  %4101 = vmatprep.subr.mxu0 0.0
  %4102 = vmatpush1.msra.mxu0 0.0
  %4103 = vmatprep.subr.mxu0 0.0
  %4104 = vmatpush1.msra.mxu0 0.0
  %4105 = vmatprep.subr.mxu0 0.0
  %4106 = vmatpush1.msra.mxu0 0.0
  %4107 = vmatprep.subr.mxu0 0.0
  %4108 = vmatpush1.msra.mxu0 0.0
  %4109 = vmatprep.subr.mxu0 0.0
  %4110 = vmatpush1.msra.mxu0 0.0
  %4111 = vmatprep.subr.mxu0 0.0
  %4112 = vmatpush1.msra.mxu0 0.0
  %4113 = vmatprep.subr.mxu0 0.0
  %4114 = vmatpush1.msra.mxu0 %v4070
  %4115 = vmatprep.subr.mxu0 0.0
  %4116 = vmatpush2.msra.mxu0 0.0
  %4117 = vmatprep.subr.mxu0 0.0
  %4118 = vmatpush2.msra.mxu0 0.0
  %4119 = vmatprep.subr.mxu0 0.0
  %4120 = vmatpush2.msra.mxu0 0.0
  %4121 = vmatprep.subr.mxu0 0.0
  %4122 = vmatpush2.msra.mxu0 0.0
  %4123 = vmatprep.subr.mxu0 0.0
  %4124 = vmatpush2.msra.mxu0 0.0
  %4125 = vmatprep.subr.mxu0 0.0
  %4126 = vmatpush2.msra.mxu0 0.0
  %4127 = vmatprep.subr.mxu0 0.0
  %4128 = vmatpush2.msra.mxu0 0.0
  %4129 = vmatprep.subr.mxu0 0.0
  %4130 = vmatpush2.msra.mxu0 0.0
  %4131 = vmatprep.subr.mxu0 0.0
  %4132 = vmatpush2.msra.mxu0 0.0
  %4133 = vmatprep.subr.mxu0 0.0
  %4134 = vmatpush2.msra.mxu0 0.0
  %4135 = vmatprep.subr.mxu0 0.0
  %4136 = vmatpush2.msra.mxu0 0.0
  %4137 = vmatprep.subr.mxu0 0.0
  %4138 = vmatpush2.msra.mxu0 0.0
  %4139 = vmatprep.subr.mxu0 0.0
  %4140 = vmatpush2.msra.mxu0 0.0
  %4141 = vmatprep.subr.mxu0 0.0
  %4142 = vmatpush2.msra.mxu0 0.0
  %4143 = vmatprep.subr.mxu0 0.0
  %4144 = vmatpush2.msra.mxu0 0.0
  %4145 = vmatprep.subr.mxu0 0.0
  %4146 = vmatpush2.msra.mxu0 0.0
  %4147 = vmatprep.mubr.f32.mxu0 0.0
  %4148 = vmatmul.mubr.f32.gmra.mxu0 %v4072
  %v4149 = vpop.f32.mrf.mxu0
  %v4150 = vadd.f32 0.0, %v4149
  %v4151 = vpop.f32.mrf.mxu0
  %4152 = vmatprep.mubr.f32.mxu0 0.0
  %4153 = vmatmul.mubr.f32.gmra.mxu0 %v4075
  %v4154 = vpop.f32.mrf.mxu0
  %v4155 = vadd.f32 0.0, %v4154
  %v4156 = vpop.f32.mrf.mxu0
  %4157 = vmatprep.mubr.f32.mxu0 0.0
  %4158 = vmatmul.mubr.f32.gmra.mxu0 %v4078
  %v4159 = vpop.f32.mrf.mxu0
  %v4160 = vadd.f32 0.0, %v4159
  %v4161 = vpop.f32.mrf.mxu0
  %4162 = vmatprep.mubr.f32.mxu0 0.0
  %4163 = vmatmul.mubr.f32.gmra.mxu0 %v4081
  %v4164 = vpop.f32.mrf.mxu0
  %v4165 = vadd.f32 0.0, %v4164
  %v4166 = vpop.f32.mrf.mxu0
  %4167 = vdwg.mxu0
  %v4168 = vadd.f32 %v4051, %v4150
  %v4169 = vadd.f32 %v4056, %v4155
  %v4170 = vadd.f32 %v4061, %v4160
  %v4171 = vadd.f32 %v4066, %v4165
  %s4172 = scalar_lea.vmem %s5, 62
  %v4173 = vld [vmem:[%s4172] sm:$0x1]
  %v4175 = vlaneseq
  %v4176 = vshrl.u32 %v4175, 7
  %v4177 = vsub.s32 0, %v4176
  %v4178 = vrot.slane %v4173, %v4177
  %v4180 = vadd.f32 %v4168, %v4178
  %v4181 = vadd.f32 %v4169, %v4178
  %v4182 = vadd.f32 %v4170, %v4178
  %v4183 = vadd.f32 %v4171, %v4178
  %s4184 = scalar_lea.vmem %s5, 63
  %v4185 = vld [vmem:[%s4184] sm:$0x1]
  %s4186 = scalar_lea.vmem %s5, 64
  %v4187 = vld [vmem:[%s4186] sm:$0x1]
  %v4188 = vsel %vm400, %v4180, 0.0
  %v4189 = vsel %vm400, %v4181, 0.0
  %v4190 = vadd.f32 %v4188, %v4189
  %v4191 = vsel %vm400, %v4182, 0.0
  %v4192 = vadd.f32 %v4190, %v4191
  %v4193 = vsel %vm400, %v4183, 0.0
  %v4194 = vadd.f32 %v4192, %v4193
  %v4195 = vrot.slane %v4194, 4
  %v4196 = vadd.f32 %v4194, %v4195
  %v4197 = vrot.slane %v4196, 2
  %v4198 = vadd.f32 %v4196, %v4197
  %v4199 = vrot.slane %v4198, 1
  %v4200 = vadd.f32 %v4198, %v4199
  %v4201 = vmul.f32 %v4200, 0.03125
  %v4202 = vmul.f32 %v4180, %v4180
  %v4203 = vmul.f32 %v4181, %v4181
  %v4204 = vmul.f32 %v4182, %v4182
  %v4205 = vmul.f32 %v4183, %v4183
  %v4206 = vsel %vm400, %v4202, 0.0
  %v4207 = vsel %vm400, %v4203, 0.0
  %v4208 = vadd.f32 %v4206, %v4207
  %v4209 = vsel %vm400, %v4204, 0.0
  %v4210 = vadd.f32 %v4208, %v4209
  %v4211 = vsel %vm400, %v4205, 0.0
  %v4212 = vadd.f32 %v4210, %v4211
  %v4213 = vrot.slane %v4212, 4
  %v4214 = vadd.f32 %v4212, %v4213
  %v4215 = vrot.slane %v4214, 2
  %v4216 = vadd.f32 %v4214, %v4215
  %v4217 = vrot.slane %v4216, 1
  %v4218 = vadd.f32 %v4216, %v4217
  %v4219 = vmul.f32 %v4218, 0.03125
  %v4220 = vmul.f32 %v4201, %v4201
  %v4221 = vsub.f32 %v4219, %v4220
  %v4222 = vmax.f32 %v4221, 0.0
  %v4223 = vsub.f32 %v4180, %v4201
  %v4224 = vsub.f32 %v4181, %v4201
  %v4225 = vsub.f32 %v4182, %v4201
  %v4226 = vsub.f32 %v4183, %v4201
  %v4227 = vadd.f32 %v4222, 1e-05
  %v4228 = vrsqrt.pop %v4227
  %v4229 = vmul.f32 %v4223, %v4228
  %v4230 = vmul.f32 %v4224, %v4228
  %v4231 = vmul.f32 %v4225, %v4228
  %v4232 = vmul.f32 %v4226, %v4228
  %v4234 = vlaneseq
  %v4235 = vshrl.u32 %v4234, 7
  %v4236 = vsub.s32 0, %v4235
  %v4237 = vrot.slane %v4185, %v4236
  %v4239 = vmul.f32 %v4229, %v4237
  %v4240 = vmul.f32 %v4230, %v4237
  %v4241 = vmul.f32 %v4231, %v4237
  %v4242 = vmul.f32 %v4232, %v4237
  %v4244 = vlaneseq
  %v4245 = vshrl.u32 %v4244, 7
  %v4246 = vsub.s32 0, %v4245
  %v4247 = vrot.slane %v4187, %v4246
  %v4249 = vadd.f32 %v4239, %v4247
  %v4250 = vadd.f32 %v4240, %v4247
  %v4251 = vadd.f32 %v4241, %v4247
  %v4252 = vadd.f32 %v4242, %v4247
  %vm4253 = vcmp.gt.f32.partialorder %v4249, 20.0
  %vm4254 = vcmp.gt.f32.partialorder %v4250, 20.0
  %vm4255 = vcmp.gt.f32.partialorder %v4251, 20.0
  %vm4256 = vcmp.gt.f32.partialorder %v4252, 20.0
  %v4257 = vmin.f32 %v4249, 20.0
  %v4258 = vmin.f32 %v4250, 20.0
  %v4259 = vmin.f32 %v4251, 20.0
  %v4260 = vmin.f32 %v4252, 20.0
  %v4261 = vmul.f32 %v4257, 1.442695
  %v4262 = vpow.pop %v4261
  %v4263 = vmul.f32 %v4258, 1.442695
  %v4264 = vpow.pop %v4263
  %v4265 = vmul.f32 %v4259, 1.442695
  %v4266 = vpow.pop %v4265
  %v4267 = vmul.f32 %v4260, 1.442695
  %v4268 = vpow.pop %v4267
  %v4269 = vadd.f32 %v4262, 1.0
  %v4270 = vlog2.pop %v4269
  %v4271 = vmul.f32 %v4270, 0.6931472
  %v4272 = vmul.f32 -0.5, %v4262
  %v4273 = vadd.f32 %v4272, 1.0
  %v4274 = vmul.f32 %v4273, %v4262
  %v4275 = vand.u32 2147483647, %v4262
  %vm4276 = vcmp.lt.f32.partialorder %v4275, 0.0004427343
  %v4277 = vsel %vm4276, %v4274, %v4271
  %v4278 = vadd.f32 %v4264, 1.0
  %v4279 = vlog2.pop %v4278
  %v4280 = vmul.f32 %v4279, 0.6931472
  %v4281 = vmul.f32 -0.5, %v4264
  %v4282 = vadd.f32 %v4281, 1.0
  %v4283 = vmul.f32 %v4282, %v4264
  %v4284 = vand.u32 2147483647, %v4264
  %vm4285 = vcmp.lt.f32.partialorder %v4284, 0.0004427343
  %v4286 = vsel %vm4285, %v4283, %v4280
  %v4287 = vadd.f32 %v4266, 1.0
  %v4288 = vlog2.pop %v4287
  %v4289 = vmul.f32 %v4288, 0.6931472
  %v4290 = vmul.f32 -0.5, %v4266
  %v4291 = vadd.f32 %v4290, 1.0
  %v4292 = vmul.f32 %v4291, %v4266
  %v4293 = vand.u32 2147483647, %v4266
  %vm4294 = vcmp.lt.f32.partialorder %v4293, 0.0004427343
  %v4295 = vsel %vm4294, %v4292, %v4289
  %v4296 = vadd.f32 %v4268, 1.0
  %v4297 = vlog2.pop %v4296
  %v4298 = vmul.f32 %v4297, 0.6931472
  %v4299 = vmul.f32 -0.5, %v4268
  %v4300 = vadd.f32 %v4299, 1.0
  %v4301 = vmul.f32 %v4300, %v4268
  %v4302 = vand.u32 2147483647, %v4268
  %vm4303 = vcmp.lt.f32.partialorder %v4302, 0.0004427343
  %v4304 = vsel %vm4303, %v4301, %v4298
  %v4305 = vsel %vm4253, %v4249, %v4277
  %v4306 = vsel %vm4254, %v4250, %v4286
  %v4307 = vsel %vm4255, %v4251, %v4295
  %v4308 = vsel %vm4256, %v4252, %v4304
  %v4309 = vadd.f32 %v2816, %v4305
  %v4310 = vadd.f32 %v2817, %v4306
  %v4311 = vadd.f32 %v2818, %v4307
  %v4312 = vadd.f32 %v2819, %v4308
  %s4313 = scalar_lea.vmem %s5, 65
  %v4314 = vld [vmem:[%s4313] sm:$0x1]
  %s4315 = scalar_lea.vmem %s5, 66
  %v4316 = vld [vmem:[%s4315] sm:$0x1]
  %v4317 = vsel %vm400, %v4309, 0.0
  %v4318 = vsel %vm400, %v4310, 0.0
  %v4319 = vadd.f32 %v4317, %v4318
  %v4320 = vsel %vm400, %v4311, 0.0
  %v4321 = vadd.f32 %v4319, %v4320
  %v4322 = vsel %vm400, %v4312, 0.0
  %v4323 = vadd.f32 %v4321, %v4322
  %v4324 = vrot.slane %v4323, 4
  %v4325 = vadd.f32 %v4323, %v4324
  %v4326 = vrot.slane %v4325, 2
  %v4327 = vadd.f32 %v4325, %v4326
  %v4328 = vrot.slane %v4327, 1
  %v4329 = vadd.f32 %v4327, %v4328
  %v4330 = vmul.f32 %v4329, 0.03125
  %v4331 = vmul.f32 %v4309, %v4309
  %v4332 = vmul.f32 %v4310, %v4310
  %v4333 = vmul.f32 %v4311, %v4311
  %v4334 = vmul.f32 %v4312, %v4312
  %v4335 = vsel %vm400, %v4331, 0.0
  %v4336 = vsel %vm400, %v4332, 0.0
  %v4337 = vadd.f32 %v4335, %v4336
  %v4338 = vsel %vm400, %v4333, 0.0
  %v4339 = vadd.f32 %v4337, %v4338
  %v4340 = vsel %vm400, %v4334, 0.0
  %v4341 = vadd.f32 %v4339, %v4340
  %v4342 = vrot.slane %v4341, 4
  %v4343 = vadd.f32 %v4341, %v4342
  %v4344 = vrot.slane %v4343, 2
  %v4345 = vadd.f32 %v4343, %v4344
  %v4346 = vrot.slane %v4345, 1
  %v4347 = vadd.f32 %v4345, %v4346
  %v4348 = vmul.f32 %v4347, 0.03125
  %v4349 = vmul.f32 %v4330, %v4330
  %v4350 = vsub.f32 %v4348, %v4349
  %v4351 = vmax.f32 %v4350, 0.0
  %v4352 = vsub.f32 %v4309, %v4330
  %v4353 = vsub.f32 %v4310, %v4330
  %v4354 = vsub.f32 %v4311, %v4330
  %v4355 = vsub.f32 %v4312, %v4330
  %v4356 = vadd.f32 %v4351, 1e-05
  %v4357 = vrsqrt.pop %v4356
  %v4358 = vmul.f32 %v4352, %v4357
  %v4359 = vmul.f32 %v4353, %v4357
  %v4360 = vmul.f32 %v4354, %v4357
  %v4361 = vmul.f32 %v4355, %v4357
  %v4363 = vlaneseq
  %v4364 = vshrl.u32 %v4363, 7
  %v4365 = vsub.s32 0, %v4364
  %v4366 = vrot.slane %v4314, %v4365
  %v4368 = vmul.f32 %v4358, %v4366
  %v4369 = vmul.f32 %v4359, %v4366
  %v4370 = vmul.f32 %v4360, %v4366
  %v4371 = vmul.f32 %v4361, %v4366
  %v4373 = vlaneseq
  %v4374 = vshrl.u32 %v4373, 7
  %v4375 = vsub.s32 0, %v4374
  %v4376 = vrot.slane %v4316, %v4375
  %v4378 = vadd.f32 %v4368, %v4376
  %v4379 = vadd.f32 %v4369, %v4376
  %v4380 = vadd.f32 %v4370, %v4376
  %v4381 = vadd.f32 %v4371, %v4376
  %4382 = vst.msk [vmem:[%s7] sm:$0xff] %vm400, %v4378
  %4383 = vst.msk [vmem:[%s7 + $0x8] sm:$0xff] %vm400, %v4379
  %4384 = vst.msk [vmem:[%s7 + $0x10] sm:$0xff] %vm400, %v4380
  %4385 = vst.msk [vmem:[%s7 + $0x18] sm:$0xff] %vm400, %v4381
  // Predicated region
  $region30: #{conv_layer_pallas.1} parent=0 // pred_check
    _
  $region31: #{conv_layer_pallas.1} parent=0 // pred_check_branch
    %4387 = sbr.rel (0) target = $region33
  $region32: #{conv_layer_pallas.1} parent=0 // pred_region
    _
  $region33: #{conv_layer_pallas.1} parent=0 // pred_fallthru
    _
  // Predicated region
  $region34: #{conv_layer_pallas.1} parent=0 // pred_check
    _
  $region35: #{conv_layer_pallas.1} parent=0 // pred_check_branch
    %4389 = sbr.rel (0) target = $region37
  $region36: #{conv_layer_pallas.1} parent=0 // pred_region
    _
  $region37: #{conv_layer_pallas.1} parent=0 // pred_fallthru
    _

</llo_original>
